<compile_context>
chip_gen: v7x
topology: tpu7x:2x2x1
jax: 0.10.0
libtpu: 0.0.40
codegen_flags: <defaults>
</compile_context>

<pallas_src>
import numpy as np
import jax
import jax.numpy as jnp
from jax import lax
from jax.experimental import pallas as pl
from jax.experimental.pallas import tpu as pltpu


# ----------------------------------------------------------------------------
# Static tap schedule for the phase (sub-pixel) decomposition of ConvTranspose2d
#   out[q*stride + phase] += x[q + d] @ W[k]      with d = (phase + pad - k)/stride
# (out-of-range x indices contribute zero -> handled by zero padding x).
# ----------------------------------------------------------------------------
def _taps_1d(k_size, stride, pad, phase):
    taps = []
    for k in range(k_size):
        if (phase + pad - k) % stride == 0:
            taps.append((k, (phase + pad - k) // stride))
    return taps


# ----------------------------------------------------------------------------
# Fused kernel: conv1(1x1)+BN+ReLU  ->  tconv(phase decomp)+BN+ReLU
#               ->  conv2(1x1)+BN+ReLU.   One grid step = one image.
# ----------------------------------------------------------------------------
def _make_decoder_kernel(H, W, Cmid, stride, pad_top, pad_left,
                         Hq, Wq, taps_y, taps_x):
    HWq = Hq * Wq

    def kernel(x_ref, w1_ref, b1_ref, wt_ref, b2_ref, w2_ref, b3_ref,
               o_ref, a_ref, acc_ref):
        # ---- conv1: 1x1 conv (BN scale folded into w1) + bias + ReLU  (MXU) ----
        a = jnp.dot(x_ref[0], w1_ref[...], preferred_element_type=jnp.float32)
        a = jnp.maximum(a + b1_ref[...], 0.0)

        # Stage the (zero-padded) mid activation in a VMEM scratch ref.
        a_ref[...] = jnp.zeros_like(a_ref)
        a_ref[pl.ds(pad_top, H), pl.ds(pad_left, W), :] = (
            a.reshape(H, W, Cmid).astype(a_ref.dtype))

        # ---- tp_conv via phase decomposition (one MXU matmul per tap) --------
        for ph in range(stride):
            for pw in range(stride):
                taps = [(ky, kx, dy, dx)
                        for (ky, dy) in taps_y[ph]
                        for (kx, dx) in taps_x[pw]]
                if not taps:
                    acc_ref[...] = jnp.zeros_like(acc_ref)
                for t, (ky, kx, dy, dx) in enumerate(taps):
                    patch = a_ref[pl.ds(dy + pad_top, Hq),
                                  pl.ds(dx + pad_left, Wq), :]
                    contrib = jnp.dot(patch.reshape(HWq, Cmid), wt_ref[ky, kx],
                                      preferred_element_type=jnp.float32)
                    if t == 0:
                        acc_ref[...] = contrib
                    else:
                        acc_ref[...] += contrib

                # BN bias + ReLU of tp_conv, then conv2 (1x1) + bias + ReLU.
                h = jnp.maximum(acc_ref[...] + b2_ref[...], 0.0)
                y = jnp.dot(h.astype(w2_ref.dtype), w2_ref[...],
                            preferred_element_type=jnp.float32)
                y = jnp.maximum(y + b3_ref[...], 0.0)
                o_ref[ph * stride + pw] = y.reshape(Hq, Wq, -1).astype(o_ref.dtype)

    return kernel


# ----------------------------------------------------------------------------
# Wrapper: weight folding, phase bookkeeping, pallas_call, phase re-interleave.
# ----------------------------------------------------------------------------
def decoder_forward(x_nchw, p, stride, pad, opad, compute_dtype=jnp.float32):
    N, Cin, H, W = x_nchw.shape
    w1, s1, b1 = p["w1"], p["s1"], p["b1"]
    wt, s2, b2 = p["wt"], p["s2"], p["b2"]
    w2, s3, b3 = p["w2"], p["s3"], p["b3"]
    Cmid, Cout = w1.shape[1], w2.shape[1]
    kH, kW = wt.shape[2], wt.shape[3]

    Hout = (H - 1) * stride - 2 * pad + kH + opad
    Wout = (W - 1) * stride - 2 * pad + kW + opad
    Hq = -(-Hout // stride)       # rows per output phase (max over phases)
    Wq = -(-Wout // stride)

    taps_y = [_taps_1d(kH, stride, pad, ph) for ph in range(stride)]
    taps_x = [_taps_1d(kW, stride, pad, pw) for pw in range(stride)]
    dys = [d for tp in taps_y for (_, d) in tp]
    dxs = [d for tp in taps_x for (_, d) in tp]
    pad_top = max(0, -min(dys)) if dys else 0
    pad_bot = max(0, (Hq - 1) + (max(dys) if dys else 0) - (H - 1))
    pad_left = max(0, -min(dxs)) if dxs else 0
    pad_right = max(0, (Wq - 1) + (max(dxs) if dxs else 0) - (W - 1))
    Hp, Wp = H + pad_top + pad_bot, W + pad_left + pad_right

    # Fold the eval-mode BN scales into the conv weights (per output channel);
    # kernels then only do `dot + bias` before the ReLU.
    w1f = (w1 * s1[None, :]).astype(compute_dtype)
    wtf = (jnp.transpose(wt, (2, 3, 0, 1)) * s2[None, None, None, :]).astype(compute_dtype)
    w2f = (w2 * s3[None, :]).astype(compute_dtype)

    x_nhwc = jnp.transpose(x_nchw, (0, 2, 3, 1))                 # NCHW -> NHWC
    xm = x_nhwc.reshape(N, H * W, Cin).astype(compute_dtype)

    ssq = stride * stride
    kernel = _make_decoder_kernel(H, W, Cmid, stride, pad_top, pad_left,
                                  Hq, Wq, taps_y, taps_x)

    out = pl.pallas_call(
        kernel,
        out_shape=jax.ShapeDtypeStruct((N * ssq, Hq, Wq, Cout), jnp.float32),
        grid_spec=pltpu.PrefetchScalarGridSpec(
            num_scalar_prefetch=0,
            grid=(N,),
            in_specs=[
                pl.BlockSpec((1, H * W, Cin), lambda n: (n, 0, 0)),
                pl.BlockSpec((Cin, Cmid), lambda n: (0, 0)),
                pl.BlockSpec((1, Cmid), lambda n: (0, 0)),
                pl.BlockSpec((kH, kW, Cmid, Cmid), lambda n: (0, 0, 0, 0)),
                pl.BlockSpec((1, Cmid), lambda n: (0, 0)),
                pl.BlockSpec((Cmid, Cout), lambda n: (0, 0)),
                pl.BlockSpec((1, Cout), lambda n: (0, 0)),
            ],
            out_specs=pl.BlockSpec((ssq, Hq, Wq, Cout), lambda n: (n, 0, 0, 0)),
            scratch_shapes=[
                pltpu.VMEM((Hp, Wp, Cmid), compute_dtype),    # padded conv1 act
                pltpu.VMEM((Hq * Wq, Cmid), jnp.float32),     # per-phase accumulator
            ],
        ),
        compiler_params=pltpu.CompilerParams(dimension_semantics=("parallel",)),
    )(xm, w1f, b1.reshape(1, Cmid).astype(jnp.float32),
      wtf, b2.reshape(1, Cmid).astype(jnp.float32),
      w2f, b3.reshape(1, Cout).astype(jnp.float32))

    # Re-interleave the stride^2 output phases (layout plumbing, done in XLA).
    out = out.reshape(N, stride, stride, Hq, Wq, Cout)
    out = jnp.transpose(out, (0, 3, 1, 4, 2, 5)).reshape(
        N, Hq * stride, Wq * stride, Cout)[:, :Hout, :Wout, :]
    return jnp.transpose(out, (0, 3, 1, 2))                      # NHWC -> NCHW


# ----------------------------------------------------------------------------
# Parameter init (deterministic, synthetic) and pure-JAX reference
# ----------------------------------------------------------------------------
def _bn_scale_bias(c, seed, eps=1e-5):
    idx = jnp.arange(c, dtype=jnp.float32)
    gamma = 1.0 + 0.1 * jnp.cos(idx + seed)
    beta = 0.05 * jnp.sin(idx + seed)
    mean = 0.01 * idx
    var = 1.0 + 0.02 * idx
    scale = gamma / jnp.sqrt(var + eps)
    bias = beta - mean * scale
    return scale.astype(jnp.float32), bias.astype(jnp.float32)


def init_params(key, in_planes, out_planes, kH, kW):
    mid = in_planes // 4
    k1, k2, k3 = jax.random.split(key, 3)
    w1 = 0.1 * jax.random.normal(k1, (in_planes, mid), jnp.float32)     # 1x1 conv1
    wt = 0.1 * jax.random.normal(k2, (mid, mid, kH, kW), jnp.float32)   # ConvTranspose2d (Cin,Cout,kH,kW)
    w2 = 0.1 * jax.random.normal(k3, (mid, out_planes), jnp.float32)    # 1x1 conv2
    s1, b1 = _bn_scale_bias(mid, 0.0)
    s2, b2 = _bn_scale_bias(mid, 1.0)
    s3, b3 = _bn_scale_bias(out_planes, 2.0)
    return dict(w1=w1, s1=s1, b1=b1, wt=wt, s2=s2, b2=b2, w2=w2, s3=s3, b3=b3)


def decoder_reference(x_nchw, p, stride, pad, opad):
    """Pure-JAX (XLA) reference for correctness checking."""
    x = jnp.transpose(x_nchw, (0, 2, 3, 1))
    y = jnp.einsum('nhwc,cd->nhwd', x, p["w1"])
    y = jnp.maximum(y * p["s1"] + p["b1"], 0.0)
    wt = p["wt"]
    kH, kW = wt.shape[2], wt.shape[3]
    wf = jnp.transpose(wt[:, :, ::-1, ::-1], (2, 3, 0, 1))
    y = lax.conv_general_dilated(
        y, wf, window_strides=(1, 1),
        padding=((kH - 1 - pad, kH - 1 - pad + opad),
                 (kW - 1 - pad, kW - 1 - pad + opad)),
        lhs_dilation=(stride, stride),
        dimension_numbers=('NHWC', 'HWIO', 'NHWC'))
    y = jnp.maximum(y * p["s2"] + p["b2"], 0.0)
    y = jnp.einsum('nhwc,cd->nhwd', y, p["w2"])
    y = jnp.maximum(y * p["s3"] + p["b3"], 0.0)
    return jnp.transpose(y, (0, 3, 1, 2))


if __name__ == "__main__":
    # Small LinkNet-decoder-like config.
    N, in_planes, H, W = 2, 16, 8, 8
    out_planes = 8
    kernel_size, stride, padding, output_padding = 3, 2, 1, 1

    key = jax.random.PRNGKey(0)
    kx, kp = jax.random.split(key)
    x = jax.random.normal(kx, (N, in_planes, H, W), jnp.float32)  # NCHW (PyTorch layout)
    params = init_params(kp, in_planes, out_planes, kernel_size, kernel_size)

    y = decoder_forward(x, params, stride, padding, output_padding)
    y = jax.block_until_ready(y)

    y_ref = decoder_reference(x, params, stride, padding, output_padding)
    np.testing.assert_allclose(np.asarray(y), np.asarray(y_ref), rtol=2e-3, atol=2e-3)
    assert y.shape == (N, out_planes, 2 * H, 2 * W)

    print("KERNEL_OK")
</pallas_src>

<mosaic_0001>
module attributes {stable_mosaic.version = 11 : i64} {
  func.func @kernel(%arg0: i32, %arg1: memref<1x64x16xf32, #tpu.memory_space<vmem>>, %arg2: memref<16x4xf32, #tpu.memory_space<vmem>>, %arg3: memref<1x4xf32, #tpu.memory_space<vmem>>, %arg4: memref<3x3x4x4xf32, #tpu.memory_space<vmem>>, %arg5: memref<1x4xf32, #tpu.memory_space<vmem>>, %arg6: memref<4x8xf32, #tpu.memory_space<vmem>>, %arg7: memref<1x8xf32, #tpu.memory_space<vmem>>, %arg8: memref<4x8x8x8xf32, #tpu.memory_space<vmem>>, %arg9: memref<9x9x4xf32, #tpu.memory_space<vmem>>, %arg10: memref<64x4xf32, #tpu.memory_space<vmem>>) attributes {dimension_semantics = [#tpu.dimension_semantics<parallel>], iteration_bounds = array<i64: 2>, scalar_prefetch = 0 : i64, scratch_operands = 2 : i64, tpu.core_type = #tpu.core_type<tc>, window_params = [{transform_indices = @transform_0, window_bounds = array<i64: 1, 64, 16>}, {pipeline_mode = #tpu.pipeline_mode<synchronous>, transform_indices = @transform_1, window_bounds = array<i64: 16, 4>}, {pipeline_mode = #tpu.pipeline_mode<synchronous>, transform_indices = @transform_2, window_bounds = array<i64: 1, 4>}, {pipeline_mode = #tpu.pipeline_mode<synchronous>, transform_indices = @transform_3, window_bounds = array<i64: 3, 3, 4, 4>}, {pipeline_mode = #tpu.pipeline_mode<synchronous>, transform_indices = @transform_4, window_bounds = array<i64: 1, 4>}, {pipeline_mode = #tpu.pipeline_mode<synchronous>, transform_indices = @transform_5, window_bounds = array<i64: 4, 8>}, {pipeline_mode = #tpu.pipeline_mode<synchronous>, transform_indices = @transform_6, window_bounds = array<i64: 1, 8>}, {transform_indices = @transform_7, window_bounds = array<i64: 4, 8, 8, 8>}]} {
    %c0 = arith.constant 0 : index
    %c0_0 = arith.constant 0 : index
    %c0_1 = arith.constant 0 : index
    %0 = vector.load %arg1[%c0, %c0_0, %c0_1] : memref<1x64x16xf32, #tpu.memory_space<vmem>>, vector<1x64x16xf32>
    %1 = vector.shape_cast %0 : vector<1x64x16xf32> to vector<64x16xf32>
    %c0_2 = arith.constant 0 : index
    %c0_3 = arith.constant 0 : index
    %2 = vector.load %arg2[%c0_2, %c0_3] : memref<16x4xf32, #tpu.memory_space<vmem>>, vector<16x4xf32>
    %cst = arith.constant dense<0.000000e+00> : vector<64x4xf32>
    %3 = tpu.matmul %1, %2, %cst {dimension_numbers = #tpu.dot_dimension_numbers<[1], [0], [0], [1], [0, 0, 1, 1], [], []>} : vector<64x16xf32>, vector<16x4xf32>, vector<64x4xf32> -> vector<64x4xf32>
    %c0_4 = arith.constant 0 : index
    %c0_5 = arith.constant 0 : index
    %4 = vector.load %arg3[%c0_4, %c0_5] : memref<1x4xf32, #tpu.memory_space<vmem>>, vector<1x4xf32>
    %5 = vector.broadcast %4 : vector<1x4xf32> to vector<64x4xf32>
    %6 = arith.addf %3, %5 : vector<64x4xf32>
    %cst_6 = arith.constant 0.000000e+00 : f32
    %7 = vector.broadcast %cst_6 : f32 to vector<64x4xf32>
    %8 = arith.maximumf %6, %7 : vector<64x4xf32>
    %cst_7 = arith.constant 0.000000e+00 : f32
    %9 = vector.broadcast %cst_7 : f32 to vector<9x9x4xf32>
    %c0_8 = arith.constant 0 : index
    %c0_9 = arith.constant 0 : index
    %c0_10 = arith.constant 0 : index
    %10 = vector.load %arg9[%c0_8, %c0_9, %c0_10] : memref<9x9x4xf32, #tpu.memory_space<vmem>>, vector<9x9x4xf32>
    tpu.vector_store %arg9[%c0_8, %c0_9, %c0_10], %9 {strides = array<i32>} : memref<9x9x4xf32, #tpu.memory_space<vmem>>, vector<9x9x4xf32>,
    %11 = vector.shape_cast %8 : vector<64x4xf32> to vector<8x8x4xf32>
    %c0_11 = arith.constant 0 : index
    %c0_12 = arith.constant 0 : index
    %c0_13 = arith.constant 0 : index
    %12 = vector.load %arg9[%c0_11, %c0_12, %c0_13] : memref<9x9x4xf32, #tpu.memory_space<vmem>>, vector<8x8x4xf32>
    tpu.vector_store %arg9[%c0_11, %c0_12, %c0_13], %11 {strides = array<i32>} : memref<9x9x4xf32, #tpu.memory_space<vmem>>, vector<8x8x4xf32>,
    %c0_14 = arith.constant 0 : index
    %c0_15 = arith.constant 0 : index
    %c0_16 = arith.constant 0 : index
    %13 = vector.load %arg9[%c0_14, %c0_15, %c0_16] : memref<9x9x4xf32, #tpu.memory_space<vmem>>, vector<8x8x4xf32>
    %14 = vector.shape_cast %13 : vector<8x8x4xf32> to vector<64x4xf32>
    %c1 = arith.constant 1 : index
    %c1_17 = arith.constant 1 : index
    %c0_18 = arith.constant 0 : index
    %c0_19 = arith.constant 0 : index
    %15 = vector.load %arg4[%c1, %c1_17, %c0_18, %c0_19] : memref<3x3x4x4xf32, #tpu.memory_space<vmem>>, vector<1x1x4x4xf32>
    %16 = vector.shape_cast %15 : vector<1x1x4x4xf32> to vector<4x4xf32>
    %cst_20 = arith.constant dense<0.000000e+00> : vector<64x4xf32>
    %17 = tpu.matmul %14, %16, %cst_20 {dimension_numbers = #tpu.dot_dimension_numbers<[1], [0], [0], [1], [0, 0, 1, 1], [], []>} : vector<64x4xf32>, vector<4x4xf32>, vector<64x4xf32> -> vector<64x4xf32>
    %c0_21 = arith.constant 0 : index
    %c0_22 = arith.constant 0 : index
    %18 = vector.load %arg10[%c0_21, %c0_22] : memref<64x4xf32, #tpu.memory_space<vmem>>, vector<64x4xf32>
    tpu.vector_store %arg10[%c0_21, %c0_22], %17 {strides = array<i32>} : memref<64x4xf32, #tpu.memory_space<vmem>>, vector<64x4xf32>,
    %c0_23 = arith.constant 0 : index
    %c0_24 = arith.constant 0 : index
    %19 = vector.load %arg10[%c0_23, %c0_24] : memref<64x4xf32, #tpu.memory_space<vmem>>, vector<64x4xf32>
    %c0_25 = arith.constant 0 : index
    %c0_26 = arith.constant 0 : index
    %20 = vector.load %arg5[%c0_25, %c0_26] : memref<1x4xf32, #tpu.memory_space<vmem>>, vector<1x4xf32>
    %21 = vector.broadcast %20 : vector<1x4xf32> to vector<64x4xf32>
    %22 = arith.addf %19, %21 : vector<64x4xf32>
    %cst_27 = arith.constant 0.000000e+00 : f32
    %23 = vector.broadcast %cst_27 : f32 to vector<64x4xf32>
    %24 = arith.maximumf %22, %23 : vector<64x4xf32>
    %c0_28 = arith.constant 0 : index
    %c0_29 = arith.constant 0 : index
    %25 = vector.load %arg6[%c0_28, %c0_29] : memref<4x8xf32, #tpu.memory_space<vmem>>, vector<4x8xf32>
    %cst_30 = arith.constant dense<0.000000e+00> : vector<64x8xf32>
    %26 = tpu.matmul %24, %25, %cst_30 {dimension_numbers = #tpu.dot_dimension_numbers<[1], [0], [0], [1], [0, 0, 1, 1], [], []>} : vector<64x4xf32>, vector<4x8xf32>, vector<64x8xf32> -> vector<64x8xf32>
    %c0_31 = arith.constant 0 : index
    %c0_32 = arith.constant 0 : index
    %27 = vector.load %arg7[%c0_31, %c0_32] : memref<1x8xf32, #tpu.memory_space<vmem>>, vector<1x8xf32>
    %28 = vector.broadcast %27 : vector<1x8xf32> to vector<64x8xf32>
    %29 = arith.addf %26, %28 : vector<64x8xf32>
    %cst_33 = arith.constant 0.000000e+00 : f32
    %30 = vector.broadcast %cst_33 : f32 to vector<64x8xf32>
    %31 = arith.maximumf %29, %30 : vector<64x8xf32>
    %32 = vector.shape_cast %31 : vector<64x8xf32> to vector<8x8x8xf32>
    %c0_34 = arith.constant 0 : index
    %c0_35 = arith.constant 0 : index
    %c0_36 = arith.constant 0 : index
    %c0_37 = arith.constant 0 : index
    %33 = vector.load %arg8[%c0_34, %c0_35, %c0_36, %c0_37] : memref<4x8x8x8xf32, #tpu.memory_space<vmem>>, vector<1x8x8x8xf32>
    %34 = vector.shape_cast %33 : vector<1x8x8x8xf32> to vector<8x8x8xf32>
    %35 = vector.shape_cast %32 : vector<8x8x8xf32> to vector<1x8x8x8xf32>
    tpu.vector_store %arg8[%c0_34, %c0_35, %c0_36, %c0_37], %35 {strides = array<i32>} : memref<4x8x8x8xf32, #tpu.memory_space<vmem>>, vector<1x8x8x8xf32>,
    %c0_38 = arith.constant 0 : index
    %c1_39 = arith.constant 1 : index
    %c0_40 = arith.constant 0 : index
    %36 = vector.load %arg9[%c0_38, %c1_39, %c0_40] : memref<9x9x4xf32, #tpu.memory_space<vmem>>, vector<8x8x4xf32>
    %37 = vector.shape_cast %36 : vector<8x8x4xf32> to vector<64x4xf32>
    %c1_41 = arith.constant 1 : index
    %c0_42 = arith.constant 0 : index
    %c0_43 = arith.constant 0 : index
    %c0_44 = arith.constant 0 : index
    %38 = vector.load %arg4[%c1_41, %c0_42, %c0_43, %c0_44] : memref<3x3x4x4xf32, #tpu.memory_space<vmem>>, vector<1x1x4x4xf32>
    %39 = vector.shape_cast %38 : vector<1x1x4x4xf32> to vector<4x4xf32>
    %cst_45 = arith.constant dense<0.000000e+00> : vector<64x4xf32>
    %40 = tpu.matmul %37, %39, %cst_45 {dimension_numbers = #tpu.dot_dimension_numbers<[1], [0], [0], [1], [0, 0, 1, 1], [], []>} : vector<64x4xf32>, vector<4x4xf32>, vector<64x4xf32> -> vector<64x4xf32>
    %c0_46 = arith.constant 0 : index
    %c0_47 = arith.constant 0 : index
    %41 = vector.load %arg10[%c0_46, %c0_47] : memref<64x4xf32, #tpu.memory_space<vmem>>, vector<64x4xf32>
    tpu.vector_store %arg10[%c0_46, %c0_47], %40 {strides = array<i32>} : memref<64x4xf32, #tpu.memory_space<vmem>>, vector<64x4xf32>,
    %c0_48 = arith.constant 0 : index
    %c0_49 = arith.constant 0 : index
    %c0_50 = arith.constant 0 : index
    %42 = vector.load %arg9[%c0_48, %c0_49, %c0_50] : memref<9x9x4xf32, #tpu.memory_space<vmem>>, vector<8x8x4xf32>
    %43 = vector.shape_cast %42 : vector<8x8x4xf32> to vector<64x4xf32>
    %c1_51 = arith.constant 1 : index
    %c2 = arith.constant 2 : index
    %c0_52 = arith.constant 0 : index
    %c0_53 = arith.constant 0 : index
    %44 = vector.load %arg4[%c1_51, %c2, %c0_52, %c0_53] : memref<3x3x4x4xf32, #tpu.memory_space<vmem>>, vector<1x1x4x4xf32>
    %45 = vector.shape_cast %44 : vector<1x1x4x4xf32> to vector<4x4xf32>
    %cst_54 = arith.constant dense<0.000000e+00> : vector<64x4xf32>
    %46 = tpu.matmul %43, %45, %cst_54 {dimension_numbers = #tpu.dot_dimension_numbers<[1], [0], [0], [1], [0, 0, 1, 1], [], []>} : vector<64x4xf32>, vector<4x4xf32>, vector<64x4xf32> -> vector<64x4xf32>
    %c0_55 = arith.constant 0 : index
    %c0_56 = arith.constant 0 : index
    %47 = vector.load %arg10[%c0_55, %c0_56] : memref<64x4xf32, #tpu.memory_space<vmem>>, vector<64x4xf32>
    %48 = arith.addf %47, %46 : vector<64x4xf32>
    %c0_57 = arith.constant 0 : index
    %c0_58 = arith.constant 0 : index
    %49 = vector.load %arg10[%c0_57, %c0_58] : memref<64x4xf32, #tpu.memory_space<vmem>>, vector<64x4xf32>
    tpu.vector_store %arg10[%c0_57, %c0_58], %48 {strides = array<i32>} : memref<64x4xf32, #tpu.memory_space<vmem>>, vector<64x4xf32>,
    %c0_59 = arith.constant 0 : index
    %c0_60 = arith.constant 0 : index
    %50 = vector.load %arg10[%c0_59, %c0_60] : memref<64x4xf32, #tpu.memory_space<vmem>>, vector<64x4xf32>
    %c0_61 = arith.constant 0 : index
    %c0_62 = arith.constant 0 : index
    %51 = vector.load %arg5[%c0_61, %c0_62] : memref<1x4xf32, #tpu.memory_space<vmem>>, vector<1x4xf32>
    %52 = vector.broadcast %51 : vector<1x4xf32> to vector<64x4xf32>
    %53 = arith.addf %50, %52 : vector<64x4xf32>
    %cst_63 = arith.constant 0.000000e+00 : f32
    %54 = vector.broadcast %cst_63 : f32 to vector<64x4xf32>
    %55 = arith.maximumf %53, %54 : vector<64x4xf32>
    %c0_64 = arith.constant 0 : index
    %c0_65 = arith.constant 0 : index
    %56 = vector.load %arg6[%c0_64, %c0_65] : memref<4x8xf32, #tpu.memory_space<vmem>>, vector<4x8xf32>
    %cst_66 = arith.constant dense<0.000000e+00> : vector<64x8xf32>
    %57 = tpu.matmul %55, %56, %cst_66 {dimension_numbers = #tpu.dot_dimension_numbers<[1], [0], [0], [1], [0, 0, 1, 1], [], []>} : vector<64x4xf32>, vector<4x8xf32>, vector<64x8xf32> -> vector<64x8xf32>
    %c0_67 = arith.constant 0 : index
    %c0_68 = arith.constant 0 : index
    %58 = vector.load %arg7[%c0_67, %c0_68] : memref<1x8xf32, #tpu.memory_space<vmem>>, vector<1x8xf32>
    %59 = vector.broadcast %58 : vector<1x8xf32> to vector<64x8xf32>
    %60 = arith.addf %57, %59 : vector<64x8xf32>
    %cst_69 = arith.constant 0.000000e+00 : f32
    %61 = vector.broadcast %cst_69 : f32 to vector<64x8xf32>
    %62 = arith.maximumf %60, %61 : vector<64x8xf32>
    %63 = vector.shape_cast %62 : vector<64x8xf32> to vector<8x8x8xf32>
    %c1_70 = arith.constant 1 : index
    %c0_71 = arith.constant 0 : index
    %c0_72 = arith.constant 0 : index
    %c0_73 = arith.constant 0 : index
    %64 = vector.load %arg8[%c1_70, %c0_71, %c0_72, %c0_73] : memref<4x8x8x8xf32, #tpu.memory_space<vmem>>, vector<1x8x8x8xf32>
    %65 = vector.shape_cast %64 : vector<1x8x8x8xf32> to vector<8x8x8xf32>
    %66 = vector.shape_cast %63 : vector<8x8x8xf32> to vector<1x8x8x8xf32>
    tpu.vector_store %arg8[%c1_70, %c0_71, %c0_72, %c0_73], %66 {strides = array<i32>} : memref<4x8x8x8xf32, #tpu.memory_space<vmem>>, vector<1x8x8x8xf32>,
    %c1_74 = arith.constant 1 : index
    %c0_75 = arith.constant 0 : index
    %c0_76 = arith.constant 0 : index
    %67 = vector.load %arg9[%c1_74, %c0_75, %c0_76] : memref<9x9x4xf32, #tpu.memory_space<vmem>>, vector<8x8x4xf32>
    %68 = vector.shape_cast %67 : vector<8x8x4xf32> to vector<64x4xf32>
    %c0_77 = arith.constant 0 : index
    %c1_78 = arith.constant 1 : index
    %c0_79 = arith.constant 0 : index
    %c0_80 = arith.constant 0 : index
    %69 = vector.load %arg4[%c0_77, %c1_78, %c0_79, %c0_80] : memref<3x3x4x4xf32, #tpu.memory_space<vmem>>, vector<1x1x4x4xf32>
    %70 = vector.shape_cast %69 : vector<1x1x4x4xf32> to vector<4x4xf32>
    %cst_81 = arith.constant dense<0.000000e+00> : vector<64x4xf32>
    %71 = tpu.matmul %68, %70, %cst_81 {dimension_numbers = #tpu.dot_dimension_numbers<[1], [0], [0], [1], [0, 0, 1, 1], [], []>} : vector<64x4xf32>, vector<4x4xf32>, vector<64x4xf32> -> vector<64x4xf32>
    %c0_82 = arith.constant 0 : index
    %c0_83 = arith.constant 0 : index
    %72 = vector.load %arg10[%c0_82, %c0_83] : memref<64x4xf32, #tpu.memory_space<vmem>>, vector<64x4xf32>
    tpu.vector_store %arg10[%c0_82, %c0_83], %71 {strides = array<i32>} : memref<64x4xf32, #tpu.memory_space<vmem>>, vector<64x4xf32>,
    %c0_84 = arith.constant 0 : index
    %c0_85 = arith.constant 0 : index
    %c0_86 = arith.constant 0 : index
    %73 = vector.load %arg9[%c0_84, %c0_85, %c0_86] : memref<9x9x4xf32, #tpu.memory_space<vmem>>, vector<8x8x4xf32>
    %74 = vector.shape_cast %73 : vector<8x8x4xf32> to vector<64x4xf32>
    %c2_87 = arith.constant 2 : index
    %c1_88 = arith.constant 1 : index
    %c0_89 = arith.constant 0 : index
    %c0_90 = arith.constant 0 : index
    %75 = vector.load %arg4[%c2_87, %c1_88, %c0_89, %c0_90] : memref<3x3x4x4xf32, #tpu.memory_space<vmem>>, vector<1x1x4x4xf32>
    %76 = vector.shape_cast %75 : vector<1x1x4x4xf32> to vector<4x4xf32>
    %cst_91 = arith.constant dense<0.000000e+00> : vector<64x4xf32>
    %77 = tpu.matmul %74, %76, %cst_91 {dimension_numbers = #tpu.dot_dimension_numbers<[1], [0], [0], [1], [0, 0, 1, 1], [], []>} : vector<64x4xf32>, vector<4x4xf32>, vector<64x4xf32> -> vector<64x4xf32>
    %c0_92 = arith.constant 0 : index
    %c0_93 = arith.constant 0 : index
    %78 = vector.load %arg10[%c0_92, %c0_93] : memref<64x4xf32, #tpu.memory_space<vmem>>, vector<64x4xf32>
    %79 = arith.addf %78, %77 : vector<64x4xf32>
    %c0_94 = arith.constant 0 : index
    %c0_95 = arith.constant 0 : index
    %80 = vector.load %arg10[%c0_94, %c0_95] : memref<64x4xf32, #tpu.memory_space<vmem>>, vector<64x4xf32>
    tpu.vector_store %arg10[%c0_94, %c0_95], %79 {strides = array<i32>} : memref<64x4xf32, #tpu.memory_space<vmem>>, vector<64x4xf32>,
    %c0_96 = arith.constant 0 : index
    %c0_97 = arith.constant 0 : index
    %81 = vector.load %arg10[%c0_96, %c0_97] : memref<64x4xf32, #tpu.memory_space<vmem>>, vector<64x4xf32>
    %c0_98 = arith.constant 0 : index
    %c0_99 = arith.constant 0 : index
    %82 = vector.load %arg5[%c0_98, %c0_99] : memref<1x4xf32, #tpu.memory_space<vmem>>, vector<1x4xf32>
    %83 = vector.broadcast %82 : vector<1x4xf32> to vector<64x4xf32>
    %84 = arith.addf %81, %83 : vector<64x4xf32>
    %cst_100 = arith.constant 0.000000e+00 : f32
    %85 = vector.broadcast %cst_100 : f32 to vector<64x4xf32>
    %86 = arith.maximumf %84, %85 : vector<64x4xf32>
    %c0_101 = arith.constant 0 : index
    %c0_102 = arith.constant 0 : index
    %87 = vector.load %arg6[%c0_101, %c0_102] : memref<4x8xf32, #tpu.memory_space<vmem>>, vector<4x8xf32>
    %cst_103 = arith.constant dense<0.000000e+00> : vector<64x8xf32>
    %88 = tpu.matmul %86, %87, %cst_103 {dimension_numbers = #tpu.dot_dimension_numbers<[1], [0], [0], [1], [0, 0, 1, 1], [], []>} : vector<64x4xf32>, vector<4x8xf32>, vector<64x8xf32> -> vector<64x8xf32>
    %c0_104 = arith.constant 0 : index
    %c0_105 = arith.constant 0 : index
    %89 = vector.load %arg7[%c0_104, %c0_105] : memref<1x8xf32, #tpu.memory_space<vmem>>, vector<1x8xf32>
    %90 = vector.broadcast %89 : vector<1x8xf32> to vector<64x8xf32>
    %91 = arith.addf %88, %90 : vector<64x8xf32>
    %cst_106 = arith.constant 0.000000e+00 : f32
    %92 = vector.broadcast %cst_106 : f32 to vector<64x8xf32>
    %93 = arith.maximumf %91, %92 : vector<64x8xf32>
    %94 = vector.shape_cast %93 : vector<64x8xf32> to vector<8x8x8xf32>
    %c2_107 = arith.constant 2 : index
    %c0_108 = arith.constant 0 : index
    %c0_109 = arith.constant 0 : index
    %c0_110 = arith.constant 0 : index
    %95 = vector.load %arg8[%c2_107, %c0_108, %c0_109, %c0_110] : memref<4x8x8x8xf32, #tpu.memory_space<vmem>>, vector<1x8x8x8xf32>
    %96 = vector.shape_cast %95 : vector<1x8x8x8xf32> to vector<8x8x8xf32>
    %97 = vector.shape_cast %94 : vector<8x8x8xf32> to vector<1x8x8x8xf32>
    tpu.vector_store %arg8[%c2_107, %c0_108, %c0_109, %c0_110], %97 {strides = array<i32>} : memref<4x8x8x8xf32, #tpu.memory_space<vmem>>, vector<1x8x8x8xf32>,
    %c1_111 = arith.constant 1 : index
    %c1_112 = arith.constant 1 : index
    %c0_113 = arith.constant 0 : index
    %98 = vector.load %arg9[%c1_111, %c1_112, %c0_113] : memref<9x9x4xf32, #tpu.memory_space<vmem>>, vector<8x8x4xf32>
    %99 = vector.shape_cast %98 : vector<8x8x4xf32> to vector<64x4xf32>
    %c0_114 = arith.constant 0 : index
    %c0_115 = arith.constant 0 : index
    %c0_116 = arith.constant 0 : index
    %c0_117 = arith.constant 0 : index
    %100 = vector.load %arg4[%c0_114, %c0_115, %c0_116, %c0_117] : memref<3x3x4x4xf32, #tpu.memory_space<vmem>>, vector<1x1x4x4xf32>
    %101 = vector.shape_cast %100 : vector<1x1x4x4xf32> to vector<4x4xf32>
    %cst_118 = arith.constant dense<0.000000e+00> : vector<64x4xf32>
    %102 = tpu.matmul %99, %101, %cst_118 {dimension_numbers = #tpu.dot_dimension_numbers<[1], [0], [0], [1], [0, 0, 1, 1], [], []>} : vector<64x4xf32>, vector<4x4xf32>, vector<64x4xf32> -> vector<64x4xf32>
    %c0_119 = arith.constant 0 : index
    %c0_120 = arith.constant 0 : index
    %103 = vector.load %arg10[%c0_119, %c0_120] : memref<64x4xf32, #tpu.memory_space<vmem>>, vector<64x4xf32>
    tpu.vector_store %arg10[%c0_119, %c0_120], %102 {strides = array<i32>} : memref<64x4xf32, #tpu.memory_space<vmem>>, vector<64x4xf32>,
    %c1_121 = arith.constant 1 : index
    %c0_122 = arith.constant 0 : index
    %c0_123 = arith.constant 0 : index
    %104 = vector.load %arg9[%c1_121, %c0_122, %c0_123] : memref<9x9x4xf32, #tpu.memory_space<vmem>>, vector<8x8x4xf32>
    %105 = vector.shape_cast %104 : vector<8x8x4xf32> to vector<64x4xf32>
    %c0_124 = arith.constant 0 : index
    %c2_125 = arith.constant 2 : index
    %c0_126 = arith.constant 0 : index
    %c0_127 = arith.constant 0 : index
    %106 = vector.load %arg4[%c0_124, %c2_125, %c0_126, %c0_127] : memref<3x3x4x4xf32, #tpu.memory_space<vmem>>, vector<1x1x4x4xf32>
    %107 = vector.shape_cast %106 : vector<1x1x4x4xf32> to vector<4x4xf32>
    %cst_128 = arith.constant dense<0.000000e+00> : vector<64x4xf32>
    %108 = tpu.matmul %105, %107, %cst_128 {dimension_numbers = #tpu.dot_dimension_numbers<[1], [0], [0], [1], [0, 0, 1, 1], [], []>} : vector<64x4xf32>, vector<4x4xf32>, vector<64x4xf32> -> vector<64x4xf32>
    %c0_129 = arith.constant 0 : index
    %c0_130 = arith.constant 0 : index
    %109 = vector.load %arg10[%c0_129, %c0_130] : memref<64x4xf32, #tpu.memory_space<vmem>>, vector<64x4xf32>
    %110 = arith.addf %109, %108 : vector<64x4xf32>
    %c0_131 = arith.constant 0 : index
    %c0_132 = arith.constant 0 : index
    %111 = vector.load %arg10[%c0_131, %c0_132] : memref<64x4xf32, #tpu.memory_space<vmem>>, vector<64x4xf32>
    tpu.vector_store %arg10[%c0_131, %c0_132], %110 {strides = array<i32>} : memref<64x4xf32, #tpu.memory_space<vmem>>, vector<64x4xf32>,
    %c0_133 = arith.constant 0 : index
    %c1_134 = arith.constant 1 : index
    %c0_135 = arith.constant 0 : index
    %112 = vector.load %arg9[%c0_133, %c1_134, %c0_135] : memref<9x9x4xf32, #tpu.memory_space<vmem>>, vector<8x8x4xf32>
    %113 = vector.shape_cast %112 : vector<8x8x4xf32> to vector<64x4xf32>
    %c2_136 = arith.constant 2 : index
    %c0_137 = arith.constant 0 : index
    %c0_138 = arith.constant 0 : index
    %c0_139 = arith.constant 0 : index
    %114 = vector.load %arg4[%c2_136, %c0_137, %c0_138, %c0_139] : memref<3x3x4x4xf32, #tpu.memory_space<vmem>>, vector<1x1x4x4xf32>
    %115 = vector.shape_cast %114 : vector<1x1x4x4xf32> to vector<4x4xf32>
    %cst_140 = arith.constant dense<0.000000e+00> : vector<64x4xf32>
    %116 = tpu.matmul %113, %115, %cst_140 {dimension_numbers = #tpu.dot_dimension_numbers<[1], [0], [0], [1], [0, 0, 1, 1], [], []>} : vector<64x4xf32>, vector<4x4xf32>, vector<64x4xf32> -> vector<64x4xf32>
    %c0_141 = arith.constant 0 : index
    %c0_142 = arith.constant 0 : index
    %117 = vector.load %arg10[%c0_141, %c0_142] : memref<64x4xf32, #tpu.memory_space<vmem>>, vector<64x4xf32>
    %118 = arith.addf %117, %116 : vector<64x4xf32>
    %c0_143 = arith.constant 0 : index
    %c0_144 = arith.constant 0 : index
    %119 = vector.load %arg10[%c0_143, %c0_144] : memref<64x4xf32, #tpu.memory_space<vmem>>, vector<64x4xf32>
    tpu.vector_store %arg10[%c0_143, %c0_144], %118 {strides = array<i32>} : memref<64x4xf32, #tpu.memory_space<vmem>>, vector<64x4xf32>,
    %c0_145 = arith.constant 0 : index
    %c0_146 = arith.constant 0 : index
    %c0_147 = arith.constant 0 : index
    %120 = vector.load %arg9[%c0_145, %c0_146, %c0_147] : memref<9x9x4xf32, #tpu.memory_space<vmem>>, vector<8x8x4xf32>
    %121 = vector.shape_cast %120 : vector<8x8x4xf32> to vector<64x4xf32>
    %c2_148 = arith.constant 2 : index
    %c2_149 = arith.constant 2 : index
    %c0_150 = arith.constant 0 : index
    %c0_151 = arith.constant 0 : index
    %122 = vector.load %arg4[%c2_148, %c2_149, %c0_150, %c0_151] : memref<3x3x4x4xf32, #tpu.memory_space<vmem>>, vector<1x1x4x4xf32>
    %123 = vector.shape_cast %122 : vector<1x1x4x4xf32> to vector<4x4xf32>
    %cst_152 = arith.constant dense<0.000000e+00> : vector<64x4xf32>
    %124 = tpu.matmul %121, %123, %cst_152 {dimension_numbers = #tpu.dot_dimension_numbers<[1], [0], [0], [1], [0, 0, 1, 1], [], []>} : vector<64x4xf32>, vector<4x4xf32>, vector<64x4xf32> -> vector<64x4xf32>
    %c0_153 = arith.constant 0 : index
    %c0_154 = arith.constant 0 : index
    %125 = vector.load %arg10[%c0_153, %c0_154] : memref<64x4xf32, #tpu.memory_space<vmem>>, vector<64x4xf32>
    %126 = arith.addf %125, %124 : vector<64x4xf32>
    %c0_155 = arith.constant 0 : index
    %c0_156 = arith.constant 0 : index
    %127 = vector.load %arg10[%c0_155, %c0_156] : memref<64x4xf32, #tpu.memory_space<vmem>>, vector<64x4xf32>
    tpu.vector_store %arg10[%c0_155, %c0_156], %126 {strides = array<i32>} : memref<64x4xf32, #tpu.memory_space<vmem>>, vector<64x4xf32>,
    %c0_157 = arith.constant 0 : index
    %c0_158 = arith.constant 0 : index
    %128 = vector.load %arg10[%c0_157, %c0_158] : memref<64x4xf32, #tpu.memory_space<vmem>>, vector<64x4xf32>
    %c0_159 = arith.constant 0 : index
    %c0_160 = arith.constant 0 : index
    %129 = vector.load %arg5[%c0_159, %c0_160] : memref<1x4xf32, #tpu.memory_space<vmem>>, vector<1x4xf32>
    %130 = vector.broadcast %129 : vector<1x4xf32> to vector<64x4xf32>
    %131 = arith.addf %128, %130 : vector<64x4xf32>
    %cst_161 = arith.constant 0.000000e+00 : f32
    %132 = vector.broadcast %cst_161 : f32 to vector<64x4xf32>
    %133 = arith.maximumf %131, %132 : vector<64x4xf32>
    %c0_162 = arith.constant 0 : index
    %c0_163 = arith.constant 0 : index
    %134 = vector.load %arg6[%c0_162, %c0_163] : memref<4x8xf32, #tpu.memory_space<vmem>>, vector<4x8xf32>
    %cst_164 = arith.constant dense<0.000000e+00> : vector<64x8xf32>
    %135 = tpu.matmul %133, %134, %cst_164 {dimension_numbers = #tpu.dot_dimension_numbers<[1], [0], [0], [1], [0, 0, 1, 1], [], []>} : vector<64x4xf32>, vector<4x8xf32>, vector<64x8xf32> -> vector<64x8xf32>
    %c0_165 = arith.constant 0 : index
    %c0_166 = arith.constant 0 : index
    %136 = vector.load %arg7[%c0_165, %c0_166] : memref<1x8xf32, #tpu.memory_space<vmem>>, vector<1x8xf32>
    %137 = vector.broadcast %136 : vector<1x8xf32> to vector<64x8xf32>
    %138 = arith.addf %135, %137 : vector<64x8xf32>
    %cst_167 = arith.constant 0.000000e+00 : f32
    %139 = vector.broadcast %cst_167 : f32 to vector<64x8xf32>
    %140 = arith.maximumf %138, %139 : vector<64x8xf32>
    %141 = vector.shape_cast %140 : vector<64x8xf32> to vector<8x8x8xf32>
    %c3 = arith.constant 3 : index
    %c0_168 = arith.constant 0 : index
    %c0_169 = arith.constant 0 : index
    %c0_170 = arith.constant 0 : index
    %142 = vector.load %arg8[%c3, %c0_168, %c0_169, %c0_170] : memref<4x8x8x8xf32, #tpu.memory_space<vmem>>, vector<1x8x8x8xf32>
    %143 = vector.shape_cast %142 : vector<1x8x8x8xf32> to vector<8x8x8xf32>
    %144 = vector.shape_cast %141 : vector<8x8x8xf32> to vector<1x8x8x8xf32>
    tpu.vector_store %arg8[%c3, %c0_168, %c0_169, %c0_170], %144 {strides = array<i32>} : memref<4x8x8x8xf32, #tpu.memory_space<vmem>>, vector<1x8x8x8xf32>,
    return
  }
  func.func @transform_0(%arg0: i32) -> (i32, i32, i32) {
    %c0_i32 = arith.constant 0 : i32
    %c0_i32_0 = arith.constant 0 : i32
    %c0_i32_1 = arith.constant 0 : i32
    return %arg0, %c0_i32, %c0_i32_0 : i32, i32, i32
  }
  func.func @transform_1(%arg0: i32) -> (i32, i32) {
    %c0_i32 = arith.constant 0 : i32
    %c0_i32_0 = arith.constant 0 : i32
    %c0_i32_1 = arith.constant 0 : i32
    return %c0_i32, %c0_i32_0 : i32, i32
  }
  func.func @transform_2(%arg0: i32) -> (i32, i32) {
    %c0_i32 = arith.constant 0 : i32
    %c0_i32_0 = arith.constant 0 : i32
    %c0_i32_1 = arith.constant 0 : i32
    return %c0_i32, %c0_i32_0 : i32, i32
  }
  func.func @transform_3(%arg0: i32) -> (i32, i32, i32, i32) {
    %c0_i32 = arith.constant 0 : i32
    %c0_i32_0 = arith.constant 0 : i32
    %c0_i32_1 = arith.constant 0 : i32
    %c0_i32_2 = arith.constant 0 : i32
    %c0_i32_3 = arith.constant 0 : i32
    return %c0_i32, %c0_i32_0, %c0_i32_1, %c0_i32_2 : i32, i32, i32, i32
  }
  func.func @transform_4(%arg0: i32) -> (i32, i32) {
    %c0_i32 = arith.constant 0 : i32
    %c0_i32_0 = arith.constant 0 : i32
    %c0_i32_1 = arith.constant 0 : i32
    return %c0_i32, %c0_i32_0 : i32, i32
  }
  func.func @transform_5(%arg0: i32) -> (i32, i32) {
    %c0_i32 = arith.constant 0 : i32
    %c0_i32_0 = arith.constant 0 : i32
    %c0_i32_1 = arith.constant 0 : i32
    return %c0_i32, %c0_i32_0 : i32, i32
  }
  func.func @transform_6(%arg0: i32) -> (i32, i32) {
    %c0_i32 = arith.constant 0 : i32
    %c0_i32_0 = arith.constant 0 : i32
    %c0_i32_1 = arith.constant 0 : i32
    return %c0_i32, %c0_i32_0 : i32, i32
  }
  func.func @transform_7(%arg0: i32) -> (i32, i32, i32, i32) {
    %c0_i32 = arith.constant 0 : i32
    %c0_i32_0 = arith.constant 0 : i32
    %c0_i32_1 = arith.constant 0 : i32
    %c0_i32_2 = arith.constant 0 : i32
    return %arg0, %c0_i32, %c0_i32_0, %c0_i32_1 : i32, i32, i32, i32
  }
}

</mosaic_0001>

<llo_original>
// kernel: tpu_custom_call.1
$region0: #{tpu_custom_call.1}
  #allocation0 [shape = 'u32[]', space=smem, size = 0x4, offset = 0x4, fixed_abs, tag = 'smem constant byte address 0x4 - core index']
  #allocation1 [shape = 'u32[144,128]{1,0:T(1,128)}', space=vmem, size = 0x12000, scoped, tag = 'internal scratch']
  #allocation2 [shape = 'f32[9,9,4]{2,1,0:T(8,128)}', space=vmem, size = 0x12000, scoped, tag = 'scratch operand']
  #allocation3 [shape = 'f32[64,4]{1,0:T(8,128)}', space=vmem, size = 0x8000, scoped, tag = 'scratch operand']
  %s0 = inlined_call_operand.vmem [shape: f32[2,64,16], index: 0, kind: input, shape index: {}]
  %s1 = inlined_call_operand.vmem [shape: f32[16,4], index: 1, kind: input, shape index: {}]
  %s2 = inlined_call_operand.vmem [shape: f32[1,4], index: 2, kind: input, shape index: {}]
  %s3 = inlined_call_operand.vmem [shape: f32[3,3,4,4], index: 3, kind: input, shape index: {}]
  %s4 = inlined_call_operand.vmem [shape: f32[1,4], index: 4, kind: input, shape index: {}]
  %s5 = inlined_call_operand.vmem [shape: f32[4,8], index: 5, kind: input, shape index: {}]
  %s6 = inlined_call_operand.vmem [shape: f32[1,8], index: 6, kind: input, shape index: {}]
  %s7 = inlined_call_operand.hbm [shape: f32[8,8,8,8], index: 7, kind: output, shape index: {}]
  %s8 = sld [smem:[#allocation0]]
  $region61: #{tpu_custom_call.1} parent=0
    _
  %s10 = ssub.s32 1, %s8
  %s11 = scalar_select 0, %s10, %s8
  $region1: #{tpu_custom_call.1} parent=0
    #allocation4 [shape = 'u8[262144]{0}', space=vmem, size = 0x40000, scoped, tag = 'output window, operand 0']
    #allocation5 [shape = 's32[2]{0}', space=sflag, size = 0x8, scoped, tag = 'scoped memory for tpu_custom_call.1']
    %12 = vsyncpa [#allocation5], 0
    %s13 = scalar_lea.sflag [#allocation5], 1
    %14 = vsyncpa %s13, 0
    loop: start=0, step=1, limit=4
    $region2: #{tpu_custom_call.1} parent=1 // loop_pre_header
      _
    $region3: #{tpu_custom_call.1} parent=1 // loop_header
      %s16 = sphi 0, %s20
      %p17 = scmp.ge.s32.totalorder %s16, 4
      %s26 = sphi 0, %s28
      %s29 = sphi 0, %s26
      %s30 = sphi 0, %s29
      %s46 = sphi 0, %s30
      %s50 = sphi 0, %s50
      %s52 = sphi 0, %s50
      %s53 = sphi 0, %s52
      %s67 = sphi 0, %s53
      %s71 = sphi 0, %s71
      %s73 = sphi 0, %s71
      %s74 = sphi 0, %s73
      %s88 = sphi 0, %s74
      %s92 = sphi 0, %s92
      %s94 = sphi 0, %s92
      %s95 = sphi 0, %s94
      %s109 = sphi 0, %s95
      %s113 = sphi 0, %s113
      %s115 = sphi 0, %s113
      %s116 = sphi 0, %s115
      %s130 = sphi 0, %s116
      %s134 = sphi 0, %s134
      %s136 = sphi 0, %s134
      %s137 = sphi 0, %s136
      %s151 = sphi 0, %s137
      %s155 = sphi 0, %s155
      %s157 = sphi 0, %s155
      %s158 = sphi 0, %s157
      %s172 = sphi 0, %s158
      %s178 = sphi 0, %s180
      %s181 = sphi 0, %s178
      %s182 = sphi 0, %s181
      %s198 = sphi 0, %s182
    $region4: #{tpu_custom_call.1} parent=1 // loop_header_branch
      %19 = sbr.rel (%p17) target = $region8
    $region5: #{tpu_custom_call.1} parent=1 // loop_body
      %s21 = ssub.s32 %s16, 1
      %s22 = ssub.s32 %s16, 2
      %s23 = sadd.s32 %s16, 1
      %s24 = ssub.s32 %s16, %s23
      %p25 = scmp.eq.s32.totalorder %s24, 0
      %s27 = sadd.s32 %s26, 1
      %s28 = scalar_select %p25, %s26, %s27
      %p31 = pneg %p25
      %p32 = scmp.eq.s32.totalorder %s16, 1
      %p33 = por %p31, %p32
      %p34 = scmp.ne.s32.totalorder %s26, %s29
      %p35 = scmp.eq.s32.totalorder %s16, 0
      %p36 = por %p34, %p35
      %p37 = scmp.ne.s32.totalorder %s26, %s29
      %p38 = scmp.eq.s32.totalorder %s21, 1
      %p39 = por %p37, %p38
      %p40 = scmp.ne.s32.totalorder %s29, %s30
      %p41 = scmp.eq.s32.totalorder %s21, 0
      %p42 = por %p40, %p41
      %p43 = scmp.ne.s32.totalorder %s29, %s30
      %p44 = scmp.eq.s32.totalorder %s22, 1
      %p45 = por %p43, %p44
      %p47 = scmp.ne.s32.totalorder %s30, %s46
      %p48 = scmp.eq.s32.totalorder %s22, 0
      %p49 = por %p47, %p48
      %s51 = sadd.s32 %s50, 1
      %p54 = scmp.eq.s32.totalorder %s16, 1
      %p55 = scmp.ne.s32.totalorder %s50, %s52
      %p56 = scmp.eq.s32.totalorder %s16, 0
      %p57 = por %p55, %p56
      %p58 = scmp.ne.s32.totalorder %s50, %s52
      %p59 = scmp.eq.s32.totalorder %s21, 1
      %p60 = por %p58, %p59
      %p61 = scmp.ne.s32.totalorder %s52, %s53
      %p62 = scmp.eq.s32.totalorder %s21, 0
      %p63 = por %p61, %p62
      %p64 = scmp.ne.s32.totalorder %s52, %s53
      %p65 = scmp.eq.s32.totalorder %s22, 1
      %p66 = por %p64, %p65
      %p68 = scmp.ne.s32.totalorder %s53, %s67
      %p69 = scmp.eq.s32.totalorder %s22, 0
      %p70 = por %p68, %p69
      %s72 = sadd.s32 %s71, 1
      %p75 = scmp.eq.s32.totalorder %s16, 1
      %p76 = scmp.ne.s32.totalorder %s71, %s73
      %p77 = scmp.eq.s32.totalorder %s16, 0
      %p78 = por %p76, %p77
      %p79 = scmp.ne.s32.totalorder %s71, %s73
      %p80 = scmp.eq.s32.totalorder %s21, 1
      %p81 = por %p79, %p80
      %p82 = scmp.ne.s32.totalorder %s73, %s74
      %p83 = scmp.eq.s32.totalorder %s21, 0
      %p84 = por %p82, %p83
      %p85 = scmp.ne.s32.totalorder %s73, %s74
      %p86 = scmp.eq.s32.totalorder %s22, 1
      %p87 = por %p85, %p86
      %p89 = scmp.ne.s32.totalorder %s74, %s88
      %p90 = scmp.eq.s32.totalorder %s22, 0
      %p91 = por %p89, %p90
      %s93 = sadd.s32 %s92, 1
      %p96 = scmp.eq.s32.totalorder %s16, 1
      %p97 = scmp.ne.s32.totalorder %s92, %s94
      %p98 = scmp.eq.s32.totalorder %s16, 0
      %p99 = por %p97, %p98
      %p100 = scmp.ne.s32.totalorder %s92, %s94
      %p101 = scmp.eq.s32.totalorder %s21, 1
      %p102 = por %p100, %p101
      %p103 = scmp.ne.s32.totalorder %s94, %s95
      %p104 = scmp.eq.s32.totalorder %s21, 0
      %p105 = por %p103, %p104
      %p106 = scmp.ne.s32.totalorder %s94, %s95
      %p107 = scmp.eq.s32.totalorder %s22, 1
      %p108 = por %p106, %p107
      %p110 = scmp.ne.s32.totalorder %s95, %s109
      %p111 = scmp.eq.s32.totalorder %s22, 0
      %p112 = por %p110, %p111
      %s114 = sadd.s32 %s113, 1
      %p117 = scmp.eq.s32.totalorder %s16, 1
      %p118 = scmp.ne.s32.totalorder %s113, %s115
      %p119 = scmp.eq.s32.totalorder %s16, 0
      %p120 = por %p118, %p119
      %p121 = scmp.ne.s32.totalorder %s113, %s115
      %p122 = scmp.eq.s32.totalorder %s21, 1
      %p123 = por %p121, %p122
      %p124 = scmp.ne.s32.totalorder %s115, %s116
      %p125 = scmp.eq.s32.totalorder %s21, 0
      %p126 = por %p124, %p125
      %p127 = scmp.ne.s32.totalorder %s115, %s116
      %p128 = scmp.eq.s32.totalorder %s22, 1
      %p129 = por %p127, %p128
      %p131 = scmp.ne.s32.totalorder %s116, %s130
      %p132 = scmp.eq.s32.totalorder %s22, 0
      %p133 = por %p131, %p132
      %s135 = sadd.s32 %s134, 1
      %p138 = scmp.eq.s32.totalorder %s16, 1
      %p139 = scmp.ne.s32.totalorder %s134, %s136
      %p140 = scmp.eq.s32.totalorder %s16, 0
      %p141 = por %p139, %p140
      %p142 = scmp.ne.s32.totalorder %s134, %s136
      %p143 = scmp.eq.s32.totalorder %s21, 1
      %p144 = por %p142, %p143
      %p145 = scmp.ne.s32.totalorder %s136, %s137
      %p146 = scmp.eq.s32.totalorder %s21, 0
      %p147 = por %p145, %p146
      %p148 = scmp.ne.s32.totalorder %s136, %s137
      %p149 = scmp.eq.s32.totalorder %s22, 1
      %p150 = por %p148, %p149
      %p152 = scmp.ne.s32.totalorder %s137, %s151
      %p153 = scmp.eq.s32.totalorder %s22, 0
      %p154 = por %p152, %p153
      %s156 = sadd.s32 %s155, 1
      %p159 = scmp.eq.s32.totalorder %s16, 1
      %p160 = scmp.ne.s32.totalorder %s155, %s157
      %p161 = scmp.eq.s32.totalorder %s16, 0
      %p162 = por %p160, %p161
      %p163 = scmp.ne.s32.totalorder %s155, %s157
      %p164 = scmp.eq.s32.totalorder %s21, 1
      %p165 = por %p163, %p164
      %p166 = scmp.ne.s32.totalorder %s157, %s158
      %p167 = scmp.eq.s32.totalorder %s21, 0
      %p168 = por %p166, %p167
      %p169 = scmp.ne.s32.totalorder %s157, %s158
      %p170 = scmp.eq.s32.totalorder %s22, 1
      %p171 = por %p169, %p170
      %p173 = scmp.ne.s32.totalorder %s158, %s172
      %p174 = scmp.eq.s32.totalorder %s22, 0
      %p175 = por %p173, %p174
      %s176 = ssub.s32 %s16, %s23
      %p177 = scmp.eq.s32.totalorder %s176, 0
      %s179 = sadd.s32 %s178, 1
      %s180 = scalar_select %p177, %s178, %s179
      %p183 = pneg %p177
      %p184 = scmp.eq.s32.totalorder %s16, 1
      %p185 = por %p183, %p184
      %p186 = scmp.ne.s32.totalorder %s178, %s181
      %p187 = scmp.eq.s32.totalorder %s16, 0
      %p188 = por %p186, %p187
      %p189 = scmp.ne.s32.totalorder %s178, %s181
      %p190 = scmp.eq.s32.totalorder %s21, 1
      %p191 = por %p189, %p190
      %p192 = scmp.ne.s32.totalorder %s181, %s182
      %p193 = scmp.eq.s32.totalorder %s21, 0
      %p194 = por %p192, %p193
      %p195 = scmp.ne.s32.totalorder %s181, %s182
      %p196 = scmp.eq.s32.totalorder %s22, 1
      %p197 = por %p195, %p196
      %p199 = scmp.ne.s32.totalorder %s182, %s198
      %p200 = scmp.eq.s32.totalorder %s22, 0
      %p201 = por %p199, %p200
      %p202 = scmp.le.s32.totalorder 1, %s16
      %p203 = scmp.lt.s32.totalorder %s16, 3
      %p204 = pnand %p202, %p203
      %p205 = pneg %p204
      // Predicated region
      $region9: #{tpu_custom_call.1} parent=5 // pred_check
        _
      $region10: #{tpu_custom_call.1} parent=5 // pred_check_branch
        %207 = sbr.rel (%p204) target = $region12
      $region11: #{tpu_custom_call.1} parent=5 // pred_region
        %s208 = ssub.s32 %s16, 1
        // Predicated region
        $region13: #{tpu_custom_call.1} parent=11 // pred_check
          %p209 = pneg %p63
        $region14: #{tpu_custom_call.1} parent=11 // pred_check_branch
          %211 = sbr.rel (%p209) target = $region16
        $region15: #{tpu_custom_call.1} parent=11 // pred_region
          _
        $region16: #{tpu_custom_call.1} parent=11 // pred_fallthru
          _
        // Predicated region
        $region17: #{tpu_custom_call.1} parent=11 // pred_check
          %p212 = pneg %p84
        $region18: #{tpu_custom_call.1} parent=11 // pred_check_branch
          %214 = sbr.rel (%p212) target = $region20
        $region19: #{tpu_custom_call.1} parent=11 // pred_region
          _
        $region20: #{tpu_custom_call.1} parent=11 // pred_fallthru
          _
        // Predicated region
        $region21: #{tpu_custom_call.1} parent=11 // pred_check
          %p215 = pneg %p105
        $region22: #{tpu_custom_call.1} parent=11 // pred_check_branch
          %217 = sbr.rel (%p215) target = $region24
        $region23: #{tpu_custom_call.1} parent=11 // pred_region
          _
        $region24: #{tpu_custom_call.1} parent=11 // pred_fallthru
          _
        // Predicated region
        $region25: #{tpu_custom_call.1} parent=11 // pred_check
          %p218 = pneg %p126
        $region26: #{tpu_custom_call.1} parent=11 // pred_check_branch
          %220 = sbr.rel (%p218) target = $region28
        $region27: #{tpu_custom_call.1} parent=11 // pred_region
          _
        $region28: #{tpu_custom_call.1} parent=11 // pred_fallthru
          _
        // Predicated region
        $region29: #{tpu_custom_call.1} parent=11 // pred_check
          %p221 = pneg %p147
        $region30: #{tpu_custom_call.1} parent=11 // pred_check_branch
          %223 = sbr.rel (%p221) target = $region32
        $region31: #{tpu_custom_call.1} parent=11 // pred_region
          _
        $region32: #{tpu_custom_call.1} parent=11 // pred_fallthru
          _
        // Predicated region
        $region33: #{tpu_custom_call.1} parent=11 // pred_check
          %p224 = pneg %p168
        $region34: #{tpu_custom_call.1} parent=11 // pred_check_branch
          %226 = sbr.rel (%p224) target = $region36
        $region35: #{tpu_custom_call.1} parent=11 // pred_region
          _
        $region36: #{tpu_custom_call.1} parent=11 // pred_fallthru
          _
      $region12: #{tpu_custom_call.1} parent=5 // pred_fallthru
        _
      %p227 = scmp.lt.s32.totalorder %s16, 2
      // Predicated region
      $region37: #{tpu_custom_call.1} parent=5 // pred_check
        %p228 = pneg %p227
      $region38: #{tpu_custom_call.1} parent=5 // pred_check_branch
        %230 = sbr.rel (%p228) target = $region40
      $region39: #{tpu_custom_call.1} parent=5 // pred_region
        // Predicated region
        $region41: #{tpu_custom_call.1} parent=39 // pred_check
          %p231 = pneg %p36
        $region42: #{tpu_custom_call.1} parent=39 // pred_check_branch
          %233 = sbr.rel (%p231) target = $region44
        $region43: #{tpu_custom_call.1} parent=39 // pred_region
          %p234 = scmp.lt.s32.totalorder %s16, 1
          %s235 = scalar_select %p234, %s16, 1
          %s236 = smul.addr %s235, 8
          %s237 = smul.addr %s236, 8
          %s238 = scalar_lea.vmem %s0, %s237
        $region44: #{tpu_custom_call.1} parent=39 // pred_fallthru
          _
      $region40: #{tpu_custom_call.1} parent=5 // pred_fallthru
        _
      %p239 = scmp.le.s32.totalorder 1, %s16
      %p240 = scmp.lt.s32.totalorder %s16, 3
      %p241 = pnand %p239, %p240
      %p242 = pneg %p241
      // Predicated region
      $region45: #{tpu_custom_call.1} parent=5 // pred_check
        _
      $region46: #{tpu_custom_call.1} parent=5 // pred_check_branch
        %244 = sbr.rel (%p241) target = $region48
      $region47: #{tpu_custom_call.1} parent=5 // pred_region
        %s245 = ssub.s32 %s16, 1
        %p246 = scmp.lt.s32.totalorder %s21, 1
        %s247 = scalar_select %p246, %s21, 1
        %s248 = smul.addr %s247, 8
        %s249 = smul.addr %s248, 8
        %s250 = scalar_lea.vmem %s0, %s249
        %p251 = pneg %p42
        %p252 = pneg %p39
        %p253 = pneg %p63
        %p254 = pneg %p60
        %p255 = pneg %p84
        %p256 = pneg %p81
        %p257 = pneg %p105
        %p258 = pneg %p102
        %p259 = pneg %p126
        %p260 = pneg %p123
        %p261 = pneg %p147
        %p262 = pneg %p144
        %p263 = pneg %p168
        %p264 = pneg %p165
        %p265 = pneg %p194
        %p266 = pneg %p191
        %s267 = sand.u32 %s181, 1
        %s268 = scalar_lea.sflag [#allocation5], %s267
        %s269 = sand.u32 %s181, 1
        %s270 = smul.addr %s269, 256
        %s271 = scalar_lea.vmem [#allocation4], %s270
        %p272 = scmp.lt.s32.totalorder %s21, 1
        %s273 = scalar_select %p272, %s21, 1
        %s274 = smul.addr %s273, 8
        %s275 = smul.addr %s274, 8
        %s276 = scalar_lea.vmem %s0, %s275
        %s277 = smul.u32 4, %s21
        %v278 = vld [vmem:[%s276] sm:$0xff]
        %v279 = vld [vmem:[%s276 + $0x8] sm:$0xff]
        %v280 = vld [vmem:[%s276 + $0x10] sm:$0xff]
        %v281 = vld [vmem:[%s276 + $0x18] sm:$0xff]
        %v282 = vld [vmem:[%s276 + $0x20] sm:$0xff]
        %v283 = vld [vmem:[%s276 + $0x28] sm:$0xff]
        %v284 = vld [vmem:[%s276 + $0x30] sm:$0xff]
        %v285 = vld [vmem:[%s276 + $0x38] sm:$0xff]
        %v286 = vld [vmem:[%s1] sm:$0xff]
        %v287 = vld [vmem:[%s1 + $0x8] sm:$0xff]
        %v288 = vld [vmem:[%s2] sm:$0x1]
        %v290 = vlaneseq
        %v291 = vshrl.u32 %v290, 7
        %v292 = vsub.s32 0, %v291
        %v293 = vrot.slane %v288, %v292
        %vm295 = vcmask 130048
        %v297 = vsel %vm295, %v278, 0
        %v300 = vsel %vm295, %v279, 0
        %v303 = vsel %vm295, %v280, 0
        %v306 = vsel %vm295, %v281, 0
        %v309 = vsel %vm295, %v282, 0
        %v312 = vsel %vm295, %v283, 0
        %v315 = vsel %vm295, %v284, 0
        %v318 = vsel %vm295, %v285, 0
        %320 = vmatprep.subr.mxu0 0.0
        %321 = vmatpush1.msra.mxu0 %v286
        %322 = vmatprep.subr.mxu0 0.0
        %323 = vmatpush1.msra.mxu0 %v287
        %324 = vmatprep.subr.mxu0 0.0
        %325 = vmatpush1.msra.mxu0 0.0
        %326 = vmatprep.subr.mxu0 0.0
        %327 = vmatpush1.msra.mxu0 0.0
        %328 = vmatprep.subr.mxu0 0.0
        %329 = vmatpush1.msra.mxu0 0.0
        %330 = vmatprep.subr.mxu0 0.0
        %331 = vmatpush1.msra.mxu0 0.0
        %332 = vmatprep.subr.mxu0 0.0
        %333 = vmatpush1.msra.mxu0 0.0
        %334 = vmatprep.subr.mxu0 0.0
        %335 = vmatpush1.msra.mxu0 0.0
        %336 = vmatprep.subr.mxu0 0.0
        %337 = vmatpush1.msra.mxu0 0.0
        %338 = vmatprep.subr.mxu0 0.0
        %339 = vmatpush1.msra.mxu0 0.0
        %340 = vmatprep.subr.mxu0 0.0
        %341 = vmatpush1.msra.mxu0 0.0
        %342 = vmatprep.subr.mxu0 0.0
        %343 = vmatpush1.msra.mxu0 0.0
        %344 = vmatprep.subr.mxu0 0.0
        %345 = vmatpush1.msra.mxu0 0.0
        %346 = vmatprep.subr.mxu0 0.0
        %347 = vmatpush1.msra.mxu0 0.0
        %348 = vmatprep.subr.mxu0 0.0
        %349 = vmatpush1.msra.mxu0 0.0
        %350 = vmatprep.subr.mxu0 0.0
        %351 = vmatpush1.msra.mxu0 0.0
        %352 = vmatprep.subr.mxu0 0.0
        %353 = vmatpush1.msra.mxu0 0.0
        %354 = vmatprep.subr.mxu0 0.0
        %355 = vmatpush1.msra.mxu0 0.0
        %356 = vmatprep.subr.mxu0 0.0
        %357 = vmatpush1.msra.mxu0 0.0
        %358 = vmatprep.subr.mxu0 0.0
        %359 = vmatpush1.msra.mxu0 0.0
        %360 = vmatprep.subr.mxu0 0.0
        %361 = vmatpush1.msra.mxu0 0.0
        %362 = vmatprep.subr.mxu0 0.0
        %363 = vmatpush1.msra.mxu0 0.0
        %364 = vmatprep.subr.mxu0 0.0
        %365 = vmatpush1.msra.mxu0 0.0
        %366 = vmatprep.subr.mxu0 0.0
        %367 = vmatpush1.msra.mxu0 0.0
        %368 = vmatprep.subr.mxu0 0.0
        %369 = vmatpush1.msra.mxu0 0.0
        %370 = vmatprep.subr.mxu0 0.0
        %371 = vmatpush1.msra.mxu0 0.0
        %372 = vmatprep.subr.mxu0 0.0
        %373 = vmatpush1.msra.mxu0 0.0
        %374 = vmatprep.subr.mxu0 0.0
        %375 = vmatpush1.msra.mxu0 0.0
        %376 = vmatprep.subr.mxu0 0.0
        %377 = vmatpush1.msra.mxu0 0.0
        %378 = vmatprep.subr.mxu0 0.0
        %379 = vmatpush1.msra.mxu0 0.0
        %380 = vmatprep.subr.mxu0 0.0
        %381 = vmatpush1.msra.mxu0 0.0
        %382 = vmatprep.subr.mxu0 0.0
        %383 = vmatpush1.msra.mxu0 0.0
        %384 = vmatprep.mubr.f32.mxu0 0.0
        %385 = vmatmul.mubr.f32.gmra.mrb[0].mxu0 %v297
        %v386 = vpop.f32.mrb[0].mxu0
        %v387 = vadd.f32 %v293, %v386
        %v388 = vpop.f32.mrb[0].mxu0
        %389 = vmatprep.mubr.f32.mxu0 0.0
        %390 = vmatmul.mubr.f32.gmra.mrb[0].mxu0 %v300
        %v391 = vpop.f32.mrb[0].mxu0
        %v392 = vadd.f32 %v293, %v391
        %v393 = vpop.f32.mrb[0].mxu0
        %394 = vmatprep.mubr.f32.mxu0 0.0
        %395 = vmatmul.mubr.f32.gmra.mrb[0].mxu0 %v303
        %v396 = vpop.f32.mrb[0].mxu0
        %v397 = vadd.f32 %v293, %v396
        %v398 = vpop.f32.mrb[0].mxu0
        %399 = vmatprep.mubr.f32.mxu0 0.0
        %400 = vmatmul.mubr.f32.gmra.mrb[0].mxu0 %v306
        %v401 = vpop.f32.mrb[0].mxu0
        %v402 = vadd.f32 %v293, %v401
        %v403 = vpop.f32.mrb[0].mxu0
        %404 = vmatprep.mubr.f32.mxu0 0.0
        %405 = vmatmul.mubr.f32.gmra.mrb[0].mxu0 %v309
        %v406 = vpop.f32.mrb[0].mxu0
        %v407 = vadd.f32 %v293, %v406
        %v408 = vpop.f32.mrb[0].mxu0
        %409 = vmatprep.mubr.f32.mxu0 0.0
        %410 = vmatmul.mubr.f32.gmra.mrb[0].mxu0 %v312
        %v411 = vpop.f32.mrb[0].mxu0
        %v412 = vadd.f32 %v293, %v411
        %v413 = vpop.f32.mrb[0].mxu0
        %414 = vmatprep.mubr.f32.mxu0 0.0
        %415 = vmatmul.mubr.f32.gmra.mrb[0].mxu0 %v315
        %v416 = vpop.f32.mrb[0].mxu0
        %v417 = vadd.f32 %v293, %v416
        %v418 = vpop.f32.mrb[0].mxu0
        %419 = vmatprep.mubr.f32.mxu0 0.0
        %420 = vmatmul.mubr.f32.gmra.mrb[0].mxu0 %v318
        %v421 = vpop.f32.mrb[0].mxu0
        %v422 = vadd.f32 %v293, %v421
        %v423 = vpop.f32.mrb[0].mxu0
        %424 = vdwg.mxu0
        %v425 = vmax.f32 %v387, 0.0
        %v426 = vmax.f32 %v392, 0.0
        %v427 = vmax.f32 %v397, 0.0
        %v428 = vmax.f32 %v402, 0.0
        %v429 = vmax.f32 %v407, 0.0
        %v430 = vmax.f32 %v412, 0.0
        %v431 = vmax.f32 %v417, 0.0
        %v432 = vmax.f32 %v422, 0.0
        %vm433 = vcmask 31744
        %434 = vst.msk [vmem:[#allocation2] sm:$0xff] %vm433, 0.0
        %vm435 = vcmask 24576
        %436 = vst.msk [vmem:[#allocation2 + $0x8] sm:$0x1] %vm435, 0.0
        %437 = vst.msk [vmem:[#allocation2 + $0x10] sm:$0xff] %vm433, 0.0
        %438 = vst.msk [vmem:[#allocation2 + $0x18] sm:$0x1] %vm435, 0.0
        %439 = vst.msk [vmem:[#allocation2 + $0x20] sm:$0xff] %vm433, 0.0
        %440 = vst.msk [vmem:[#allocation2 + $0x28] sm:$0x1] %vm435, 0.0
        %441 = vst.msk [vmem:[#allocation2 + $0x30] sm:$0xff] %vm433, 0.0
        %442 = vst.msk [vmem:[#allocation2 + $0x38] sm:$0x1] %vm435, 0.0
        %443 = vst.msk [vmem:[#allocation2 + $0x40] sm:$0xff] %vm433, 0.0
        %444 = vst.msk [vmem:[#allocation2 + $0x48] sm:$0x1] %vm435, 0.0
        %445 = vst.msk [vmem:[#allocation2 + $0x50] sm:$0xff] %vm433, 0.0
        %446 = vst.msk [vmem:[#allocation2 + $0x58] sm:$0x1] %vm435, 0.0
        %447 = vst.msk [vmem:[#allocation2 + $0x60] sm:$0xff] %vm433, 0.0
        %448 = vst.msk [vmem:[#allocation2 + $0x68] sm:$0x1] %vm435, 0.0
        %449 = vst.msk [vmem:[#allocation2 + $0x70] sm:$0xff] %vm433, 0.0
        %450 = vst.msk [vmem:[#allocation2 + $0x78] sm:$0x1] %vm435, 0.0
        %451 = vst.msk [vmem:[#allocation2 + $0x80] sm:$0xff] %vm433, 0.0
        %452 = vst.msk [vmem:[#allocation2 + $0x88] sm:$0x1] %vm435, 0.0
        %453 = vst.msk [vmem:[#allocation2] sm:$0xff] %vm433, %v425
        %454 = vst.msk [vmem:[#allocation2 + $0x10] sm:$0xff] %vm433, %v426
        %455 = vst.msk [vmem:[#allocation2 + $0x20] sm:$0xff] %vm433, %v427
        %456 = vst.msk [vmem:[#allocation2 + $0x30] sm:$0xff] %vm433, %v428
        %457 = vst.msk [vmem:[#allocation2 + $0x40] sm:$0xff] %vm433, %v429
        %458 = vst.msk [vmem:[#allocation2 + $0x50] sm:$0xff] %vm433, %v430
        %459 = vst.msk [vmem:[#allocation2 + $0x60] sm:$0xff] %vm433, %v431
        %460 = vst.msk [vmem:[#allocation2 + $0x70] sm:$0xff] %vm433, %v432
        %v461 = vld [vmem:[#allocation2] sm:$0xff]
        %v462 = vld [vmem:[#allocation2 + $0x10] sm:$0xff]
        %v463 = vld [vmem:[#allocation2 + $0x20] sm:$0xff]
        %v464 = vld [vmem:[#allocation2 + $0x30] sm:$0xff]
        %v465 = vld [vmem:[#allocation2 + $0x40] sm:$0xff]
        %v466 = vld [vmem:[#allocation2 + $0x50] sm:$0xff]
        %v467 = vld [vmem:[#allocation2 + $0x60] sm:$0xff]
        %v468 = vld [vmem:[#allocation2 + $0x70] sm:$0xff]
        %s469 = scalar_lea.vmem %s3, 16
        %v470 = vld [vmem:[%s469] sm:$0xf]
        %v472 = vsel %vm433, %v461, 0
        %v475 = vsel %vm433, %v462, 0
        %v478 = vsel %vm433, %v463, 0
        %v481 = vsel %vm433, %v464, 0
        %v484 = vsel %vm433, %v465, 0
        %v487 = vsel %vm433, %v466, 0
        %v490 = vsel %vm433, %v467, 0
        %v493 = vsel %vm433, %v468, 0
        %vm495 = vcmask 1043456
        %v497 = vsel %vm495, %v470, 0
        %499 = vmatprep.subr.mxu0 0.0
        %500 = vmatpush1.msra.mxu0 %v497
        %501 = vmatprep.subr.mxu0 0.0
        %502 = vmatpush1.msra.mxu0 0.0
        %503 = vmatprep.subr.mxu0 0.0
        %504 = vmatpush1.msra.mxu0 0.0
        %505 = vmatprep.subr.mxu0 0.0
        %506 = vmatpush1.msra.mxu0 0.0
        %507 = vmatprep.subr.mxu0 0.0
        %508 = vmatpush1.msra.mxu0 0.0
        %509 = vmatprep.subr.mxu0 0.0
        %510 = vmatpush1.msra.mxu0 0.0
        %511 = vmatprep.subr.mxu0 0.0
        %512 = vmatpush1.msra.mxu0 0.0
        %513 = vmatprep.subr.mxu0 0.0
        %514 = vmatpush1.msra.mxu0 0.0
        %515 = vmatprep.subr.mxu0 0.0
        %516 = vmatpush1.msra.mxu0 0.0
        %517 = vmatprep.subr.mxu0 0.0
        %518 = vmatpush1.msra.mxu0 0.0
        %519 = vmatprep.subr.mxu0 0.0
        %520 = vmatpush1.msra.mxu0 0.0
        %521 = vmatprep.subr.mxu0 0.0
        %522 = vmatpush1.msra.mxu0 0.0
        %523 = vmatprep.subr.mxu0 0.0
        %524 = vmatpush1.msra.mxu0 0.0
        %525 = vmatprep.subr.mxu0 0.0
        %526 = vmatpush1.msra.mxu0 0.0
        %527 = vmatprep.subr.mxu0 0.0
        %528 = vmatpush1.msra.mxu0 0.0
        %529 = vmatprep.subr.mxu0 0.0
        %530 = vmatpush1.msra.mxu0 0.0
        %531 = vmatprep.subr.mxu0 0.0
        %532 = vmatpush1.msra.mxu0 0.0
        %533 = vmatprep.subr.mxu0 0.0
        %534 = vmatpush1.msra.mxu0 0.0
        %535 = vmatprep.subr.mxu0 0.0
        %536 = vmatpush1.msra.mxu0 0.0
        %537 = vmatprep.subr.mxu0 0.0
        %538 = vmatpush1.msra.mxu0 0.0
        %539 = vmatprep.subr.mxu0 0.0
        %540 = vmatpush1.msra.mxu0 0.0
        %541 = vmatprep.subr.mxu0 0.0
        %542 = vmatpush1.msra.mxu0 0.0
        %543 = vmatprep.subr.mxu0 0.0
        %544 = vmatpush1.msra.mxu0 0.0
        %545 = vmatprep.subr.mxu0 0.0
        %546 = vmatpush1.msra.mxu0 0.0
        %547 = vmatprep.subr.mxu0 0.0
        %548 = vmatpush1.msra.mxu0 0.0
        %549 = vmatprep.subr.mxu0 0.0
        %550 = vmatpush1.msra.mxu0 0.0
        %551 = vmatprep.subr.mxu0 0.0
        %552 = vmatpush1.msra.mxu0 0.0
        %553 = vmatprep.subr.mxu0 0.0
        %554 = vmatpush1.msra.mxu0 0.0
        %555 = vmatprep.subr.mxu0 0.0
        %556 = vmatpush1.msra.mxu0 0.0
        %557 = vmatprep.subr.mxu0 0.0
        %558 = vmatpush1.msra.mxu0 0.0
        %559 = vmatprep.subr.mxu0 0.0
        %560 = vmatpush1.msra.mxu0 0.0
        %561 = vmatprep.subr.mxu0 0.0
        %562 = vmatpush1.msra.mxu0 0.0
        %563 = vmatprep.mubr.f32.mxu0 0.0
        %564 = vmatmul.mubr.f32.gmra.mrb[0].mxu0 %v472
        %v565 = vpop.f32.mrb[0].mxu0
        %v566 = vadd.f32 0.0, %v565
        %v567 = vpop.f32.mrb[0].mxu0
        %568 = vmatprep.mubr.f32.mxu0 0.0
        %569 = vmatmul.mubr.f32.gmra.mrb[0].mxu0 %v475
        %v570 = vpop.f32.mrb[0].mxu0
        %v571 = vadd.f32 0.0, %v570
        %v572 = vpop.f32.mrb[0].mxu0
        %573 = vmatprep.mubr.f32.mxu0 0.0
        %574 = vmatmul.mubr.f32.gmra.mrb[0].mxu0 %v478
        %v575 = vpop.f32.mrb[0].mxu0
        %v576 = vadd.f32 0.0, %v575
        %v577 = vpop.f32.mrb[0].mxu0
        %578 = vmatprep.mubr.f32.mxu0 0.0
        %579 = vmatmul.mubr.f32.gmra.mrb[0].mxu0 %v481
        %v580 = vpop.f32.mrb[0].mxu0
        %v581 = vadd.f32 0.0, %v580
        %v582 = vpop.f32.mrb[0].mxu0
        %583 = vmatprep.mubr.f32.mxu0 0.0
        %584 = vmatmul.mubr.f32.gmra.mrb[0].mxu0 %v484
        %v585 = vpop.f32.mrb[0].mxu0
        %v586 = vadd.f32 0.0, %v585
        %v587 = vpop.f32.mrb[0].mxu0
        %588 = vmatprep.mubr.f32.mxu0 0.0
        %589 = vmatmul.mubr.f32.gmra.mrb[0].mxu0 %v487
        %v590 = vpop.f32.mrb[0].mxu0
        %v591 = vadd.f32 0.0, %v590
        %v592 = vpop.f32.mrb[0].mxu0
        %593 = vmatprep.mubr.f32.mxu0 0.0
        %594 = vmatmul.mubr.f32.gmra.mrb[0].mxu0 %v490
        %v595 = vpop.f32.mrb[0].mxu0
        %v596 = vadd.f32 0.0, %v595
        %v597 = vpop.f32.mrb[0].mxu0
        %598 = vmatprep.mubr.f32.mxu0 0.0
        %599 = vmatmul.mubr.f32.gmra.mrb[0].mxu0 %v493
        %v600 = vpop.f32.mrb[0].mxu0
        %v601 = vadd.f32 0.0, %v600
        %v602 = vpop.f32.mrb[0].mxu0
        %603 = vdwg.mxu0
        %604 = vst.msk [vmem:[#allocation3] sm:$0xff] %vm433, %v566
        %605 = vst.msk [vmem:[#allocation3 + $0x8] sm:$0xff] %vm433, %v571
        %606 = vst.msk [vmem:[#allocation3 + $0x10] sm:$0xff] %vm433, %v576
        %607 = vst.msk [vmem:[#allocation3 + $0x18] sm:$0xff] %vm433, %v581
        %608 = vst.msk [vmem:[#allocation3 + $0x20] sm:$0xff] %vm433, %v586
        %609 = vst.msk [vmem:[#allocation3 + $0x28] sm:$0xff] %vm433, %v591
        %610 = vst.msk [vmem:[#allocation3 + $0x30] sm:$0xff] %vm433, %v596
        %611 = vst.msk [vmem:[#allocation3 + $0x38] sm:$0xff] %vm433, %v601
        %v612 = vld [vmem:[#allocation3] sm:$0xff]
        %v613 = vld [vmem:[#allocation3 + $0x8] sm:$0xff]
        %v614 = vld [vmem:[#allocation3 + $0x10] sm:$0xff]
        %v615 = vld [vmem:[#allocation3 + $0x18] sm:$0xff]
        %v616 = vld [vmem:[#allocation3 + $0x20] sm:$0xff]
        %v617 = vld [vmem:[#allocation3 + $0x28] sm:$0xff]
        %v618 = vld [vmem:[#allocation3 + $0x30] sm:$0xff]
        %v619 = vld [vmem:[#allocation3 + $0x38] sm:$0xff]
        %v620 = vld [vmem:[%s4] sm:$0x1]
        %v622 = vlaneseq
        %v623 = vshrl.u32 %v622, 7
        %v624 = vsub.s32 0, %v623
        %v625 = vrot.slane %v620, %v624
        %v627 = vadd.f32 %v612, %v625
        %v628 = vadd.f32 %v613, %v625
        %v629 = vadd.f32 %v614, %v625
        %v630 = vadd.f32 %v615, %v625
        %v631 = vadd.f32 %v616, %v625
        %v632 = vadd.f32 %v617, %v625
        %v633 = vadd.f32 %v618, %v625
        %v634 = vadd.f32 %v619, %v625
        %v635 = vmax.f32 %v627, 0.0
        %v636 = vmax.f32 %v628, 0.0
        %v637 = vmax.f32 %v629, 0.0
        %v638 = vmax.f32 %v630, 0.0
        %v639 = vmax.f32 %v631, 0.0
        %v640 = vmax.f32 %v632, 0.0
        %v641 = vmax.f32 %v633, 0.0
        %v642 = vmax.f32 %v634, 0.0
        %v643 = vld [vmem:[%s5] sm:$0xf]
        %v644 = vld [vmem:[%s6] sm:$0x1]
        %v646 = vlaneseq
        %v647 = vshrl.u32 %v646, 7
        %v648 = vsub.s32 0, %v647
        %v649 = vrot.slane %v644, %v648
        %v652 = vsel %vm433, %v635, 0
        %v655 = vsel %vm433, %v636, 0
        %v658 = vsel %vm433, %v637, 0
        %v661 = vsel %vm433, %v638, 0
        %v664 = vsel %vm433, %v639, 0
        %v667 = vsel %vm433, %v640, 0
        %v670 = vsel %vm433, %v641, 0
        %v673 = vsel %vm433, %v642, 0
        %v676 = vsel %vm495, %v643, 0
        %678 = vmatprep.subr.mxu0 0.0
        %679 = vmatpush1.msra.mxu0 %v676
        %680 = vmatprep.subr.mxu0 0.0
        %681 = vmatpush1.msra.mxu0 0.0
        %682 = vmatprep.subr.mxu0 0.0
        %683 = vmatpush1.msra.mxu0 0.0
        %684 = vmatprep.subr.mxu0 0.0
        %685 = vmatpush1.msra.mxu0 0.0
        %686 = vmatprep.subr.mxu0 0.0
        %687 = vmatpush1.msra.mxu0 0.0
        %688 = vmatprep.subr.mxu0 0.0
        %689 = vmatpush1.msra.mxu0 0.0
        %690 = vmatprep.subr.mxu0 0.0
        %691 = vmatpush1.msra.mxu0 0.0
        %692 = vmatprep.subr.mxu0 0.0
        %693 = vmatpush1.msra.mxu0 0.0
        %694 = vmatprep.subr.mxu0 0.0
        %695 = vmatpush1.msra.mxu0 0.0
        %696 = vmatprep.subr.mxu0 0.0
        %697 = vmatpush1.msra.mxu0 0.0
        %698 = vmatprep.subr.mxu0 0.0
        %699 = vmatpush1.msra.mxu0 0.0
        %700 = vmatprep.subr.mxu0 0.0
        %701 = vmatpush1.msra.mxu0 0.0
        %702 = vmatprep.subr.mxu0 0.0
        %703 = vmatpush1.msra.mxu0 0.0
        %704 = vmatprep.subr.mxu0 0.0
        %705 = vmatpush1.msra.mxu0 0.0
        %706 = vmatprep.subr.mxu0 0.0
        %707 = vmatpush1.msra.mxu0 0.0
        %708 = vmatprep.subr.mxu0 0.0
        %709 = vmatpush1.msra.mxu0 0.0
        %710 = vmatprep.subr.mxu0 0.0
        %711 = vmatpush1.msra.mxu0 0.0
        %712 = vmatprep.subr.mxu0 0.0
        %713 = vmatpush1.msra.mxu0 0.0
        %714 = vmatprep.subr.mxu0 0.0
        %715 = vmatpush1.msra.mxu0 0.0
        %716 = vmatprep.subr.mxu0 0.0
        %717 = vmatpush1.msra.mxu0 0.0
        %718 = vmatprep.subr.mxu0 0.0
        %719 = vmatpush1.msra.mxu0 0.0
        %720 = vmatprep.subr.mxu0 0.0
        %721 = vmatpush1.msra.mxu0 0.0
        %722 = vmatprep.subr.mxu0 0.0
        %723 = vmatpush1.msra.mxu0 0.0
        %724 = vmatprep.subr.mxu0 0.0
        %725 = vmatpush1.msra.mxu0 0.0
        %726 = vmatprep.subr.mxu0 0.0
        %727 = vmatpush1.msra.mxu0 0.0
        %728 = vmatprep.subr.mxu0 0.0
        %729 = vmatpush1.msra.mxu0 0.0
        %730 = vmatprep.subr.mxu0 0.0
        %731 = vmatpush1.msra.mxu0 0.0
        %732 = vmatprep.subr.mxu0 0.0
        %733 = vmatpush1.msra.mxu0 0.0
        %734 = vmatprep.subr.mxu0 0.0
        %735 = vmatpush1.msra.mxu0 0.0
        %736 = vmatprep.subr.mxu0 0.0
        %737 = vmatpush1.msra.mxu0 0.0
        %738 = vmatprep.subr.mxu0 0.0
        %739 = vmatpush1.msra.mxu0 0.0
        %740 = vmatprep.subr.mxu0 0.0
        %741 = vmatpush1.msra.mxu0 0.0
        %742 = vmatprep.mubr.f32.mxu0 0.0
        %743 = vmatmul.mubr.f32.gmra.mrb[0].mxu0 %v652
        %v744 = vpop.f32.mrb[0].mxu0
        %v745 = vadd.f32 %v649, %v744
        %v746 = vpop.f32.mrb[0].mxu0
        %747 = vmatprep.mubr.f32.mxu0 0.0
        %748 = vmatmul.mubr.f32.gmra.mrb[0].mxu0 %v655
        %v749 = vpop.f32.mrb[0].mxu0
        %v750 = vadd.f32 %v649, %v749
        %v751 = vpop.f32.mrb[0].mxu0
        %752 = vmatprep.mubr.f32.mxu0 0.0
        %753 = vmatmul.mubr.f32.gmra.mrb[0].mxu0 %v658
        %v754 = vpop.f32.mrb[0].mxu0
        %v755 = vadd.f32 %v649, %v754
        %v756 = vpop.f32.mrb[0].mxu0
        %757 = vmatprep.mubr.f32.mxu0 0.0
        %758 = vmatmul.mubr.f32.gmra.mrb[0].mxu0 %v661
        %v759 = vpop.f32.mrb[0].mxu0
        %v760 = vadd.f32 %v649, %v759
        %v761 = vpop.f32.mrb[0].mxu0
        %762 = vmatprep.mubr.f32.mxu0 0.0
        %763 = vmatmul.mubr.f32.gmra.mrb[0].mxu0 %v664
        %v764 = vpop.f32.mrb[0].mxu0
        %v765 = vadd.f32 %v649, %v764
        %v766 = vpop.f32.mrb[0].mxu0
        %767 = vmatprep.mubr.f32.mxu0 0.0
        %768 = vmatmul.mubr.f32.gmra.mrb[0].mxu0 %v667
        %v769 = vpop.f32.mrb[0].mxu0
        %v770 = vadd.f32 %v649, %v769
        %v771 = vpop.f32.mrb[0].mxu0
        %772 = vmatprep.mubr.f32.mxu0 0.0
        %773 = vmatmul.mubr.f32.gmra.mrb[0].mxu0 %v670
        %v774 = vpop.f32.mrb[0].mxu0
        %v775 = vadd.f32 %v649, %v774
        %v776 = vpop.f32.mrb[0].mxu0
        %777 = vmatprep.mubr.f32.mxu0 0.0
        %778 = vmatmul.mubr.f32.gmra.mrb[0].mxu0 %v673
        %v779 = vpop.f32.mrb[0].mxu0
        %v780 = vadd.f32 %v649, %v779
        %v781 = vpop.f32.mrb[0].mxu0
        %782 = vdwg.mxu0
        %v783 = vmax.f32 %v745, 0.0
        %v784 = vmax.f32 %v750, 0.0
        %v785 = vmax.f32 %v755, 0.0
        %v786 = vmax.f32 %v760, 0.0
        %v787 = vmax.f32 %v765, 0.0
        %v788 = vmax.f32 %v770, 0.0
        %v789 = vmax.f32 %v775, 0.0
        %v790 = vmax.f32 %v780, 0.0
        %vm791 = vcmask 64512
        %792 = vst.msk [vmem:[%s271] sm:$0xff] %vm791, %v783
        %793 = vst.msk [vmem:[%s271 + $0x8] sm:$0xff] %vm791, %v784
        %794 = vst.msk [vmem:[%s271 + $0x10] sm:$0xff] %vm791, %v785
        %795 = vst.msk [vmem:[%s271 + $0x18] sm:$0xff] %vm791, %v786
        %796 = vst.msk [vmem:[%s271 + $0x20] sm:$0xff] %vm791, %v787
        %797 = vst.msk [vmem:[%s271 + $0x28] sm:$0xff] %vm791, %v788
        %798 = vst.msk [vmem:[%s271 + $0x30] sm:$0xff] %vm791, %v789
        %799 = vst.msk [vmem:[%s271 + $0x38] sm:$0xff] %vm791, %v790
        %v800 = vld [vmem:[#allocation2 + $0x1] sm:$0xff]
        %v801 = vld [vmem:[#allocation2 + $0x11] sm:$0xff]
        %v802 = vld [vmem:[#allocation2 + $0x21] sm:$0xff]
        %v803 = vld [vmem:[#allocation2 + $0x31] sm:$0xff]
        %v804 = vld [vmem:[#allocation2 + $0x41] sm:$0xff]
        %v805 = vld [vmem:[#allocation2 + $0x51] sm:$0xff]
        %v806 = vld [vmem:[#allocation2 + $0x61] sm:$0xff]
        %v807 = vld [vmem:[#allocation2 + $0x71] sm:$0xff]
        %s808 = scalar_lea.vmem %s3, 12
        %v809 = vld [vmem:[%s808] sm:$0xf]
        %v811 = vsel %vm433, %v800, 0
        %v814 = vsel %vm433, %v801, 0
        %v817 = vsel %vm433, %v802, 0
        %v820 = vsel %vm433, %v803, 0
        %v823 = vsel %vm433, %v804, 0
        %v826 = vsel %vm433, %v805, 0
        %v829 = vsel %vm433, %v806, 0
        %v832 = vsel %vm433, %v807, 0
        %v835 = vsel %vm495, %v809, 0
        %837 = vmatprep.subr.mxu0 0.0
        %838 = vmatpush1.msra.mxu0 %v835
        %839 = vmatprep.subr.mxu0 0.0
        %840 = vmatpush1.msra.mxu0 0.0
        %841 = vmatprep.subr.mxu0 0.0
        %842 = vmatpush1.msra.mxu0 0.0
        %843 = vmatprep.subr.mxu0 0.0
        %844 = vmatpush1.msra.mxu0 0.0
        %845 = vmatprep.subr.mxu0 0.0
        %846 = vmatpush1.msra.mxu0 0.0
        %847 = vmatprep.subr.mxu0 0.0
        %848 = vmatpush1.msra.mxu0 0.0
        %849 = vmatprep.subr.mxu0 0.0
        %850 = vmatpush1.msra.mxu0 0.0
        %851 = vmatprep.subr.mxu0 0.0
        %852 = vmatpush1.msra.mxu0 0.0
        %853 = vmatprep.subr.mxu0 0.0
        %854 = vmatpush1.msra.mxu0 0.0
        %855 = vmatprep.subr.mxu0 0.0
        %856 = vmatpush1.msra.mxu0 0.0
        %857 = vmatprep.subr.mxu0 0.0
        %858 = vmatpush1.msra.mxu0 0.0
        %859 = vmatprep.subr.mxu0 0.0
        %860 = vmatpush1.msra.mxu0 0.0
        %861 = vmatprep.subr.mxu0 0.0
        %862 = vmatpush1.msra.mxu0 0.0
        %863 = vmatprep.subr.mxu0 0.0
        %864 = vmatpush1.msra.mxu0 0.0
        %865 = vmatprep.subr.mxu0 0.0
        %866 = vmatpush1.msra.mxu0 0.0
        %867 = vmatprep.subr.mxu0 0.0
        %868 = vmatpush1.msra.mxu0 0.0
        %869 = vmatprep.subr.mxu0 0.0
        %870 = vmatpush1.msra.mxu0 0.0
        %871 = vmatprep.subr.mxu0 0.0
        %872 = vmatpush1.msra.mxu0 0.0
        %873 = vmatprep.subr.mxu0 0.0
        %874 = vmatpush1.msra.mxu0 0.0
        %875 = vmatprep.subr.mxu0 0.0
        %876 = vmatpush1.msra.mxu0 0.0
        %877 = vmatprep.subr.mxu0 0.0
        %878 = vmatpush1.msra.mxu0 0.0
        %879 = vmatprep.subr.mxu0 0.0
        %880 = vmatpush1.msra.mxu0 0.0
        %881 = vmatprep.subr.mxu0 0.0
        %882 = vmatpush1.msra.mxu0 0.0
        %883 = vmatprep.subr.mxu0 0.0
        %884 = vmatpush1.msra.mxu0 0.0
        %885 = vmatprep.subr.mxu0 0.0
        %886 = vmatpush1.msra.mxu0 0.0
        %887 = vmatprep.subr.mxu0 0.0
        %888 = vmatpush1.msra.mxu0 0.0
        %889 = vmatprep.subr.mxu0 0.0
        %890 = vmatpush1.msra.mxu0 0.0
        %891 = vmatprep.subr.mxu0 0.0
        %892 = vmatpush1.msra.mxu0 0.0
        %893 = vmatprep.subr.mxu0 0.0
        %894 = vmatpush1.msra.mxu0 0.0
        %895 = vmatprep.subr.mxu0 0.0
        %896 = vmatpush1.msra.mxu0 0.0
        %897 = vmatprep.subr.mxu0 0.0
        %898 = vmatpush1.msra.mxu0 0.0
        %899 = vmatprep.subr.mxu0 0.0
        %900 = vmatpush1.msra.mxu0 0.0
        %901 = vmatprep.mubr.f32.mxu0 0.0
        %902 = vmatmul.mubr.f32.gmra.mrb[0].mxu0 %v811
        %v903 = vpop.f32.mrb[0].mxu0
        %v904 = vadd.f32 0.0, %v903
        %v905 = vpop.f32.mrb[0].mxu0
        %906 = vmatprep.mubr.f32.mxu0 0.0
        %907 = vmatmul.mubr.f32.gmra.mrb[0].mxu0 %v814
        %v908 = vpop.f32.mrb[0].mxu0
        %v909 = vadd.f32 0.0, %v908
        %v910 = vpop.f32.mrb[0].mxu0
        %911 = vmatprep.mubr.f32.mxu0 0.0
        %912 = vmatmul.mubr.f32.gmra.mrb[0].mxu0 %v817
        %v913 = vpop.f32.mrb[0].mxu0
        %v914 = vadd.f32 0.0, %v913
        %v915 = vpop.f32.mrb[0].mxu0
        %916 = vmatprep.mubr.f32.mxu0 0.0
        %917 = vmatmul.mubr.f32.gmra.mrb[0].mxu0 %v820
        %v918 = vpop.f32.mrb[0].mxu0
        %v919 = vadd.f32 0.0, %v918
        %v920 = vpop.f32.mrb[0].mxu0
        %921 = vmatprep.mubr.f32.mxu0 0.0
        %922 = vmatmul.mubr.f32.gmra.mrb[0].mxu0 %v823
        %v923 = vpop.f32.mrb[0].mxu0
        %v924 = vadd.f32 0.0, %v923
        %v925 = vpop.f32.mrb[0].mxu0
        %926 = vmatprep.mubr.f32.mxu0 0.0
        %927 = vmatmul.mubr.f32.gmra.mrb[0].mxu0 %v826
        %v928 = vpop.f32.mrb[0].mxu0
        %v929 = vadd.f32 0.0, %v928
        %v930 = vpop.f32.mrb[0].mxu0
        %931 = vmatprep.mubr.f32.mxu0 0.0
        %932 = vmatmul.mubr.f32.gmra.mrb[0].mxu0 %v829
        %v933 = vpop.f32.mrb[0].mxu0
        %v934 = vadd.f32 0.0, %v933
        %v935 = vpop.f32.mrb[0].mxu0
        %936 = vmatprep.mubr.f32.mxu0 0.0
        %937 = vmatmul.mubr.f32.gmra.mrb[0].mxu0 %v832
        %v938 = vpop.f32.mrb[0].mxu0
        %v939 = vadd.f32 0.0, %v938
        %v940 = vpop.f32.mrb[0].mxu0
        %941 = vdwg.mxu0
        %942 = vst.msk [vmem:[#allocation3] sm:$0xff] %vm433, %v904
        %943 = vst.msk [vmem:[#allocation3 + $0x8] sm:$0xff] %vm433, %v909
        %944 = vst.msk [vmem:[#allocation3 + $0x10] sm:$0xff] %vm433, %v914
        %945 = vst.msk [vmem:[#allocation3 + $0x18] sm:$0xff] %vm433, %v919
        %946 = vst.msk [vmem:[#allocation3 + $0x20] sm:$0xff] %vm433, %v924
        %947 = vst.msk [vmem:[#allocation3 + $0x28] sm:$0xff] %vm433, %v929
        %948 = vst.msk [vmem:[#allocation3 + $0x30] sm:$0xff] %vm433, %v934
        %949 = vst.msk [vmem:[#allocation3 + $0x38] sm:$0xff] %vm433, %v939
        %v950 = vld [vmem:[#allocation2] sm:$0xff]
        %v951 = vld [vmem:[#allocation2 + $0x10] sm:$0xff]
        %v952 = vld [vmem:[#allocation2 + $0x20] sm:$0xff]
        %v953 = vld [vmem:[#allocation2 + $0x30] sm:$0xff]
        %v954 = vld [vmem:[#allocation2 + $0x40] sm:$0xff]
        %v955 = vld [vmem:[#allocation2 + $0x50] sm:$0xff]
        %v956 = vld [vmem:[#allocation2 + $0x60] sm:$0xff]
        %v957 = vld [vmem:[#allocation2 + $0x70] sm:$0xff]
        %s958 = scalar_lea.vmem %s3, 20
        %v959 = vld [vmem:[%s958] sm:$0xf]
        %v961 = vsel %vm433, %v950, 0
        %v964 = vsel %vm433, %v951, 0
        %v967 = vsel %vm433, %v952, 0
        %v970 = vsel %vm433, %v953, 0
        %v973 = vsel %vm433, %v954, 0
        %v976 = vsel %vm433, %v955, 0
        %v979 = vsel %vm433, %v956, 0
        %v982 = vsel %vm433, %v957, 0
        %v985 = vsel %vm495, %v959, 0
        %987 = vmatprep.subr.mxu0 0.0
        %988 = vmatpush1.msra.mxu0 %v985
        %989 = vmatprep.subr.mxu0 0.0
        %990 = vmatpush1.msra.mxu0 0.0
        %991 = vmatprep.subr.mxu0 0.0
        %992 = vmatpush1.msra.mxu0 0.0
        %993 = vmatprep.subr.mxu0 0.0
        %994 = vmatpush1.msra.mxu0 0.0
        %995 = vmatprep.subr.mxu0 0.0
        %996 = vmatpush1.msra.mxu0 0.0
        %997 = vmatprep.subr.mxu0 0.0
        %998 = vmatpush1.msra.mxu0 0.0
        %999 = vmatprep.subr.mxu0 0.0
        %1000 = vmatpush1.msra.mxu0 0.0
        %1001 = vmatprep.subr.mxu0 0.0
        %1002 = vmatpush1.msra.mxu0 0.0
        %1003 = vmatprep.subr.mxu0 0.0
        %1004 = vmatpush1.msra.mxu0 0.0
        %1005 = vmatprep.subr.mxu0 0.0
        %1006 = vmatpush1.msra.mxu0 0.0
        %1007 = vmatprep.subr.mxu0 0.0
        %1008 = vmatpush1.msra.mxu0 0.0
        %1009 = vmatprep.subr.mxu0 0.0
        %1010 = vmatpush1.msra.mxu0 0.0
        %1011 = vmatprep.subr.mxu0 0.0
        %1012 = vmatpush1.msra.mxu0 0.0
        %1013 = vmatprep.subr.mxu0 0.0
        %1014 = vmatpush1.msra.mxu0 0.0
        %1015 = vmatprep.subr.mxu0 0.0
        %1016 = vmatpush1.msra.mxu0 0.0
        %1017 = vmatprep.subr.mxu0 0.0
        %1018 = vmatpush1.msra.mxu0 0.0
        %1019 = vmatprep.subr.mxu0 0.0
        %1020 = vmatpush1.msra.mxu0 0.0
        %1021 = vmatprep.subr.mxu0 0.0
        %1022 = vmatpush1.msra.mxu0 0.0
        %1023 = vmatprep.subr.mxu0 0.0
        %1024 = vmatpush1.msra.mxu0 0.0
        %1025 = vmatprep.subr.mxu0 0.0
        %1026 = vmatpush1.msra.mxu0 0.0
        %1027 = vmatprep.subr.mxu0 0.0
        %1028 = vmatpush1.msra.mxu0 0.0
        %1029 = vmatprep.subr.mxu0 0.0
        %1030 = vmatpush1.msra.mxu0 0.0
        %1031 = vmatprep.subr.mxu0 0.0
        %1032 = vmatpush1.msra.mxu0 0.0
        %1033 = vmatprep.subr.mxu0 0.0
        %1034 = vmatpush1.msra.mxu0 0.0
        %1035 = vmatprep.subr.mxu0 0.0
        %1036 = vmatpush1.msra.mxu0 0.0
        %1037 = vmatprep.subr.mxu0 0.0
        %1038 = vmatpush1.msra.mxu0 0.0
        %1039 = vmatprep.subr.mxu0 0.0
        %1040 = vmatpush1.msra.mxu0 0.0
        %1041 = vmatprep.subr.mxu0 0.0
        %1042 = vmatpush1.msra.mxu0 0.0
        %1043 = vmatprep.subr.mxu0 0.0
        %1044 = vmatpush1.msra.mxu0 0.0
        %1045 = vmatprep.subr.mxu0 0.0
        %1046 = vmatpush1.msra.mxu0 0.0
        %1047 = vmatprep.subr.mxu0 0.0
        %1048 = vmatpush1.msra.mxu0 0.0
        %1049 = vmatprep.subr.mxu0 0.0
        %1050 = vmatpush1.msra.mxu0 0.0
        %1051 = vmatprep.mubr.f32.mxu0 0.0
        %1052 = vmatmul.mubr.f32.gmra.mrb[0].mxu0 %v961
        %v1053 = vpop.f32.mrb[0].mxu0
        %v1054 = vadd.f32 0.0, %v1053
        %v1055 = vpop.f32.mrb[0].mxu0
        %1056 = vmatprep.mubr.f32.mxu0 0.0
        %1057 = vmatmul.mubr.f32.gmra.mrb[0].mxu0 %v964
        %v1058 = vpop.f32.mrb[0].mxu0
        %v1059 = vadd.f32 0.0, %v1058
        %v1060 = vpop.f32.mrb[0].mxu0
        %1061 = vmatprep.mubr.f32.mxu0 0.0
        %1062 = vmatmul.mubr.f32.gmra.mrb[0].mxu0 %v967
        %v1063 = vpop.f32.mrb[0].mxu0
        %v1064 = vadd.f32 0.0, %v1063
        %v1065 = vpop.f32.mrb[0].mxu0
        %1066 = vmatprep.mubr.f32.mxu0 0.0
        %1067 = vmatmul.mubr.f32.gmra.mrb[0].mxu0 %v970
        %v1068 = vpop.f32.mrb[0].mxu0
        %v1069 = vadd.f32 0.0, %v1068
        %v1070 = vpop.f32.mrb[0].mxu0
        %1071 = vmatprep.mubr.f32.mxu0 0.0
        %1072 = vmatmul.mubr.f32.gmra.mrb[0].mxu0 %v973
        %v1073 = vpop.f32.mrb[0].mxu0
        %v1074 = vadd.f32 0.0, %v1073
        %v1075 = vpop.f32.mrb[0].mxu0
        %1076 = vmatprep.mubr.f32.mxu0 0.0
        %1077 = vmatmul.mubr.f32.gmra.mrb[0].mxu0 %v976
        %v1078 = vpop.f32.mrb[0].mxu0
        %v1079 = vadd.f32 0.0, %v1078
        %v1080 = vpop.f32.mrb[0].mxu0
        %1081 = vmatprep.mubr.f32.mxu0 0.0
        %1082 = vmatmul.mubr.f32.gmra.mrb[0].mxu0 %v979
        %v1083 = vpop.f32.mrb[0].mxu0
        %v1084 = vadd.f32 0.0, %v1083
        %v1085 = vpop.f32.mrb[0].mxu0
        %1086 = vmatprep.mubr.f32.mxu0 0.0
        %1087 = vmatmul.mubr.f32.gmra.mrb[0].mxu0 %v982
        %v1088 = vpop.f32.mrb[0].mxu0
        %v1089 = vadd.f32 0.0, %v1088
        %v1090 = vpop.f32.mrb[0].mxu0
        %1091 = vdwg.mxu0
        %v1092 = vld [vmem:[#allocation3] sm:$0xff]
        %v1093 = vld [vmem:[#allocation3 + $0x8] sm:$0xff]
        %v1094 = vld [vmem:[#allocation3 + $0x10] sm:$0xff]
        %v1095 = vld [vmem:[#allocation3 + $0x18] sm:$0xff]
        %v1096 = vld [vmem:[#allocation3 + $0x20] sm:$0xff]
        %v1097 = vld [vmem:[#allocation3 + $0x28] sm:$0xff]
        %v1098 = vld [vmem:[#allocation3 + $0x30] sm:$0xff]
        %v1099 = vld [vmem:[#allocation3 + $0x38] sm:$0xff]
        %v1100 = vadd.f32 %v1092, %v1054
        %v1101 = vadd.f32 %v1093, %v1059
        %v1102 = vadd.f32 %v1094, %v1064
        %v1103 = vadd.f32 %v1095, %v1069
        %v1104 = vadd.f32 %v1096, %v1074
        %v1105 = vadd.f32 %v1097, %v1079
        %v1106 = vadd.f32 %v1098, %v1084
        %v1107 = vadd.f32 %v1099, %v1089
        %1108 = vst.msk [vmem:[#allocation3] sm:$0xff] %vm433, %v1100
        %1109 = vst.msk [vmem:[#allocation3 + $0x8] sm:$0xff] %vm433, %v1101
        %1110 = vst.msk [vmem:[#allocation3 + $0x10] sm:$0xff] %vm433, %v1102
        %1111 = vst.msk [vmem:[#allocation3 + $0x18] sm:$0xff] %vm433, %v1103
        %1112 = vst.msk [vmem:[#allocation3 + $0x20] sm:$0xff] %vm433, %v1104
        %1113 = vst.msk [vmem:[#allocation3 + $0x28] sm:$0xff] %vm433, %v1105
        %1114 = vst.msk [vmem:[#allocation3 + $0x30] sm:$0xff] %vm433, %v1106
        %1115 = vst.msk [vmem:[#allocation3 + $0x38] sm:$0xff] %vm433, %v1107
        %v1116 = vld [vmem:[#allocation3] sm:$0xff]
        %v1117 = vld [vmem:[#allocation3 + $0x8] sm:$0xff]
        %v1118 = vld [vmem:[#allocation3 + $0x10] sm:$0xff]
        %v1119 = vld [vmem:[#allocation3 + $0x18] sm:$0xff]
        %v1120 = vld [vmem:[#allocation3 + $0x20] sm:$0xff]
        %v1121 = vld [vmem:[#allocation3 + $0x28] sm:$0xff]
        %v1122 = vld [vmem:[#allocation3 + $0x30] sm:$0xff]
        %v1123 = vld [vmem:[#allocation3 + $0x38] sm:$0xff]
        %v1124 = vld [vmem:[%s4] sm:$0x1]
        %v1126 = vlaneseq
        %v1127 = vshrl.u32 %v1126, 7
        %v1128 = vsub.s32 0, %v1127
        %v1129 = vrot.slane %v1124, %v1128
        %v1131 = vadd.f32 %v1116, %v1129
        %v1132 = vadd.f32 %v1117, %v1129
        %v1133 = vadd.f32 %v1118, %v1129
        %v1134 = vadd.f32 %v1119, %v1129
        %v1135 = vadd.f32 %v1120, %v1129
        %v1136 = vadd.f32 %v1121, %v1129
        %v1137 = vadd.f32 %v1122, %v1129
        %v1138 = vadd.f32 %v1123, %v1129
        %v1139 = vmax.f32 %v1131, 0.0
        %v1140 = vmax.f32 %v1132, 0.0
        %v1141 = vmax.f32 %v1133, 0.0
        %v1142 = vmax.f32 %v1134, 0.0
        %v1143 = vmax.f32 %v1135, 0.0
        %v1144 = vmax.f32 %v1136, 0.0
        %v1145 = vmax.f32 %v1137, 0.0
        %v1146 = vmax.f32 %v1138, 0.0
        %v1147 = vld [vmem:[%s5] sm:$0xf]
        %v1148 = vld [vmem:[%s6] sm:$0x1]
        %v1150 = vlaneseq
        %v1151 = vshrl.u32 %v1150, 7
        %v1152 = vsub.s32 0, %v1151
        %v1153 = vrot.slane %v1148, %v1152
        %v1156 = vsel %vm433, %v1139, 0
        %v1159 = vsel %vm433, %v1140, 0
        %v1162 = vsel %vm433, %v1141, 0
        %v1165 = vsel %vm433, %v1142, 0
        %v1168 = vsel %vm433, %v1143, 0
        %v1171 = vsel %vm433, %v1144, 0
        %v1174 = vsel %vm433, %v1145, 0
        %v1177 = vsel %vm433, %v1146, 0
        %v1180 = vsel %vm495, %v1147, 0
        %1182 = vmatprep.subr.mxu0 0.0
        %1183 = vmatpush1.msra.mxu0 %v1180
        %1184 = vmatprep.subr.mxu0 0.0
        %1185 = vmatpush1.msra.mxu0 0.0
        %1186 = vmatprep.subr.mxu0 0.0
        %1187 = vmatpush1.msra.mxu0 0.0
        %1188 = vmatprep.subr.mxu0 0.0
        %1189 = vmatpush1.msra.mxu0 0.0
        %1190 = vmatprep.subr.mxu0 0.0
        %1191 = vmatpush1.msra.mxu0 0.0
        %1192 = vmatprep.subr.mxu0 0.0
        %1193 = vmatpush1.msra.mxu0 0.0
        %1194 = vmatprep.subr.mxu0 0.0
        %1195 = vmatpush1.msra.mxu0 0.0
        %1196 = vmatprep.subr.mxu0 0.0
        %1197 = vmatpush1.msra.mxu0 0.0
        %1198 = vmatprep.subr.mxu0 0.0
        %1199 = vmatpush1.msra.mxu0 0.0
        %1200 = vmatprep.subr.mxu0 0.0
        %1201 = vmatpush1.msra.mxu0 0.0
        %1202 = vmatprep.subr.mxu0 0.0
        %1203 = vmatpush1.msra.mxu0 0.0
        %1204 = vmatprep.subr.mxu0 0.0
        %1205 = vmatpush1.msra.mxu0 0.0
        %1206 = vmatprep.subr.mxu0 0.0
        %1207 = vmatpush1.msra.mxu0 0.0
        %1208 = vmatprep.subr.mxu0 0.0
        %1209 = vmatpush1.msra.mxu0 0.0
        %1210 = vmatprep.subr.mxu0 0.0
        %1211 = vmatpush1.msra.mxu0 0.0
        %1212 = vmatprep.subr.mxu0 0.0
        %1213 = vmatpush1.msra.mxu0 0.0
        %1214 = vmatprep.subr.mxu0 0.0
        %1215 = vmatpush1.msra.mxu0 0.0
        %1216 = vmatprep.subr.mxu0 0.0
        %1217 = vmatpush1.msra.mxu0 0.0
        %1218 = vmatprep.subr.mxu0 0.0
        %1219 = vmatpush1.msra.mxu0 0.0
        %1220 = vmatprep.subr.mxu0 0.0
        %1221 = vmatpush1.msra.mxu0 0.0
        %1222 = vmatprep.subr.mxu0 0.0
        %1223 = vmatpush1.msra.mxu0 0.0
        %1224 = vmatprep.subr.mxu0 0.0
        %1225 = vmatpush1.msra.mxu0 0.0
        %1226 = vmatprep.subr.mxu0 0.0
        %1227 = vmatpush1.msra.mxu0 0.0
        %1228 = vmatprep.subr.mxu0 0.0
        %1229 = vmatpush1.msra.mxu0 0.0
        %1230 = vmatprep.subr.mxu0 0.0
        %1231 = vmatpush1.msra.mxu0 0.0
        %1232 = vmatprep.subr.mxu0 0.0
        %1233 = vmatpush1.msra.mxu0 0.0
        %1234 = vmatprep.subr.mxu0 0.0
        %1235 = vmatpush1.msra.mxu0 0.0
        %1236 = vmatprep.subr.mxu0 0.0
        %1237 = vmatpush1.msra.mxu0 0.0
        %1238 = vmatprep.subr.mxu0 0.0
        %1239 = vmatpush1.msra.mxu0 0.0
        %1240 = vmatprep.subr.mxu0 0.0
        %1241 = vmatpush1.msra.mxu0 0.0
        %1242 = vmatprep.subr.mxu0 0.0
        %1243 = vmatpush1.msra.mxu0 0.0
        %1244 = vmatprep.subr.mxu0 0.0
        %1245 = vmatpush1.msra.mxu0 0.0
        %1246 = vmatprep.mubr.f32.mxu0 0.0
        %1247 = vmatmul.mubr.f32.gmra.mrb[0].mxu0 %v1156
        %v1248 = vpop.f32.mrb[0].mxu0
        %v1249 = vadd.f32 %v1153, %v1248
        %v1250 = vpop.f32.mrb[0].mxu0
        %1251 = vmatprep.mubr.f32.mxu0 0.0
        %1252 = vmatmul.mubr.f32.gmra.mrb[0].mxu0 %v1159
        %v1253 = vpop.f32.mrb[0].mxu0
        %v1254 = vadd.f32 %v1153, %v1253
        %v1255 = vpop.f32.mrb[0].mxu0
        %1256 = vmatprep.mubr.f32.mxu0 0.0
        %1257 = vmatmul.mubr.f32.gmra.mrb[0].mxu0 %v1162
        %v1258 = vpop.f32.mrb[0].mxu0
        %v1259 = vadd.f32 %v1153, %v1258
        %v1260 = vpop.f32.mrb[0].mxu0
        %1261 = vmatprep.mubr.f32.mxu0 0.0
        %1262 = vmatmul.mubr.f32.gmra.mrb[0].mxu0 %v1165
        %v1263 = vpop.f32.mrb[0].mxu0
        %v1264 = vadd.f32 %v1153, %v1263
        %v1265 = vpop.f32.mrb[0].mxu0
        %1266 = vmatprep.mubr.f32.mxu0 0.0
        %1267 = vmatmul.mubr.f32.gmra.mrb[0].mxu0 %v1168
        %v1268 = vpop.f32.mrb[0].mxu0
        %v1269 = vadd.f32 %v1153, %v1268
        %v1270 = vpop.f32.mrb[0].mxu0
        %1271 = vmatprep.mubr.f32.mxu0 0.0
        %1272 = vmatmul.mubr.f32.gmra.mrb[0].mxu0 %v1171
        %v1273 = vpop.f32.mrb[0].mxu0
        %v1274 = vadd.f32 %v1153, %v1273
        %v1275 = vpop.f32.mrb[0].mxu0
        %1276 = vmatprep.mubr.f32.mxu0 0.0
        %1277 = vmatmul.mubr.f32.gmra.mrb[0].mxu0 %v1174
        %v1278 = vpop.f32.mrb[0].mxu0
        %v1279 = vadd.f32 %v1153, %v1278
        %v1280 = vpop.f32.mrb[0].mxu0
        %1281 = vmatprep.mubr.f32.mxu0 0.0
        %1282 = vmatmul.mubr.f32.gmra.mrb[0].mxu0 %v1177
        %v1283 = vpop.f32.mrb[0].mxu0
        %v1284 = vadd.f32 %v1153, %v1283
        %v1285 = vpop.f32.mrb[0].mxu0
        %1286 = vdwg.mxu0
        %v1287 = vmax.f32 %v1249, 0.0
        %v1288 = vmax.f32 %v1254, 0.0
        %v1289 = vmax.f32 %v1259, 0.0
        %v1290 = vmax.f32 %v1264, 0.0
        %v1291 = vmax.f32 %v1269, 0.0
        %v1292 = vmax.f32 %v1274, 0.0
        %v1293 = vmax.f32 %v1279, 0.0
        %v1294 = vmax.f32 %v1284, 0.0
        %s1295 = scalar_lea.vmem %s271, 64 [#allocation4]
        %1296 = vst.msk [vmem:[%s1295] sm:$0xff] %vm791, %v1287
        %1297 = vst.msk [vmem:[%s1295 + $0x8] sm:$0xff] %vm791, %v1288
        %1298 = vst.msk [vmem:[%s1295 + $0x10] sm:$0xff] %vm791, %v1289
        %1299 = vst.msk [vmem:[%s1295 + $0x18] sm:$0xff] %vm791, %v1290
        %1300 = vst.msk [vmem:[%s1295 + $0x20] sm:$0xff] %vm791, %v1291
        %1301 = vst.msk [vmem:[%s1295 + $0x28] sm:$0xff] %vm791, %v1292
        %1302 = vst.msk [vmem:[%s1295 + $0x30] sm:$0xff] %vm791, %v1293
        %1303 = vst.msk [vmem:[%s1295 + $0x38] sm:$0xff] %vm791, %v1294
        %s1304 = scalar_lea.vmem [#allocation2], 16
        %v1305 = vld [vmem:[%s1304] sm:$0xff]
        %v1306 = vld [vmem:[%s1304 + $0x10] sm:$0xff]
        %v1307 = vld [vmem:[%s1304 + $0x20] sm:$0xff]
        %v1308 = vld [vmem:[%s1304 + $0x30] sm:$0xff]
        %v1309 = vld [vmem:[%s1304 + $0x40] sm:$0xff]
        %v1310 = vld [vmem:[%s1304 + $0x50] sm:$0xff]
        %v1311 = vld [vmem:[%s1304 + $0x60] sm:$0xff]
        %v1312 = vld [vmem:[%s1304 + $0x70] sm:$0xff]
        %s1313 = scalar_lea.vmem %s3, 4
        %v1314 = vld [vmem:[%s1313] sm:$0xf]
        %v1316 = vsel %vm433, %v1305, 0
        %v1319 = vsel %vm433, %v1306, 0
        %v1322 = vsel %vm433, %v1307, 0
        %v1325 = vsel %vm433, %v1308, 0
        %v1328 = vsel %vm433, %v1309, 0
        %v1331 = vsel %vm433, %v1310, 0
        %v1334 = vsel %vm433, %v1311, 0
        %v1337 = vsel %vm433, %v1312, 0
        %v1340 = vsel %vm495, %v1314, 0
        %1342 = vmatprep.subr.mxu0 0.0
        %1343 = vmatpush1.msra.mxu0 %v1340
        %1344 = vmatprep.subr.mxu0 0.0
        %1345 = vmatpush1.msra.mxu0 0.0
        %1346 = vmatprep.subr.mxu0 0.0
        %1347 = vmatpush1.msra.mxu0 0.0
        %1348 = vmatprep.subr.mxu0 0.0
        %1349 = vmatpush1.msra.mxu0 0.0
        %1350 = vmatprep.subr.mxu0 0.0
        %1351 = vmatpush1.msra.mxu0 0.0
        %1352 = vmatprep.subr.mxu0 0.0
        %1353 = vmatpush1.msra.mxu0 0.0
        %1354 = vmatprep.subr.mxu0 0.0
        %1355 = vmatpush1.msra.mxu0 0.0
        %1356 = vmatprep.subr.mxu0 0.0
        %1357 = vmatpush1.msra.mxu0 0.0
        %1358 = vmatprep.subr.mxu0 0.0
        %1359 = vmatpush1.msra.mxu0 0.0
        %1360 = vmatprep.subr.mxu0 0.0
        %1361 = vmatpush1.msra.mxu0 0.0
        %1362 = vmatprep.subr.mxu0 0.0
        %1363 = vmatpush1.msra.mxu0 0.0
        %1364 = vmatprep.subr.mxu0 0.0
        %1365 = vmatpush1.msra.mxu0 0.0
        %1366 = vmatprep.subr.mxu0 0.0
        %1367 = vmatpush1.msra.mxu0 0.0
        %1368 = vmatprep.subr.mxu0 0.0
        %1369 = vmatpush1.msra.mxu0 0.0
        %1370 = vmatprep.subr.mxu0 0.0
        %1371 = vmatpush1.msra.mxu0 0.0
        %1372 = vmatprep.subr.mxu0 0.0
        %1373 = vmatpush1.msra.mxu0 0.0
        %1374 = vmatprep.subr.mxu0 0.0
        %1375 = vmatpush1.msra.mxu0 0.0
        %1376 = vmatprep.subr.mxu0 0.0
        %1377 = vmatpush1.msra.mxu0 0.0
        %1378 = vmatprep.subr.mxu0 0.0
        %1379 = vmatpush1.msra.mxu0 0.0
        %1380 = vmatprep.subr.mxu0 0.0
        %1381 = vmatpush1.msra.mxu0 0.0
        %1382 = vmatprep.subr.mxu0 0.0
        %1383 = vmatpush1.msra.mxu0 0.0
        %1384 = vmatprep.subr.mxu0 0.0
        %1385 = vmatpush1.msra.mxu0 0.0
        %1386 = vmatprep.subr.mxu0 0.0
        %1387 = vmatpush1.msra.mxu0 0.0
        %1388 = vmatprep.subr.mxu0 0.0
        %1389 = vmatpush1.msra.mxu0 0.0
        %1390 = vmatprep.subr.mxu0 0.0
        %1391 = vmatpush1.msra.mxu0 0.0
        %1392 = vmatprep.subr.mxu0 0.0
        %1393 = vmatpush1.msra.mxu0 0.0
        %1394 = vmatprep.subr.mxu0 0.0
        %1395 = vmatpush1.msra.mxu0 0.0
        %1396 = vmatprep.subr.mxu0 0.0
        %1397 = vmatpush1.msra.mxu0 0.0
        %1398 = vmatprep.subr.mxu0 0.0
        %1399 = vmatpush1.msra.mxu0 0.0
        %1400 = vmatprep.subr.mxu0 0.0
        %1401 = vmatpush1.msra.mxu0 0.0
        %1402 = vmatprep.subr.mxu0 0.0
        %1403 = vmatpush1.msra.mxu0 0.0
        %1404 = vmatprep.subr.mxu0 0.0
        %1405 = vmatpush1.msra.mxu0 0.0
        %1406 = vmatprep.mubr.f32.mxu0 0.0
        %1407 = vmatmul.mubr.f32.gmra.mrb[0].mxu0 %v1316
        %v1408 = vpop.f32.mrb[0].mxu0
        %v1409 = vadd.f32 0.0, %v1408
        %v1410 = vpop.f32.mrb[0].mxu0
        %1411 = vmatprep.mubr.f32.mxu0 0.0
        %1412 = vmatmul.mubr.f32.gmra.mrb[0].mxu0 %v1319
        %v1413 = vpop.f32.mrb[0].mxu0
        %v1414 = vadd.f32 0.0, %v1413
        %v1415 = vpop.f32.mrb[0].mxu0
        %1416 = vmatprep.mubr.f32.mxu0 0.0
        %1417 = vmatmul.mubr.f32.gmra.mrb[0].mxu0 %v1322
        %v1418 = vpop.f32.mrb[0].mxu0
        %v1419 = vadd.f32 0.0, %v1418
        %v1420 = vpop.f32.mrb[0].mxu0
        %1421 = vmatprep.mubr.f32.mxu0 0.0
        %1422 = vmatmul.mubr.f32.gmra.mrb[0].mxu0 %v1325
        %v1423 = vpop.f32.mrb[0].mxu0
        %v1424 = vadd.f32 0.0, %v1423
        %v1425 = vpop.f32.mrb[0].mxu0
        %1426 = vmatprep.mubr.f32.mxu0 0.0
        %1427 = vmatmul.mubr.f32.gmra.mrb[0].mxu0 %v1328
        %v1428 = vpop.f32.mrb[0].mxu0
        %v1429 = vadd.f32 0.0, %v1428
        %v1430 = vpop.f32.mrb[0].mxu0
        %1431 = vmatprep.mubr.f32.mxu0 0.0
        %1432 = vmatmul.mubr.f32.gmra.mrb[0].mxu0 %v1331
        %v1433 = vpop.f32.mrb[0].mxu0
        %v1434 = vadd.f32 0.0, %v1433
        %v1435 = vpop.f32.mrb[0].mxu0
        %1436 = vmatprep.mubr.f32.mxu0 0.0
        %1437 = vmatmul.mubr.f32.gmra.mrb[0].mxu0 %v1334
        %v1438 = vpop.f32.mrb[0].mxu0
        %v1439 = vadd.f32 0.0, %v1438
        %v1440 = vpop.f32.mrb[0].mxu0
        %1441 = vmatprep.mubr.f32.mxu0 0.0
        %1442 = vmatmul.mubr.f32.gmra.mrb[0].mxu0 %v1337
        %v1443 = vpop.f32.mrb[0].mxu0
        %v1444 = vadd.f32 0.0, %v1443
        %v1445 = vpop.f32.mrb[0].mxu0
        %1446 = vdwg.mxu0
        %1447 = vst.msk [vmem:[#allocation3] sm:$0xff] %vm433, %v1409
        %1448 = vst.msk [vmem:[#allocation3 + $0x8] sm:$0xff] %vm433, %v1414
        %1449 = vst.msk [vmem:[#allocation3 + $0x10] sm:$0xff] %vm433, %v1419
        %1450 = vst.msk [vmem:[#allocation3 + $0x18] sm:$0xff] %vm433, %v1424
        %1451 = vst.msk [vmem:[#allocation3 + $0x20] sm:$0xff] %vm433, %v1429
        %1452 = vst.msk [vmem:[#allocation3 + $0x28] sm:$0xff] %vm433, %v1434
        %1453 = vst.msk [vmem:[#allocation3 + $0x30] sm:$0xff] %vm433, %v1439
        %1454 = vst.msk [vmem:[#allocation3 + $0x38] sm:$0xff] %vm433, %v1444
        %v1455 = vld [vmem:[#allocation2] sm:$0xff]
        %v1456 = vld [vmem:[#allocation2 + $0x10] sm:$0xff]
        %v1457 = vld [vmem:[#allocation2 + $0x20] sm:$0xff]
        %v1458 = vld [vmem:[#allocation2 + $0x30] sm:$0xff]
        %v1459 = vld [vmem:[#allocation2 + $0x40] sm:$0xff]
        %v1460 = vld [vmem:[#allocation2 + $0x50] sm:$0xff]
        %v1461 = vld [vmem:[#allocation2 + $0x60] sm:$0xff]
        %v1462 = vld [vmem:[#allocation2 + $0x70] sm:$0xff]
        %s1463 = scalar_lea.vmem %s3, 28
        %v1464 = vld [vmem:[%s1463] sm:$0xf]
        %v1466 = vsel %vm433, %v1455, 0
        %v1469 = vsel %vm433, %v1456, 0
        %v1472 = vsel %vm433, %v1457, 0
        %v1475 = vsel %vm433, %v1458, 0
        %v1478 = vsel %vm433, %v1459, 0
        %v1481 = vsel %vm433, %v1460, 0
        %v1484 = vsel %vm433, %v1461, 0
        %v1487 = vsel %vm433, %v1462, 0
        %v1490 = vsel %vm495, %v1464, 0
        %1492 = vmatprep.subr.mxu0 0.0
        %1493 = vmatpush1.msra.mxu0 %v1490
        %1494 = vmatprep.subr.mxu0 0.0
        %1495 = vmatpush1.msra.mxu0 0.0
        %1496 = vmatprep.subr.mxu0 0.0
        %1497 = vmatpush1.msra.mxu0 0.0
        %1498 = vmatprep.subr.mxu0 0.0
        %1499 = vmatpush1.msra.mxu0 0.0
        %1500 = vmatprep.subr.mxu0 0.0
        %1501 = vmatpush1.msra.mxu0 0.0
        %1502 = vmatprep.subr.mxu0 0.0
        %1503 = vmatpush1.msra.mxu0 0.0
        %1504 = vmatprep.subr.mxu0 0.0
        %1505 = vmatpush1.msra.mxu0 0.0
        %1506 = vmatprep.subr.mxu0 0.0
        %1507 = vmatpush1.msra.mxu0 0.0
        %1508 = vmatprep.subr.mxu0 0.0
        %1509 = vmatpush1.msra.mxu0 0.0
        %1510 = vmatprep.subr.mxu0 0.0
        %1511 = vmatpush1.msra.mxu0 0.0
        %1512 = vmatprep.subr.mxu0 0.0
        %1513 = vmatpush1.msra.mxu0 0.0
        %1514 = vmatprep.subr.mxu0 0.0
        %1515 = vmatpush1.msra.mxu0 0.0
        %1516 = vmatprep.subr.mxu0 0.0
        %1517 = vmatpush1.msra.mxu0 0.0
        %1518 = vmatprep.subr.mxu0 0.0
        %1519 = vmatpush1.msra.mxu0 0.0
        %1520 = vmatprep.subr.mxu0 0.0
        %1521 = vmatpush1.msra.mxu0 0.0
        %1522 = vmatprep.subr.mxu0 0.0
        %1523 = vmatpush1.msra.mxu0 0.0
        %1524 = vmatprep.subr.mxu0 0.0
        %1525 = vmatpush1.msra.mxu0 0.0
        %1526 = vmatprep.subr.mxu0 0.0
        %1527 = vmatpush1.msra.mxu0 0.0
        %1528 = vmatprep.subr.mxu0 0.0
        %1529 = vmatpush1.msra.mxu0 0.0
        %1530 = vmatprep.subr.mxu0 0.0
        %1531 = vmatpush1.msra.mxu0 0.0
        %1532 = vmatprep.subr.mxu0 0.0
        %1533 = vmatpush1.msra.mxu0 0.0
        %1534 = vmatprep.subr.mxu0 0.0
        %1535 = vmatpush1.msra.mxu0 0.0
        %1536 = vmatprep.subr.mxu0 0.0
        %1537 = vmatpush1.msra.mxu0 0.0
        %1538 = vmatprep.subr.mxu0 0.0
        %1539 = vmatpush1.msra.mxu0 0.0
        %1540 = vmatprep.subr.mxu0 0.0
        %1541 = vmatpush1.msra.mxu0 0.0
        %1542 = vmatprep.subr.mxu0 0.0
        %1543 = vmatpush1.msra.mxu0 0.0
        %1544 = vmatprep.subr.mxu0 0.0
        %1545 = vmatpush1.msra.mxu0 0.0
        %1546 = vmatprep.subr.mxu0 0.0
        %1547 = vmatpush1.msra.mxu0 0.0
        %1548 = vmatprep.subr.mxu0 0.0
        %1549 = vmatpush1.msra.mxu0 0.0
        %1550 = vmatprep.subr.mxu0 0.0
        %1551 = vmatpush1.msra.mxu0 0.0
        %1552 = vmatprep.subr.mxu0 0.0
        %1553 = vmatpush1.msra.mxu0 0.0
        %1554 = vmatprep.subr.mxu0 0.0
        %1555 = vmatpush1.msra.mxu0 0.0
        %1556 = vmatprep.mubr.f32.mxu0 0.0
        %1557 = vmatmul.mubr.f32.gmra.mrb[0].mxu0 %v1466
        %v1558 = vpop.f32.mrb[0].mxu0
        %v1559 = vadd.f32 0.0, %v1558
        %v1560 = vpop.f32.mrb[0].mxu0
        %1561 = vmatprep.mubr.f32.mxu0 0.0
        %1562 = vmatmul.mubr.f32.gmra.mrb[0].mxu0 %v1469
        %v1563 = vpop.f32.mrb[0].mxu0
        %v1564 = vadd.f32 0.0, %v1563
        %v1565 = vpop.f32.mrb[0].mxu0
        %1566 = vmatprep.mubr.f32.mxu0 0.0
        %1567 = vmatmul.mubr.f32.gmra.mrb[0].mxu0 %v1472
        %v1568 = vpop.f32.mrb[0].mxu0
        %v1569 = vadd.f32 0.0, %v1568
        %v1570 = vpop.f32.mrb[0].mxu0
        %1571 = vmatprep.mubr.f32.mxu0 0.0
        %1572 = vmatmul.mubr.f32.gmra.mrb[0].mxu0 %v1475
        %v1573 = vpop.f32.mrb[0].mxu0
        %v1574 = vadd.f32 0.0, %v1573
        %v1575 = vpop.f32.mrb[0].mxu0
        %1576 = vmatprep.mubr.f32.mxu0 0.0
        %1577 = vmatmul.mubr.f32.gmra.mrb[0].mxu0 %v1478
        %v1578 = vpop.f32.mrb[0].mxu0
        %v1579 = vadd.f32 0.0, %v1578
        %v1580 = vpop.f32.mrb[0].mxu0
        %1581 = vmatprep.mubr.f32.mxu0 0.0
        %1582 = vmatmul.mubr.f32.gmra.mrb[0].mxu0 %v1481
        %v1583 = vpop.f32.mrb[0].mxu0
        %v1584 = vadd.f32 0.0, %v1583
        %v1585 = vpop.f32.mrb[0].mxu0
        %1586 = vmatprep.mubr.f32.mxu0 0.0
        %1587 = vmatmul.mubr.f32.gmra.mrb[0].mxu0 %v1484
        %v1588 = vpop.f32.mrb[0].mxu0
        %v1589 = vadd.f32 0.0, %v1588
        %v1590 = vpop.f32.mrb[0].mxu0
        %1591 = vmatprep.mubr.f32.mxu0 0.0
        %1592 = vmatmul.mubr.f32.gmra.mrb[0].mxu0 %v1487
        %v1593 = vpop.f32.mrb[0].mxu0
        %v1594 = vadd.f32 0.0, %v1593
        %v1595 = vpop.f32.mrb[0].mxu0
        %1596 = vdwg.mxu0
        %v1597 = vld [vmem:[#allocation3] sm:$0xff]
        %v1598 = vld [vmem:[#allocation3 + $0x8] sm:$0xff]
        %v1599 = vld [vmem:[#allocation3 + $0x10] sm:$0xff]
        %v1600 = vld [vmem:[#allocation3 + $0x18] sm:$0xff]
        %v1601 = vld [vmem:[#allocation3 + $0x20] sm:$0xff]
        %v1602 = vld [vmem:[#allocation3 + $0x28] sm:$0xff]
        %v1603 = vld [vmem:[#allocation3 + $0x30] sm:$0xff]
        %v1604 = vld [vmem:[#allocation3 + $0x38] sm:$0xff]
        %v1605 = vadd.f32 %v1597, %v1559
        %v1606 = vadd.f32 %v1598, %v1564
        %v1607 = vadd.f32 %v1599, %v1569
        %v1608 = vadd.f32 %v1600, %v1574
        %v1609 = vadd.f32 %v1601, %v1579
        %v1610 = vadd.f32 %v1602, %v1584
        %v1611 = vadd.f32 %v1603, %v1589
        %v1612 = vadd.f32 %v1604, %v1594
        %1613 = vst.msk [vmem:[#allocation3] sm:$0xff] %vm433, %v1605
        %1614 = vst.msk [vmem:[#allocation3 + $0x8] sm:$0xff] %vm433, %v1606
        %1615 = vst.msk [vmem:[#allocation3 + $0x10] sm:$0xff] %vm433, %v1607
        %1616 = vst.msk [vmem:[#allocation3 + $0x18] sm:$0xff] %vm433, %v1608
        %1617 = vst.msk [vmem:[#allocation3 + $0x20] sm:$0xff] %vm433, %v1609
        %1618 = vst.msk [vmem:[#allocation3 + $0x28] sm:$0xff] %vm433, %v1610
        %1619 = vst.msk [vmem:[#allocation3 + $0x30] sm:$0xff] %vm433, %v1611
        %1620 = vst.msk [vmem:[#allocation3 + $0x38] sm:$0xff] %vm433, %v1612
        %v1621 = vld [vmem:[#allocation3] sm:$0xff]
        %v1622 = vld [vmem:[#allocation3 + $0x8] sm:$0xff]
        %v1623 = vld [vmem:[#allocation3 + $0x10] sm:$0xff]
        %v1624 = vld [vmem:[#allocation3 + $0x18] sm:$0xff]
        %v1625 = vld [vmem:[#allocation3 + $0x20] sm:$0xff]
        %v1626 = vld [vmem:[#allocation3 + $0x28] sm:$0xff]
        %v1627 = vld [vmem:[#allocation3 + $0x30] sm:$0xff]
        %v1628 = vld [vmem:[#allocation3 + $0x38] sm:$0xff]
        %v1629 = vld [vmem:[%s4] sm:$0x1]
        %v1631 = vlaneseq
        %v1632 = vshrl.u32 %v1631, 7
        %v1633 = vsub.s32 0, %v1632
        %v1634 = vrot.slane %v1629, %v1633
        %v1636 = vadd.f32 %v1621, %v1634
        %v1637 = vadd.f32 %v1622, %v1634
        %v1638 = vadd.f32 %v1623, %v1634
        %v1639 = vadd.f32 %v1624, %v1634
        %v1640 = vadd.f32 %v1625, %v1634
        %v1641 = vadd.f32 %v1626, %v1634
        %v1642 = vadd.f32 %v1627, %v1634
        %v1643 = vadd.f32 %v1628, %v1634
        %v1644 = vmax.f32 %v1636, 0.0
        %v1645 = vmax.f32 %v1637, 0.0
        %v1646 = vmax.f32 %v1638, 0.0
        %v1647 = vmax.f32 %v1639, 0.0
        %v1648 = vmax.f32 %v1640, 0.0
        %v1649 = vmax.f32 %v1641, 0.0
        %v1650 = vmax.f32 %v1642, 0.0
        %v1651 = vmax.f32 %v1643, 0.0
        %v1652 = vld [vmem:[%s5] sm:$0xf]
        %v1653 = vld [vmem:[%s6] sm:$0x1]
        %v1655 = vlaneseq
        %v1656 = vshrl.u32 %v1655, 7
        %v1657 = vsub.s32 0, %v1656
        %v1658 = vrot.slane %v1653, %v1657
        %v1661 = vsel %vm433, %v1644, 0
        %v1664 = vsel %vm433, %v1645, 0
        %v1667 = vsel %vm433, %v1646, 0
        %v1670 = vsel %vm433, %v1647, 0
        %v1673 = vsel %vm433, %v1648, 0
        %v1676 = vsel %vm433, %v1649, 0
        %v1679 = vsel %vm433, %v1650, 0
        %v1682 = vsel %vm433, %v1651, 0
        %v1685 = vsel %vm495, %v1652, 0
        %1687 = vmatprep.subr.mxu0 0.0
        %1688 = vmatpush1.msra.mxu0 %v1685
        %1689 = vmatprep.subr.mxu0 0.0
        %1690 = vmatpush1.msra.mxu0 0.0
        %1691 = vmatprep.subr.mxu0 0.0
        %1692 = vmatpush1.msra.mxu0 0.0
        %1693 = vmatprep.subr.mxu0 0.0
        %1694 = vmatpush1.msra.mxu0 0.0
        %1695 = vmatprep.subr.mxu0 0.0
        %1696 = vmatpush1.msra.mxu0 0.0
        %1697 = vmatprep.subr.mxu0 0.0
        %1698 = vmatpush1.msra.mxu0 0.0
        %1699 = vmatprep.subr.mxu0 0.0
        %1700 = vmatpush1.msra.mxu0 0.0
        %1701 = vmatprep.subr.mxu0 0.0
        %1702 = vmatpush1.msra.mxu0 0.0
        %1703 = vmatprep.subr.mxu0 0.0
        %1704 = vmatpush1.msra.mxu0 0.0
        %1705 = vmatprep.subr.mxu0 0.0
        %1706 = vmatpush1.msra.mxu0 0.0
        %1707 = vmatprep.subr.mxu0 0.0
        %1708 = vmatpush1.msra.mxu0 0.0
        %1709 = vmatprep.subr.mxu0 0.0
        %1710 = vmatpush1.msra.mxu0 0.0
        %1711 = vmatprep.subr.mxu0 0.0
        %1712 = vmatpush1.msra.mxu0 0.0
        %1713 = vmatprep.subr.mxu0 0.0
        %1714 = vmatpush1.msra.mxu0 0.0
        %1715 = vmatprep.subr.mxu0 0.0
        %1716 = vmatpush1.msra.mxu0 0.0
        %1717 = vmatprep.subr.mxu0 0.0
        %1718 = vmatpush1.msra.mxu0 0.0
        %1719 = vmatprep.subr.mxu0 0.0
        %1720 = vmatpush1.msra.mxu0 0.0
        %1721 = vmatprep.subr.mxu0 0.0
        %1722 = vmatpush1.msra.mxu0 0.0
        %1723 = vmatprep.subr.mxu0 0.0
        %1724 = vmatpush1.msra.mxu0 0.0
        %1725 = vmatprep.subr.mxu0 0.0
        %1726 = vmatpush1.msra.mxu0 0.0
        %1727 = vmatprep.subr.mxu0 0.0
        %1728 = vmatpush1.msra.mxu0 0.0
        %1729 = vmatprep.subr.mxu0 0.0
        %1730 = vmatpush1.msra.mxu0 0.0
        %1731 = vmatprep.subr.mxu0 0.0
        %1732 = vmatpush1.msra.mxu0 0.0
        %1733 = vmatprep.subr.mxu0 0.0
        %1734 = vmatpush1.msra.mxu0 0.0
        %1735 = vmatprep.subr.mxu0 0.0
        %1736 = vmatpush1.msra.mxu0 0.0
        %1737 = vmatprep.subr.mxu0 0.0
        %1738 = vmatpush1.msra.mxu0 0.0
        %1739 = vmatprep.subr.mxu0 0.0
        %1740 = vmatpush1.msra.mxu0 0.0
        %1741 = vmatprep.subr.mxu0 0.0
        %1742 = vmatpush1.msra.mxu0 0.0
        %1743 = vmatprep.subr.mxu0 0.0
        %1744 = vmatpush1.msra.mxu0 0.0
        %1745 = vmatprep.subr.mxu0 0.0
        %1746 = vmatpush1.msra.mxu0 0.0
        %1747 = vmatprep.subr.mxu0 0.0
        %1748 = vmatpush1.msra.mxu0 0.0
        %1749 = vmatprep.subr.mxu0 0.0
        %1750 = vmatpush1.msra.mxu0 0.0
        %1751 = vmatprep.mubr.f32.mxu0 0.0
        %1752 = vmatmul.mubr.f32.gmra.mrb[0].mxu0 %v1661
        %v1753 = vpop.f32.mrb[0].mxu0
        %v1754 = vadd.f32 %v1658, %v1753
        %v1755 = vpop.f32.mrb[0].mxu0
        %1756 = vmatprep.mubr.f32.mxu0 0.0
        %1757 = vmatmul.mubr.f32.gmra.mrb[0].mxu0 %v1664
        %v1758 = vpop.f32.mrb[0].mxu0
        %v1759 = vadd.f32 %v1658, %v1758
        %v1760 = vpop.f32.mrb[0].mxu0
        %1761 = vmatprep.mubr.f32.mxu0 0.0
        %1762 = vmatmul.mubr.f32.gmra.mrb[0].mxu0 %v1667
        %v1763 = vpop.f32.mrb[0].mxu0
        %v1764 = vadd.f32 %v1658, %v1763
        %v1765 = vpop.f32.mrb[0].mxu0
        %1766 = vmatprep.mubr.f32.mxu0 0.0
        %1767 = vmatmul.mubr.f32.gmra.mrb[0].mxu0 %v1670
        %v1768 = vpop.f32.mrb[0].mxu0
        %v1769 = vadd.f32 %v1658, %v1768
        %v1770 = vpop.f32.mrb[0].mxu0
        %1771 = vmatprep.mubr.f32.mxu0 0.0
        %1772 = vmatmul.mubr.f32.gmra.mrb[0].mxu0 %v1673
        %v1773 = vpop.f32.mrb[0].mxu0
        %v1774 = vadd.f32 %v1658, %v1773
        %v1775 = vpop.f32.mrb[0].mxu0
        %1776 = vmatprep.mubr.f32.mxu0 0.0
        %1777 = vmatmul.mubr.f32.gmra.mrb[0].mxu0 %v1676
        %v1778 = vpop.f32.mrb[0].mxu0
        %v1779 = vadd.f32 %v1658, %v1778
        %v1780 = vpop.f32.mrb[0].mxu0
        %1781 = vmatprep.mubr.f32.mxu0 0.0
        %1782 = vmatmul.mubr.f32.gmra.mrb[0].mxu0 %v1679
        %v1783 = vpop.f32.mrb[0].mxu0
        %v1784 = vadd.f32 %v1658, %v1783
        %v1785 = vpop.f32.mrb[0].mxu0
        %1786 = vmatprep.mubr.f32.mxu0 0.0
        %1787 = vmatmul.mubr.f32.gmra.mrb[0].mxu0 %v1682
        %v1788 = vpop.f32.mrb[0].mxu0
        %v1789 = vadd.f32 %v1658, %v1788
        %v1790 = vpop.f32.mrb[0].mxu0
        %1791 = vdwg.mxu0
        %v1792 = vmax.f32 %v1754, 0.0
        %v1793 = vmax.f32 %v1759, 0.0
        %v1794 = vmax.f32 %v1764, 0.0
        %v1795 = vmax.f32 %v1769, 0.0
        %v1796 = vmax.f32 %v1774, 0.0
        %v1797 = vmax.f32 %v1779, 0.0
        %v1798 = vmax.f32 %v1784, 0.0
        %v1799 = vmax.f32 %v1789, 0.0
        %s1800 = scalar_lea.vmem %s271, 128 [#allocation4]
        %1801 = vst.msk [vmem:[%s1800] sm:$0xff] %vm791, %v1792
        %1802 = vst.msk [vmem:[%s1800 + $0x8] sm:$0xff] %vm791, %v1793
        %1803 = vst.msk [vmem:[%s1800 + $0x10] sm:$0xff] %vm791, %v1794
        %1804 = vst.msk [vmem:[%s1800 + $0x18] sm:$0xff] %vm791, %v1795
        %1805 = vst.msk [vmem:[%s1800 + $0x20] sm:$0xff] %vm791, %v1796
        %1806 = vst.msk [vmem:[%s1800 + $0x28] sm:$0xff] %vm791, %v1797
        %1807 = vst.msk [vmem:[%s1800 + $0x30] sm:$0xff] %vm791, %v1798
        %1808 = vst.msk [vmem:[%s1800 + $0x38] sm:$0xff] %vm791, %v1799
        %v1809 = vld [vmem:[%s1304 + $0x1] sm:$0xff]
        %v1810 = vld [vmem:[%s1304 + $0x11] sm:$0xff]
        %v1811 = vld [vmem:[%s1304 + $0x21] sm:$0xff]
        %v1812 = vld [vmem:[%s1304 + $0x31] sm:$0xff]
        %v1813 = vld [vmem:[%s1304 + $0x41] sm:$0xff]
        %v1814 = vld [vmem:[%s1304 + $0x51] sm:$0xff]
        %v1815 = vld [vmem:[%s1304 + $0x61] sm:$0xff]
        %v1816 = vld [vmem:[%s1304 + $0x71] sm:$0xff]
        %v1817 = vld [vmem:[%s3] sm:$0xf]
        %v1819 = vsel %vm433, %v1809, 0
        %v1822 = vsel %vm433, %v1810, 0
        %v1825 = vsel %vm433, %v1811, 0
        %v1828 = vsel %vm433, %v1812, 0
        %v1831 = vsel %vm433, %v1813, 0
        %v1834 = vsel %vm433, %v1814, 0
        %v1837 = vsel %vm433, %v1815, 0
        %v1840 = vsel %vm433, %v1816, 0
        %v1843 = vsel %vm495, %v1817, 0
        %1845 = vmatprep.subr.mxu0 0.0
        %1846 = vmatpush1.msra.mxu0 %v1843
        %1847 = vmatprep.subr.mxu0 0.0
        %1848 = vmatpush1.msra.mxu0 0.0
        %1849 = vmatprep.subr.mxu0 0.0
        %1850 = vmatpush1.msra.mxu0 0.0
        %1851 = vmatprep.subr.mxu0 0.0
        %1852 = vmatpush1.msra.mxu0 0.0
        %1853 = vmatprep.subr.mxu0 0.0
        %1854 = vmatpush1.msra.mxu0 0.0
        %1855 = vmatprep.subr.mxu0 0.0
        %1856 = vmatpush1.msra.mxu0 0.0
        %1857 = vmatprep.subr.mxu0 0.0
        %1858 = vmatpush1.msra.mxu0 0.0
        %1859 = vmatprep.subr.mxu0 0.0
        %1860 = vmatpush1.msra.mxu0 0.0
        %1861 = vmatprep.subr.mxu0 0.0
        %1862 = vmatpush1.msra.mxu0 0.0
        %1863 = vmatprep.subr.mxu0 0.0
        %1864 = vmatpush1.msra.mxu0 0.0
        %1865 = vmatprep.subr.mxu0 0.0
        %1866 = vmatpush1.msra.mxu0 0.0
        %1867 = vmatprep.subr.mxu0 0.0
        %1868 = vmatpush1.msra.mxu0 0.0
        %1869 = vmatprep.subr.mxu0 0.0
        %1870 = vmatpush1.msra.mxu0 0.0
        %1871 = vmatprep.subr.mxu0 0.0
        %1872 = vmatpush1.msra.mxu0 0.0
        %1873 = vmatprep.subr.mxu0 0.0
        %1874 = vmatpush1.msra.mxu0 0.0
        %1875 = vmatprep.subr.mxu0 0.0
        %1876 = vmatpush1.msra.mxu0 0.0
        %1877 = vmatprep.subr.mxu0 0.0
        %1878 = vmatpush1.msra.mxu0 0.0
        %1879 = vmatprep.subr.mxu0 0.0
        %1880 = vmatpush1.msra.mxu0 0.0
        %1881 = vmatprep.subr.mxu0 0.0
        %1882 = vmatpush1.msra.mxu0 0.0
        %1883 = vmatprep.subr.mxu0 0.0
        %1884 = vmatpush1.msra.mxu0 0.0
        %1885 = vmatprep.subr.mxu0 0.0
        %1886 = vmatpush1.msra.mxu0 0.0
        %1887 = vmatprep.subr.mxu0 0.0
        %1888 = vmatpush1.msra.mxu0 0.0
        %1889 = vmatprep.subr.mxu0 0.0
        %1890 = vmatpush1.msra.mxu0 0.0
        %1891 = vmatprep.subr.mxu0 0.0
        %1892 = vmatpush1.msra.mxu0 0.0
        %1893 = vmatprep.subr.mxu0 0.0
        %1894 = vmatpush1.msra.mxu0 0.0
        %1895 = vmatprep.subr.mxu0 0.0
        %1896 = vmatpush1.msra.mxu0 0.0
        %1897 = vmatprep.subr.mxu0 0.0
        %1898 = vmatpush1.msra.mxu0 0.0
        %1899 = vmatprep.subr.mxu0 0.0
        %1900 = vmatpush1.msra.mxu0 0.0
        %1901 = vmatprep.subr.mxu0 0.0
        %1902 = vmatpush1.msra.mxu0 0.0
        %1903 = vmatprep.subr.mxu0 0.0
        %1904 = vmatpush1.msra.mxu0 0.0
        %1905 = vmatprep.subr.mxu0 0.0
        %1906 = vmatpush1.msra.mxu0 0.0
        %1907 = vmatprep.subr.mxu0 0.0
        %1908 = vmatpush1.msra.mxu0 0.0
        %1909 = vmatprep.mubr.f32.mxu0 0.0
        %1910 = vmatmul.mubr.f32.gmra.mrb[0].mxu0 %v1819
        %v1911 = vpop.f32.mrb[0].mxu0
        %v1912 = vadd.f32 0.0, %v1911
        %v1913 = vpop.f32.mrb[0].mxu0
        %1914 = vmatprep.mubr.f32.mxu0 0.0
        %1915 = vmatmul.mubr.f32.gmra.mrb[0].mxu0 %v1822
        %v1916 = vpop.f32.mrb[0].mxu0
        %v1917 = vadd.f32 0.0, %v1916
        %v1918 = vpop.f32.mrb[0].mxu0
        %1919 = vmatprep.mubr.f32.mxu0 0.0
        %1920 = vmatmul.mubr.f32.gmra.mrb[0].mxu0 %v1825
        %v1921 = vpop.f32.mrb[0].mxu0
        %v1922 = vadd.f32 0.0, %v1921
        %v1923 = vpop.f32.mrb[0].mxu0
        %1924 = vmatprep.mubr.f32.mxu0 0.0
        %1925 = vmatmul.mubr.f32.gmra.mrb[0].mxu0 %v1828
        %v1926 = vpop.f32.mrb[0].mxu0
        %v1927 = vadd.f32 0.0, %v1926
        %v1928 = vpop.f32.mrb[0].mxu0
        %1929 = vmatprep.mubr.f32.mxu0 0.0
        %1930 = vmatmul.mubr.f32.gmra.mrb[0].mxu0 %v1831
        %v1931 = vpop.f32.mrb[0].mxu0
        %v1932 = vadd.f32 0.0, %v1931
        %v1933 = vpop.f32.mrb[0].mxu0
        %1934 = vmatprep.mubr.f32.mxu0 0.0
        %1935 = vmatmul.mubr.f32.gmra.mrb[0].mxu0 %v1834
        %v1936 = vpop.f32.mrb[0].mxu0
        %v1937 = vadd.f32 0.0, %v1936
        %v1938 = vpop.f32.mrb[0].mxu0
        %1939 = vmatprep.mubr.f32.mxu0 0.0
        %1940 = vmatmul.mubr.f32.gmra.mrb[0].mxu0 %v1837
        %v1941 = vpop.f32.mrb[0].mxu0
        %v1942 = vadd.f32 0.0, %v1941
        %v1943 = vpop.f32.mrb[0].mxu0
        %1944 = vmatprep.mubr.f32.mxu0 0.0
        %1945 = vmatmul.mubr.f32.gmra.mrb[0].mxu0 %v1840
        %v1946 = vpop.f32.mrb[0].mxu0
        %v1947 = vadd.f32 0.0, %v1946
        %v1948 = vpop.f32.mrb[0].mxu0
        %1949 = vdwg.mxu0
        %1950 = vst.msk [vmem:[#allocation3] sm:$0xff] %vm433, %v1912
        %1951 = vst.msk [vmem:[#allocation3 + $0x8] sm:$0xff] %vm433, %v1917
        %1952 = vst.msk [vmem:[#allocation3 + $0x10] sm:$0xff] %vm433, %v1922
        %1953 = vst.msk [vmem:[#allocation3 + $0x18] sm:$0xff] %vm433, %v1927
        %1954 = vst.msk [vmem:[#allocation3 + $0x20] sm:$0xff] %vm433, %v1932
        %1955 = vst.msk [vmem:[#allocation3 + $0x28] sm:$0xff] %vm433, %v1937
        %1956 = vst.msk [vmem:[#allocation3 + $0x30] sm:$0xff] %vm433, %v1942
        %1957 = vst.msk [vmem:[#allocation3 + $0x38] sm:$0xff] %vm433, %v1947
        %v1958 = vld [vmem:[%s1304] sm:$0xff]
        %v1959 = vld [vmem:[%s1304 + $0x10] sm:$0xff]
        %v1960 = vld [vmem:[%s1304 + $0x20] sm:$0xff]
        %v1961 = vld [vmem:[%s1304 + $0x30] sm:$0xff]
        %v1962 = vld [vmem:[%s1304 + $0x40] sm:$0xff]
        %v1963 = vld [vmem:[%s1304 + $0x50] sm:$0xff]
        %v1964 = vld [vmem:[%s1304 + $0x60] sm:$0xff]
        %v1965 = vld [vmem:[%s1304 + $0x70] sm:$0xff]
        %s1966 = scalar_lea.vmem %s3, 8
        %v1967 = vld [vmem:[%s1966] sm:$0xf]
        %v1969 = vsel %vm433, %v1958, 0
        %v1972 = vsel %vm433, %v1959, 0
        %v1975 = vsel %vm433, %v1960, 0
        %v1978 = vsel %vm433, %v1961, 0
        %v1981 = vsel %vm433, %v1962, 0
        %v1984 = vsel %vm433, %v1963, 0
        %v1987 = vsel %vm433, %v1964, 0
        %v1990 = vsel %vm433, %v1965, 0
        %v1993 = vsel %vm495, %v1967, 0
        %1995 = vmatprep.subr.mxu0 0.0
        %1996 = vmatpush1.msra.mxu0 %v1993
        %1997 = vmatprep.subr.mxu0 0.0
        %1998 = vmatpush1.msra.mxu0 0.0
        %1999 = vmatprep.subr.mxu0 0.0
        %2000 = vmatpush1.msra.mxu0 0.0
        %2001 = vmatprep.subr.mxu0 0.0
        %2002 = vmatpush1.msra.mxu0 0.0
        %2003 = vmatprep.subr.mxu0 0.0
        %2004 = vmatpush1.msra.mxu0 0.0
        %2005 = vmatprep.subr.mxu0 0.0
        %2006 = vmatpush1.msra.mxu0 0.0
        %2007 = vmatprep.subr.mxu0 0.0
        %2008 = vmatpush1.msra.mxu0 0.0
        %2009 = vmatprep.subr.mxu0 0.0
        %2010 = vmatpush1.msra.mxu0 0.0
        %2011 = vmatprep.subr.mxu0 0.0
        %2012 = vmatpush1.msra.mxu0 0.0
        %2013 = vmatprep.subr.mxu0 0.0
        %2014 = vmatpush1.msra.mxu0 0.0
        %2015 = vmatprep.subr.mxu0 0.0
        %2016 = vmatpush1.msra.mxu0 0.0
        %2017 = vmatprep.subr.mxu0 0.0
        %2018 = vmatpush1.msra.mxu0 0.0
        %2019 = vmatprep.subr.mxu0 0.0
        %2020 = vmatpush1.msra.mxu0 0.0
        %2021 = vmatprep.subr.mxu0 0.0
        %2022 = vmatpush1.msra.mxu0 0.0
        %2023 = vmatprep.subr.mxu0 0.0
        %2024 = vmatpush1.msra.mxu0 0.0
        %2025 = vmatprep.subr.mxu0 0.0
        %2026 = vmatpush1.msra.mxu0 0.0
        %2027 = vmatprep.subr.mxu0 0.0
        %2028 = vmatpush1.msra.mxu0 0.0
        %2029 = vmatprep.subr.mxu0 0.0
        %2030 = vmatpush1.msra.mxu0 0.0
        %2031 = vmatprep.subr.mxu0 0.0
        %2032 = vmatpush1.msra.mxu0 0.0
        %2033 = vmatprep.subr.mxu0 0.0
        %2034 = vmatpush1.msra.mxu0 0.0
        %2035 = vmatprep.subr.mxu0 0.0
        %2036 = vmatpush1.msra.mxu0 0.0
        %2037 = vmatprep.subr.mxu0 0.0
        %2038 = vmatpush1.msra.mxu0 0.0
        %2039 = vmatprep.subr.mxu0 0.0
        %2040 = vmatpush1.msra.mxu0 0.0
        %2041 = vmatprep.subr.mxu0 0.0
        %2042 = vmatpush1.msra.mxu0 0.0
        %2043 = vmatprep.subr.mxu0 0.0
        %2044 = vmatpush1.msra.mxu0 0.0
        %2045 = vmatprep.subr.mxu0 0.0
        %2046 = vmatpush1.msra.mxu0 0.0
        %2047 = vmatprep.subr.mxu0 0.0
        %2048 = vmatpush1.msra.mxu0 0.0
        %2049 = vmatprep.subr.mxu0 0.0
        %2050 = vmatpush1.msra.mxu0 0.0
        %2051 = vmatprep.subr.mxu0 0.0
        %2052 = vmatpush1.msra.mxu0 0.0
        %2053 = vmatprep.subr.mxu0 0.0
        %2054 = vmatpush1.msra.mxu0 0.0
        %2055 = vmatprep.subr.mxu0 0.0
        %2056 = vmatpush1.msra.mxu0 0.0
        %2057 = vmatprep.subr.mxu0 0.0
        %2058 = vmatpush1.msra.mxu0 0.0
        %2059 = vmatprep.mubr.f32.mxu0 0.0
        %2060 = vmatmul.mubr.f32.gmra.mrb[0].mxu0 %v1969
        %v2061 = vpop.f32.mrb[0].mxu0
        %v2062 = vadd.f32 0.0, %v2061
        %v2063 = vpop.f32.mrb[0].mxu0
        %2064 = vmatprep.mubr.f32.mxu0 0.0
        %2065 = vmatmul.mubr.f32.gmra.mrb[0].mxu0 %v1972
        %v2066 = vpop.f32.mrb[0].mxu0
        %v2067 = vadd.f32 0.0, %v2066
        %v2068 = vpop.f32.mrb[0].mxu0
        %2069 = vmatprep.mubr.f32.mxu0 0.0
        %2070 = vmatmul.mubr.f32.gmra.mrb[0].mxu0 %v1975
        %v2071 = vpop.f32.mrb[0].mxu0
        %v2072 = vadd.f32 0.0, %v2071
        %v2073 = vpop.f32.mrb[0].mxu0
        %2074 = vmatprep.mubr.f32.mxu0 0.0
        %2075 = vmatmul.mubr.f32.gmra.mrb[0].mxu0 %v1978
        %v2076 = vpop.f32.mrb[0].mxu0
        %v2077 = vadd.f32 0.0, %v2076
        %v2078 = vpop.f32.mrb[0].mxu0
        %2079 = vmatprep.mubr.f32.mxu0 0.0
        %2080 = vmatmul.mubr.f32.gmra.mrb[0].mxu0 %v1981
        %v2081 = vpop.f32.mrb[0].mxu0
        %v2082 = vadd.f32 0.0, %v2081
        %v2083 = vpop.f32.mrb[0].mxu0
        %2084 = vmatprep.mubr.f32.mxu0 0.0
        %2085 = vmatmul.mubr.f32.gmra.mrb[0].mxu0 %v1984
        %v2086 = vpop.f32.mrb[0].mxu0
        %v2087 = vadd.f32 0.0, %v2086
        %v2088 = vpop.f32.mrb[0].mxu0
        %2089 = vmatprep.mubr.f32.mxu0 0.0
        %2090 = vmatmul.mubr.f32.gmra.mrb[0].mxu0 %v1987
        %v2091 = vpop.f32.mrb[0].mxu0
        %v2092 = vadd.f32 0.0, %v2091
        %v2093 = vpop.f32.mrb[0].mxu0
        %2094 = vmatprep.mubr.f32.mxu0 0.0
        %2095 = vmatmul.mubr.f32.gmra.mrb[0].mxu0 %v1990
        %v2096 = vpop.f32.mrb[0].mxu0
        %v2097 = vadd.f32 0.0, %v2096
        %v2098 = vpop.f32.mrb[0].mxu0
        %2099 = vdwg.mxu0
        %v2100 = vld [vmem:[#allocation3] sm:$0xff]
        %v2101 = vld [vmem:[#allocation3 + $0x8] sm:$0xff]
        %v2102 = vld [vmem:[#allocation3 + $0x10] sm:$0xff]
        %v2103 = vld [vmem:[#allocation3 + $0x18] sm:$0xff]
        %v2104 = vld [vmem:[#allocation3 + $0x20] sm:$0xff]
        %v2105 = vld [vmem:[#allocation3 + $0x28] sm:$0xff]
        %v2106 = vld [vmem:[#allocation3 + $0x30] sm:$0xff]
        %v2107 = vld [vmem:[#allocation3 + $0x38] sm:$0xff]
        %v2108 = vadd.f32 %v2100, %v2062
        %v2109 = vadd.f32 %v2101, %v2067
        %v2110 = vadd.f32 %v2102, %v2072
        %v2111 = vadd.f32 %v2103, %v2077
        %v2112 = vadd.f32 %v2104, %v2082
        %v2113 = vadd.f32 %v2105, %v2087
        %v2114 = vadd.f32 %v2106, %v2092
        %v2115 = vadd.f32 %v2107, %v2097
        %2116 = vst.msk [vmem:[#allocation3] sm:$0xff] %vm433, %v2108
        %2117 = vst.msk [vmem:[#allocation3 + $0x8] sm:$0xff] %vm433, %v2109
        %2118 = vst.msk [vmem:[#allocation3 + $0x10] sm:$0xff] %vm433, %v2110
        %2119 = vst.msk [vmem:[#allocation3 + $0x18] sm:$0xff] %vm433, %v2111
        %2120 = vst.msk [vmem:[#allocation3 + $0x20] sm:$0xff] %vm433, %v2112
        %2121 = vst.msk [vmem:[#allocation3 + $0x28] sm:$0xff] %vm433, %v2113
        %2122 = vst.msk [vmem:[#allocation3 + $0x30] sm:$0xff] %vm433, %v2114
        %2123 = vst.msk [vmem:[#allocation3 + $0x38] sm:$0xff] %vm433, %v2115
        %v2124 = vld [vmem:[#allocation2 + $0x1] sm:$0xff]
        %v2125 = vld [vmem:[#allocation2 + $0x11] sm:$0xff]
        %v2126 = vld [vmem:[#allocation2 + $0x21] sm:$0xff]
        %v2127 = vld [vmem:[#allocation2 + $0x31] sm:$0xff]
        %v2128 = vld [vmem:[#allocation2 + $0x41] sm:$0xff]
        %v2129 = vld [vmem:[#allocation2 + $0x51] sm:$0xff]
        %v2130 = vld [vmem:[#allocation2 + $0x61] sm:$0xff]
        %v2131 = vld [vmem:[#allocation2 + $0x71] sm:$0xff]
        %s2132 = scalar_lea.vmem %s3, 24
        %v2133 = vld [vmem:[%s2132] sm:$0xf]
        %v2135 = vsel %vm433, %v2124, 0
        %v2138 = vsel %vm433, %v2125, 0
        %v2141 = vsel %vm433, %v2126, 0
        %v2144 = vsel %vm433, %v2127, 0
        %v2147 = vsel %vm433, %v2128, 0
        %v2150 = vsel %vm433, %v2129, 0
        %v2153 = vsel %vm433, %v2130, 0
        %v2156 = vsel %vm433, %v2131, 0
        %v2159 = vsel %vm495, %v2133, 0
        %2161 = vmatprep.subr.mxu0 0.0
        %2162 = vmatpush1.msra.mxu0 %v2159
        %2163 = vmatprep.subr.mxu0 0.0
        %2164 = vmatpush1.msra.mxu0 0.0
        %2165 = vmatprep.subr.mxu0 0.0
        %2166 = vmatpush1.msra.mxu0 0.0
        %2167 = vmatprep.subr.mxu0 0.0
        %2168 = vmatpush1.msra.mxu0 0.0
        %2169 = vmatprep.subr.mxu0 0.0
        %2170 = vmatpush1.msra.mxu0 0.0
        %2171 = vmatprep.subr.mxu0 0.0
        %2172 = vmatpush1.msra.mxu0 0.0
        %2173 = vmatprep.subr.mxu0 0.0
        %2174 = vmatpush1.msra.mxu0 0.0
        %2175 = vmatprep.subr.mxu0 0.0
        %2176 = vmatpush1.msra.mxu0 0.0
        %2177 = vmatprep.subr.mxu0 0.0
        %2178 = vmatpush1.msra.mxu0 0.0
        %2179 = vmatprep.subr.mxu0 0.0
        %2180 = vmatpush1.msra.mxu0 0.0
        %2181 = vmatprep.subr.mxu0 0.0
        %2182 = vmatpush1.msra.mxu0 0.0
        %2183 = vmatprep.subr.mxu0 0.0
        %2184 = vmatpush1.msra.mxu0 0.0
        %2185 = vmatprep.subr.mxu0 0.0
        %2186 = vmatpush1.msra.mxu0 0.0
        %2187 = vmatprep.subr.mxu0 0.0
        %2188 = vmatpush1.msra.mxu0 0.0
        %2189 = vmatprep.subr.mxu0 0.0
        %2190 = vmatpush1.msra.mxu0 0.0
        %2191 = vmatprep.subr.mxu0 0.0
        %2192 = vmatpush1.msra.mxu0 0.0
        %2193 = vmatprep.subr.mxu0 0.0
        %2194 = vmatpush1.msra.mxu0 0.0
        %2195 = vmatprep.subr.mxu0 0.0
        %2196 = vmatpush1.msra.mxu0 0.0
        %2197 = vmatprep.subr.mxu0 0.0
        %2198 = vmatpush1.msra.mxu0 0.0
        %2199 = vmatprep.subr.mxu0 0.0
        %2200 = vmatpush1.msra.mxu0 0.0
        %2201 = vmatprep.subr.mxu0 0.0
        %2202 = vmatpush1.msra.mxu0 0.0
        %2203 = vmatprep.subr.mxu0 0.0
        %2204 = vmatpush1.msra.mxu0 0.0
        %2205 = vmatprep.subr.mxu0 0.0
        %2206 = vmatpush1.msra.mxu0 0.0
        %2207 = vmatprep.subr.mxu0 0.0
        %2208 = vmatpush1.msra.mxu0 0.0
        %2209 = vmatprep.subr.mxu0 0.0
        %2210 = vmatpush1.msra.mxu0 0.0
        %2211 = vmatprep.subr.mxu0 0.0
        %2212 = vmatpush1.msra.mxu0 0.0
        %2213 = vmatprep.subr.mxu0 0.0
        %2214 = vmatpush1.msra.mxu0 0.0
        %2215 = vmatprep.subr.mxu0 0.0
        %2216 = vmatpush1.msra.mxu0 0.0
        %2217 = vmatprep.subr.mxu0 0.0
        %2218 = vmatpush1.msra.mxu0 0.0
        %2219 = vmatprep.subr.mxu0 0.0
        %2220 = vmatpush1.msra.mxu0 0.0
        %2221 = vmatprep.subr.mxu0 0.0
        %2222 = vmatpush1.msra.mxu0 0.0
        %2223 = vmatprep.subr.mxu0 0.0
        %2224 = vmatpush1.msra.mxu0 0.0
        %2225 = vmatprep.mubr.f32.mxu0 0.0
        %2226 = vmatmul.mubr.f32.gmra.mrb[0].mxu0 %v2135
        %v2227 = vpop.f32.mrb[0].mxu0
        %v2228 = vadd.f32 0.0, %v2227
        %v2229 = vpop.f32.mrb[0].mxu0
        %2230 = vmatprep.mubr.f32.mxu0 0.0
        %2231 = vmatmul.mubr.f32.gmra.mrb[0].mxu0 %v2138
        %v2232 = vpop.f32.mrb[0].mxu0
        %v2233 = vadd.f32 0.0, %v2232
        %v2234 = vpop.f32.mrb[0].mxu0
        %2235 = vmatprep.mubr.f32.mxu0 0.0
        %2236 = vmatmul.mubr.f32.gmra.mrb[0].mxu0 %v2141
        %v2237 = vpop.f32.mrb[0].mxu0
        %v2238 = vadd.f32 0.0, %v2237
        %v2239 = vpop.f32.mrb[0].mxu0
        %2240 = vmatprep.mubr.f32.mxu0 0.0
        %2241 = vmatmul.mubr.f32.gmra.mrb[0].mxu0 %v2144
        %v2242 = vpop.f32.mrb[0].mxu0
        %v2243 = vadd.f32 0.0, %v2242
        %v2244 = vpop.f32.mrb[0].mxu0
        %2245 = vmatprep.mubr.f32.mxu0 0.0
        %2246 = vmatmul.mubr.f32.gmra.mrb[0].mxu0 %v2147
        %v2247 = vpop.f32.mrb[0].mxu0
        %v2248 = vadd.f32 0.0, %v2247
        %v2249 = vpop.f32.mrb[0].mxu0
        %2250 = vmatprep.mubr.f32.mxu0 0.0
        %2251 = vmatmul.mubr.f32.gmra.mrb[0].mxu0 %v2150
        %v2252 = vpop.f32.mrb[0].mxu0
        %v2253 = vadd.f32 0.0, %v2252
        %v2254 = vpop.f32.mrb[0].mxu0
        %2255 = vmatprep.mubr.f32.mxu0 0.0
        %2256 = vmatmul.mubr.f32.gmra.mrb[0].mxu0 %v2153
        %v2257 = vpop.f32.mrb[0].mxu0
        %v2258 = vadd.f32 0.0, %v2257
        %v2259 = vpop.f32.mrb[0].mxu0
        %2260 = vmatprep.mubr.f32.mxu0 0.0
        %2261 = vmatmul.mubr.f32.gmra.mrb[0].mxu0 %v2156
        %v2262 = vpop.f32.mrb[0].mxu0
        %v2263 = vadd.f32 0.0, %v2262
        %v2264 = vpop.f32.mrb[0].mxu0
        %2265 = vdwg.mxu0
        %v2266 = vld [vmem:[#allocation3] sm:$0xff]
        %v2267 = vld [vmem:[#allocation3 + $0x8] sm:$0xff]
        %v2268 = vld [vmem:[#allocation3 + $0x10] sm:$0xff]
        %v2269 = vld [vmem:[#allocation3 + $0x18] sm:$0xff]
        %v2270 = vld [vmem:[#allocation3 + $0x20] sm:$0xff]
        %v2271 = vld [vmem:[#allocation3 + $0x28] sm:$0xff]
        %v2272 = vld [vmem:[#allocation3 + $0x30] sm:$0xff]
        %v2273 = vld [vmem:[#allocation3 + $0x38] sm:$0xff]
        %v2274 = vadd.f32 %v2266, %v2228
        %v2275 = vadd.f32 %v2267, %v2233
        %v2276 = vadd.f32 %v2268, %v2238
        %v2277 = vadd.f32 %v2269, %v2243
        %v2278 = vadd.f32 %v2270, %v2248
        %v2279 = vadd.f32 %v2271, %v2253
        %v2280 = vadd.f32 %v2272, %v2258
        %v2281 = vadd.f32 %v2273, %v2263
        %2282 = vst.msk [vmem:[#allocation3] sm:$0xff] %vm433, %v2274
        %2283 = vst.msk [vmem:[#allocation3 + $0x8] sm:$0xff] %vm433, %v2275
        %2284 = vst.msk [vmem:[#allocation3 + $0x10] sm:$0xff] %vm433, %v2276
        %2285 = vst.msk [vmem:[#allocation3 + $0x18] sm:$0xff] %vm433, %v2277
        %2286 = vst.msk [vmem:[#allocation3 + $0x20] sm:$0xff] %vm433, %v2278
        %2287 = vst.msk [vmem:[#allocation3 + $0x28] sm:$0xff] %vm433, %v2279
        %2288 = vst.msk [vmem:[#allocation3 + $0x30] sm:$0xff] %vm433, %v2280
        %2289 = vst.msk [vmem:[#allocation3 + $0x38] sm:$0xff] %vm433, %v2281
        %v2290 = vld [vmem:[#allocation2] sm:$0xff]
        %v2291 = vld [vmem:[#allocation2 + $0x10] sm:$0xff]
        %v2292 = vld [vmem:[#allocation2 + $0x20] sm:$0xff]
        %v2293 = vld [vmem:[#allocation2 + $0x30] sm:$0xff]
        %v2294 = vld [vmem:[#allocation2 + $0x40] sm:$0xff]
        %v2295 = vld [vmem:[#allocation2 + $0x50] sm:$0xff]
        %v2296 = vld [vmem:[#allocation2 + $0x60] sm:$0xff]
        %v2297 = vld [vmem:[#allocation2 + $0x70] sm:$0xff]
        %s2298 = scalar_lea.vmem %s3, 32
        %v2299 = vld [vmem:[%s2298] sm:$0xf]
        %v2301 = vsel %vm433, %v2290, 0
        %v2304 = vsel %vm433, %v2291, 0
        %v2307 = vsel %vm433, %v2292, 0
        %v2310 = vsel %vm433, %v2293, 0
        %v2313 = vsel %vm433, %v2294, 0
        %v2316 = vsel %vm433, %v2295, 0
        %v2319 = vsel %vm433, %v2296, 0
        %v2322 = vsel %vm433, %v2297, 0
        %v2325 = vsel %vm495, %v2299, 0
        %2327 = vmatprep.subr.mxu0 0.0
        %2328 = vmatpush1.msra.mxu0 %v2325
        %2329 = vmatprep.subr.mxu0 0.0
        %2330 = vmatpush1.msra.mxu0 0.0
        %2331 = vmatprep.subr.mxu0 0.0
        %2332 = vmatpush1.msra.mxu0 0.0
        %2333 = vmatprep.subr.mxu0 0.0
        %2334 = vmatpush1.msra.mxu0 0.0
        %2335 = vmatprep.subr.mxu0 0.0
        %2336 = vmatpush1.msra.mxu0 0.0
        %2337 = vmatprep.subr.mxu0 0.0
        %2338 = vmatpush1.msra.mxu0 0.0
        %2339 = vmatprep.subr.mxu0 0.0
        %2340 = vmatpush1.msra.mxu0 0.0
        %2341 = vmatprep.subr.mxu0 0.0
        %2342 = vmatpush1.msra.mxu0 0.0
        %2343 = vmatprep.subr.mxu0 0.0
        %2344 = vmatpush1.msra.mxu0 0.0
        %2345 = vmatprep.subr.mxu0 0.0
        %2346 = vmatpush1.msra.mxu0 0.0
        %2347 = vmatprep.subr.mxu0 0.0
        %2348 = vmatpush1.msra.mxu0 0.0
        %2349 = vmatprep.subr.mxu0 0.0
        %2350 = vmatpush1.msra.mxu0 0.0
        %2351 = vmatprep.subr.mxu0 0.0
        %2352 = vmatpush1.msra.mxu0 0.0
        %2353 = vmatprep.subr.mxu0 0.0
        %2354 = vmatpush1.msra.mxu0 0.0
        %2355 = vmatprep.subr.mxu0 0.0
        %2356 = vmatpush1.msra.mxu0 0.0
        %2357 = vmatprep.subr.mxu0 0.0
        %2358 = vmatpush1.msra.mxu0 0.0
        %2359 = vmatprep.subr.mxu0 0.0
        %2360 = vmatpush1.msra.mxu0 0.0
        %2361 = vmatprep.subr.mxu0 0.0
        %2362 = vmatpush1.msra.mxu0 0.0
        %2363 = vmatprep.subr.mxu0 0.0
        %2364 = vmatpush1.msra.mxu0 0.0
        %2365 = vmatprep.subr.mxu0 0.0
        %2366 = vmatpush1.msra.mxu0 0.0
        %2367 = vmatprep.subr.mxu0 0.0
        %2368 = vmatpush1.msra.mxu0 0.0
        %2369 = vmatprep.subr.mxu0 0.0
        %2370 = vmatpush1.msra.mxu0 0.0
        %2371 = vmatprep.subr.mxu0 0.0
        %2372 = vmatpush1.msra.mxu0 0.0
        %2373 = vmatprep.subr.mxu0 0.0
        %2374 = vmatpush1.msra.mxu0 0.0
        %2375 = vmatprep.subr.mxu0 0.0
        %2376 = vmatpush1.msra.mxu0 0.0
        %2377 = vmatprep.subr.mxu0 0.0
        %2378 = vmatpush1.msra.mxu0 0.0
        %2379 = vmatprep.subr.mxu0 0.0
        %2380 = vmatpush1.msra.mxu0 0.0
        %2381 = vmatprep.subr.mxu0 0.0
        %2382 = vmatpush1.msra.mxu0 0.0
        %2383 = vmatprep.subr.mxu0 0.0
        %2384 = vmatpush1.msra.mxu0 0.0
        %2385 = vmatprep.subr.mxu0 0.0
        %2386 = vmatpush1.msra.mxu0 0.0
        %2387 = vmatprep.subr.mxu0 0.0
        %2388 = vmatpush1.msra.mxu0 0.0
        %2389 = vmatprep.subr.mxu0 0.0
        %2390 = vmatpush1.msra.mxu0 0.0
        %2391 = vmatprep.mubr.f32.mxu0 0.0
        %2392 = vmatmul.mubr.f32.gmra.mrb[0].mxu0 %v2301
        %v2393 = vpop.f32.mrb[0].mxu0
        %v2394 = vadd.f32 0.0, %v2393
        %v2395 = vpop.f32.mrb[0].mxu0
        %2396 = vmatprep.mubr.f32.mxu0 0.0
        %2397 = vmatmul.mubr.f32.gmra.mrb[0].mxu0 %v2304
        %v2398 = vpop.f32.mrb[0].mxu0
        %v2399 = vadd.f32 0.0, %v2398
        %v2400 = vpop.f32.mrb[0].mxu0
        %2401 = vmatprep.mubr.f32.mxu0 0.0
        %2402 = vmatmul.mubr.f32.gmra.mrb[0].mxu0 %v2307
        %v2403 = vpop.f32.mrb[0].mxu0
        %v2404 = vadd.f32 0.0, %v2403
        %v2405 = vpop.f32.mrb[0].mxu0
        %2406 = vmatprep.mubr.f32.mxu0 0.0
        %2407 = vmatmul.mubr.f32.gmra.mrb[0].mxu0 %v2310
        %v2408 = vpop.f32.mrb[0].mxu0
        %v2409 = vadd.f32 0.0, %v2408
        %v2410 = vpop.f32.mrb[0].mxu0
        %2411 = vmatprep.mubr.f32.mxu0 0.0
        %2412 = vmatmul.mubr.f32.gmra.mrb[0].mxu0 %v2313
        %v2413 = vpop.f32.mrb[0].mxu0
        %v2414 = vadd.f32 0.0, %v2413
        %v2415 = vpop.f32.mrb[0].mxu0
        %2416 = vmatprep.mubr.f32.mxu0 0.0
        %2417 = vmatmul.mubr.f32.gmra.mrb[0].mxu0 %v2316
        %v2418 = vpop.f32.mrb[0].mxu0
        %v2419 = vadd.f32 0.0, %v2418
        %v2420 = vpop.f32.mrb[0].mxu0
        %2421 = vmatprep.mubr.f32.mxu0 0.0
        %2422 = vmatmul.mubr.f32.gmra.mrb[0].mxu0 %v2319
        %v2423 = vpop.f32.mrb[0].mxu0
        %v2424 = vadd.f32 0.0, %v2423
        %v2425 = vpop.f32.mrb[0].mxu0
        %2426 = vmatprep.mubr.f32.mxu0 0.0
        %2427 = vmatmul.mubr.f32.gmra.mrb[0].mxu0 %v2322
        %v2428 = vpop.f32.mrb[0].mxu0
        %v2429 = vadd.f32 0.0, %v2428
        %v2430 = vpop.f32.mrb[0].mxu0
        %2431 = vdwg.mxu0
        %v2432 = vld [vmem:[#allocation3] sm:$0xff]
        %v2433 = vld [vmem:[#allocation3 + $0x8] sm:$0xff]
        %v2434 = vld [vmem:[#allocation3 + $0x10] sm:$0xff]
        %v2435 = vld [vmem:[#allocation3 + $0x18] sm:$0xff]
        %v2436 = vld [vmem:[#allocation3 + $0x20] sm:$0xff]
        %v2437 = vld [vmem:[#allocation3 + $0x28] sm:$0xff]
        %v2438 = vld [vmem:[#allocation3 + $0x30] sm:$0xff]
        %v2439 = vld [vmem:[#allocation3 + $0x38] sm:$0xff]
        %v2440 = vadd.f32 %v2432, %v2394
        %v2441 = vadd.f32 %v2433, %v2399
        %v2442 = vadd.f32 %v2434, %v2404
        %v2443 = vadd.f32 %v2435, %v2409
        %v2444 = vadd.f32 %v2436, %v2414
        %v2445 = vadd.f32 %v2437, %v2419
        %v2446 = vadd.f32 %v2438, %v2424
        %v2447 = vadd.f32 %v2439, %v2429
        %2448 = vst.msk [vmem:[#allocation3] sm:$0xff] %vm433, %v2440
        %2449 = vst.msk [vmem:[#allocation3 + $0x8] sm:$0xff] %vm433, %v2441
        %2450 = vst.msk [vmem:[#allocation3 + $0x10] sm:$0xff] %vm433, %v2442
        %2451 = vst.msk [vmem:[#allocation3 + $0x18] sm:$0xff] %vm433, %v2443
        %2452 = vst.msk [vmem:[#allocation3 + $0x20] sm:$0xff] %vm433, %v2444
        %2453 = vst.msk [vmem:[#allocation3 + $0x28] sm:$0xff] %vm433, %v2445
        %2454 = vst.msk [vmem:[#allocation3 + $0x30] sm:$0xff] %vm433, %v2446
        %2455 = vst.msk [vmem:[#allocation3 + $0x38] sm:$0xff] %vm433, %v2447
        %v2456 = vld [vmem:[#allocation3] sm:$0xff]
        %v2457 = vld [vmem:[#allocation3 + $0x8] sm:$0xff]
        %v2458 = vld [vmem:[#allocation3 + $0x10] sm:$0xff]
        %v2459 = vld [vmem:[#allocation3 + $0x18] sm:$0xff]
        %v2460 = vld [vmem:[#allocation3 + $0x20] sm:$0xff]
        %v2461 = vld [vmem:[#allocation3 + $0x28] sm:$0xff]
        %v2462 = vld [vmem:[#allocation3 + $0x30] sm:$0xff]
        %v2463 = vld [vmem:[#allocation3 + $0x38] sm:$0xff]
        %v2464 = vld [vmem:[%s4] sm:$0x1]
        %v2466 = vlaneseq
        %v2467 = vshrl.u32 %v2466, 7
        %v2468 = vsub.s32 0, %v2467
        %v2469 = vrot.slane %v2464, %v2468
        %v2471 = vadd.f32 %v2456, %v2469
        %v2472 = vadd.f32 %v2457, %v2469
        %v2473 = vadd.f32 %v2458, %v2469
        %v2474 = vadd.f32 %v2459, %v2469
        %v2475 = vadd.f32 %v2460, %v2469
        %v2476 = vadd.f32 %v2461, %v2469
        %v2477 = vadd.f32 %v2462, %v2469
        %v2478 = vadd.f32 %v2463, %v2469
        %v2479 = vmax.f32 %v2471, 0.0
        %v2480 = vmax.f32 %v2472, 0.0
        %v2481 = vmax.f32 %v2473, 0.0
        %v2482 = vmax.f32 %v2474, 0.0
        %v2483 = vmax.f32 %v2475, 0.0
        %v2484 = vmax.f32 %v2476, 0.0
        %v2485 = vmax.f32 %v2477, 0.0
        %v2486 = vmax.f32 %v2478, 0.0
        %v2487 = vld [vmem:[%s5] sm:$0xf]
        %v2488 = vld [vmem:[%s6] sm:$0x1]
        %v2490 = vlaneseq
        %v2491 = vshrl.u32 %v2490, 7
        %v2492 = vsub.s32 0, %v2491
        %v2493 = vrot.slane %v2488, %v2492
        %v2496 = vsel %vm433, %v2479, 0
        %v2499 = vsel %vm433, %v2480, 0
        %v2502 = vsel %vm433, %v2481, 0
        %v2505 = vsel %vm433, %v2482, 0
        %v2508 = vsel %vm433, %v2483, 0
        %v2511 = vsel %vm433, %v2484, 0
        %v2514 = vsel %vm433, %v2485, 0
        %v2517 = vsel %vm433, %v2486, 0
        %v2520 = vsel %vm495, %v2487, 0
        %2522 = vmatprep.subr.mxu0 0.0
        %2523 = vmatpush1.msra.mxu0 %v2520
        %2524 = vmatprep.subr.mxu0 0.0
        %2525 = vmatpush1.msra.mxu0 0.0
        %2526 = vmatprep.subr.mxu0 0.0
        %2527 = vmatpush1.msra.mxu0 0.0
        %2528 = vmatprep.subr.mxu0 0.0
        %2529 = vmatpush1.msra.mxu0 0.0
        %2530 = vmatprep.subr.mxu0 0.0
        %2531 = vmatpush1.msra.mxu0 0.0
        %2532 = vmatprep.subr.mxu0 0.0
        %2533 = vmatpush1.msra.mxu0 0.0
        %2534 = vmatprep.subr.mxu0 0.0
        %2535 = vmatpush1.msra.mxu0 0.0
        %2536 = vmatprep.subr.mxu0 0.0
        %2537 = vmatpush1.msra.mxu0 0.0
        %2538 = vmatprep.subr.mxu0 0.0
        %2539 = vmatpush1.msra.mxu0 0.0
        %2540 = vmatprep.subr.mxu0 0.0
        %2541 = vmatpush1.msra.mxu0 0.0
        %2542 = vmatprep.subr.mxu0 0.0
        %2543 = vmatpush1.msra.mxu0 0.0
        %2544 = vmatprep.subr.mxu0 0.0
        %2545 = vmatpush1.msra.mxu0 0.0
        %2546 = vmatprep.subr.mxu0 0.0
        %2547 = vmatpush1.msra.mxu0 0.0
        %2548 = vmatprep.subr.mxu0 0.0
        %2549 = vmatpush1.msra.mxu0 0.0
        %2550 = vmatprep.subr.mxu0 0.0
        %2551 = vmatpush1.msra.mxu0 0.0
        %2552 = vmatprep.subr.mxu0 0.0
        %2553 = vmatpush1.msra.mxu0 0.0
        %2554 = vmatprep.subr.mxu0 0.0
        %2555 = vmatpush1.msra.mxu0 0.0
        %2556 = vmatprep.subr.mxu0 0.0
        %2557 = vmatpush1.msra.mxu0 0.0
        %2558 = vmatprep.subr.mxu0 0.0
        %2559 = vmatpush1.msra.mxu0 0.0
        %2560 = vmatprep.subr.mxu0 0.0
        %2561 = vmatpush1.msra.mxu0 0.0
        %2562 = vmatprep.subr.mxu0 0.0
        %2563 = vmatpush1.msra.mxu0 0.0
        %2564 = vmatprep.subr.mxu0 0.0
        %2565 = vmatpush1.msra.mxu0 0.0
        %2566 = vmatprep.subr.mxu0 0.0
        %2567 = vmatpush1.msra.mxu0 0.0
        %2568 = vmatprep.subr.mxu0 0.0
        %2569 = vmatpush1.msra.mxu0 0.0
        %2570 = vmatprep.subr.mxu0 0.0
        %2571 = vmatpush1.msra.mxu0 0.0
        %2572 = vmatprep.subr.mxu0 0.0
        %2573 = vmatpush1.msra.mxu0 0.0
        %2574 = vmatprep.subr.mxu0 0.0
        %2575 = vmatpush1.msra.mxu0 0.0
        %2576 = vmatprep.subr.mxu0 0.0
        %2577 = vmatpush1.msra.mxu0 0.0
        %2578 = vmatprep.subr.mxu0 0.0
        %2579 = vmatpush1.msra.mxu0 0.0
        %2580 = vmatprep.subr.mxu0 0.0
        %2581 = vmatpush1.msra.mxu0 0.0
        %2582 = vmatprep.subr.mxu0 0.0
        %2583 = vmatpush1.msra.mxu0 0.0
        %2584 = vmatprep.subr.mxu0 0.0
        %2585 = vmatpush1.msra.mxu0 0.0
        %2586 = vmatprep.mubr.f32.mxu0 0.0
        %2587 = vmatmul.mubr.f32.gmra.mrb[0].mxu0 %v2496
        %v2588 = vpop.f32.mrb[0].mxu0
        %v2589 = vadd.f32 %v2493, %v2588
        %v2590 = vpop.f32.mrb[0].mxu0
        %2591 = vmatprep.mubr.f32.mxu0 0.0
        %2592 = vmatmul.mubr.f32.gmra.mrb[0].mxu0 %v2499
        %v2593 = vpop.f32.mrb[0].mxu0
        %v2594 = vadd.f32 %v2493, %v2593
        %v2595 = vpop.f32.mrb[0].mxu0
        %2596 = vmatprep.mubr.f32.mxu0 0.0
        %2597 = vmatmul.mubr.f32.gmra.mrb[0].mxu0 %v2502
        %v2598 = vpop.f32.mrb[0].mxu0
        %v2599 = vadd.f32 %v2493, %v2598
        %v2600 = vpop.f32.mrb[0].mxu0
        %2601 = vmatprep.mubr.f32.mxu0 0.0
        %2602 = vmatmul.mubr.f32.gmra.mrb[0].mxu0 %v2505
        %v2603 = vpop.f32.mrb[0].mxu0
        %v2604 = vadd.f32 %v2493, %v2603
        %v2605 = vpop.f32.mrb[0].mxu0
        %2606 = vmatprep.mubr.f32.mxu0 0.0
        %2607 = vmatmul.mubr.f32.gmra.mrb[0].mxu0 %v2508
        %v2608 = vpop.f32.mrb[0].mxu0
        %v2609 = vadd.f32 %v2493, %v2608
        %v2610 = vpop.f32.mrb[0].mxu0
        %2611 = vmatprep.mubr.f32.mxu0 0.0
        %2612 = vmatmul.mubr.f32.gmra.mrb[0].mxu0 %v2511
        %v2613 = vpop.f32.mrb[0].mxu0
        %v2614 = vadd.f32 %v2493, %v2613
        %v2615 = vpop.f32.mrb[0].mxu0
        %2616 = vmatprep.mubr.f32.mxu0 0.0
        %2617 = vmatmul.mubr.f32.gmra.mrb[0].mxu0 %v2514
        %v2618 = vpop.f32.mrb[0].mxu0
        %v2619 = vadd.f32 %v2493, %v2618
        %v2620 = vpop.f32.mrb[0].mxu0
        %2621 = vmatprep.mubr.f32.mxu0 0.0
        %2622 = vmatmul.mubr.f32.gmra.mrb[0].mxu0 %v2517
        %v2623 = vpop.f32.mrb[0].mxu0
        %v2624 = vadd.f32 %v2493, %v2623
        %v2625 = vpop.f32.mrb[0].mxu0
        %2626 = vdwg.mxu0
        %v2627 = vmax.f32 %v2589, 0.0
        %v2628 = vmax.f32 %v2594, 0.0
        %v2629 = vmax.f32 %v2599, 0.0
        %v2630 = vmax.f32 %v2604, 0.0
        %v2631 = vmax.f32 %v2609, 0.0
        %v2632 = vmax.f32 %v2614, 0.0
        %v2633 = vmax.f32 %v2619, 0.0
        %v2634 = vmax.f32 %v2624, 0.0
        %s2635 = scalar_lea.vmem %s271, 192 [#allocation4]
        %2636 = vst.msk [vmem:[%s2635] sm:$0xff] %vm791, %v2627
        %2637 = vst.msk [vmem:[%s2635 + $0x8] sm:$0xff] %vm791, %v2628
        %2638 = vst.msk [vmem:[%s2635 + $0x10] sm:$0xff] %vm791, %v2629
        %2639 = vst.msk [vmem:[%s2635 + $0x18] sm:$0xff] %vm791, %v2630
        %2640 = vst.msk [vmem:[%s2635 + $0x20] sm:$0xff] %vm791, %v2631
        %2641 = vst.msk [vmem:[%s2635 + $0x28] sm:$0xff] %vm791, %v2632
        %2642 = vst.msk [vmem:[%s2635 + $0x30] sm:$0xff] %vm791, %v2633
        %2643 = vst.msk [vmem:[%s2635 + $0x38] sm:$0xff] %vm791, %v2634
        %s2644 = sand.u32 %s181, 1
        %s2645 = scalar_lea.sflag [#allocation5], %s2644
        %s2646 = sand.u32 %s181, 1
        %s2647 = smul.addr %s2646, 256
        %s2648 = scalar_lea.vmem [#allocation4], %s2647
        // Predicated region
        $region49: #{tpu_custom_call.1} parent=47 // pred_check
          %p2649 = pneg %p191
        $region50: #{tpu_custom_call.1} parent=47 // pred_check_branch
          %2651 = sbr.rel (%p2649) target = $region52
        $region51: #{tpu_custom_call.1} parent=47 // pred_region
          %s2652 = smul.u32 4, %s21
          %s2654 = ssub.s32 4096, 4096
          %2655 = vsyncadd %s2645, %s2654
          %s2656 = smul.addr %s2652, 8
          %s2657 = smul.addr %s2656, 128
          %s2658 = scalar_lea.hbm %s7, %s2657
          %s2659 = sshll.u32 %s2648, 4
          %s2660 = int_to_ptr.vmem [resolvable:$true] %s2659
          %2665 = dma.vmem_to_hbm [thread:$0]  %s2660, 4096, %s2658, %s2645, 128, 128, 8
        $region52: #{tpu_custom_call.1} parent=47 // pred_fallthru
          _
      $region48: #{tpu_custom_call.1} parent=5 // pred_fallthru
        _
      %p2666 = scmp.le.s32.totalorder 2, %s16
      // Predicated region
      $region53: #{tpu_custom_call.1} parent=5 // pred_check
        %p2667 = pneg %p2666
      $region54: #{tpu_custom_call.1} parent=5 // pred_check_branch
        %2669 = sbr.rel (%p2667) target = $region56
      $region55: #{tpu_custom_call.1} parent=5 // pred_region
        %s2670 = ssub.s32 %s16, 2
        // Predicated region
        $region57: #{tpu_custom_call.1} parent=55 // pred_check
          %p2671 = pneg %p197
        $region58: #{tpu_custom_call.1} parent=55 // pred_check_branch
          %2673 = sbr.rel (%p2671) target = $region60
        $region59: #{tpu_custom_call.1} parent=55 // pred_region
          %s2674 = sand.u32 %s182, 1
          %s2675 = scalar_lea.sflag [#allocation5], %s2674
          %s2676 = sand.u32 %s182, 1
          %s2677 = smul.addr %s2676, 256
          %s2678 = scalar_lea.vmem [#allocation4], %s2677
          %2679 = dma.done %s2675, 4096
        $region60: #{tpu_custom_call.1} parent=55 // pred_fallthru
          _
      $region56: #{tpu_custom_call.1} parent=5 // pred_fallthru
        _
    $region6: #{tpu_custom_call.1} parent=1 // loop_footer
      %s20 = sadd.s32 1, %s16
    $region7: #{tpu_custom_call.1} parent=1 // loop_footer_branch
      %15 = sbr.rel target = $region3
    $region8: #{tpu_custom_call.1} parent=1 // loop_exit
      _
    %2680 = vsyncpa [#allocation5], 1
    %s2681 = scalar_lea.sflag [#allocation5], 1
    %2682 = vsyncpa %s2681, 1

</llo_original>
